<compile_context>
chip_gen: v7x
topology: tpu7x:2x2x1
jax: 0.10.0
libtpu: 0.0.40
codegen_flags: <defaults>
</compile_context>

<pallas_src>
import math
import functools
import jax
import jax.numpy as jnp
from jax.experimental import pallas as pl
from jax.experimental.pallas import tpu as pltpu

# ----------------- small synthetic T5 config -----------------
VOCAB        = 64
D_MODEL      = 32
N_HEADS      = 4
D_KV         = 8
D_FF         = 64
N_LAYERS     = 2
REL_BUCKETS  = 32
REL_MAX_DIST = 128
RMS_EPS = 1e-6   # T5LayerNorm eps
LN_EPS  = 1e-5   # nn.LayerNorm default eps

INNER = N_HEADS * D_KV
VMEM = pltpu.MemorySpace.VMEM


# ----------------- fused Pallas kernel -----------------

def _rms(x, w):
    # T5LayerNorm: no mean subtraction, no bias.  (f32 throughout)
    var = jnp.mean(x * x, axis=-1, keepdims=True)
    return x * jax.lax.rsqrt(var + RMS_EPS) * w


def _bf16(x):
    return x.astype(jnp.bfloat16)


def _fused_encoder_kernel(hidden_ref, bias_ref,
                          ln1_ref, wqkv_ref, wo_ref, ln2_ref, wi_ref, woff_ref,
                          fln_ref, lng_ref, lnb_ref, clfw_ref, clfb_ref,
                          out_ref, *, batch, seq):
    # hidden_ref : (B*S, D)           f32
    # bias_ref   : (B*H, S, S)        f32  (rel-pos bias + -1e9 key mask)
    # ln1/ln2    : (L, 1, D)          f32
    # wqkv       : (L, D, 3*INNER)    bf16
    # wo         : (L, INNER, D)      bf16
    # wi         : (L, D, D_FF)       bf16
    # woff       : (L, D_FF, D)       bf16
    # fln/lng/lnb/clfw : (1, D)  clfb : (1, 1)   f32
    hidden = hidden_ref[...]                                   # (B*S, D) f32
    bias = bias_ref[...]                                       # (B*H, S, S) f32

    def split_heads(qkv_f32, base):
        # (B*S, 3*INNER) f32 -> (B*H, S, D_KV) bf16, (batch, head)-major order.
        parts = [
            qkv_f32[:, base + h * D_KV: base + (h + 1) * D_KV]
            .reshape(batch, 1, seq, D_KV)
            for h in range(N_HEADS)
        ]
        merged = jnp.concatenate(parts, axis=1)                # (B, H, S, Dkv)
        return _bf16(merged.reshape(batch * N_HEADS, seq, D_KV))

    for l in range(N_LAYERS):
        # ---------- self-attention sublayer ----------
        normed = _rms(hidden, ln1_ref[l])                      # (B*S, D) f32
        qkv = jnp.dot(_bf16(normed), wqkv_ref[l],
                      preferred_element_type=jnp.float32)      # (B*S, 3*INNER)

        q = split_heads(qkv, 0)
        k = split_heads(qkv, INNER)
        v = split_heads(qkv, 2 * INNER)

        # T5 attention: NO 1/sqrt(d) scaling; bias carries rel-pos + mask.
        s = jnp.einsum('nqd,nkd->nqk', q, k,
                       preferred_element_type=jnp.float32) + bias   # (B*H,S,S)
        m = jnp.max(s, axis=-1, keepdims=True)
        e = jnp.exp(s - m)
        inv = pl.reciprocal(jnp.sum(e, axis=-1, keepdims=True), approx=True)
        p = _bf16(e * inv)
        o = jnp.einsum('nqk,nkd->nqd', p, v,
                       preferred_element_type=jnp.float32)     # (B*H, S, Dkv) f32

        # concat(heads) back to lane-dense (B*S, INNER) -> ONE W_O matmul.
        o4 = o.reshape(batch, N_HEADS, seq, D_KV)
        ctx = jnp.concatenate(
            [o4[:, h].reshape(batch * seq, D_KV) for h in range(N_HEADS)],
            axis=-1)                                           # (B*S, INNER) f32
        hidden = hidden + jnp.dot(_bf16(ctx), wo_ref[l],
                                  preferred_element_type=jnp.float32)

        # ---------- feed-forward sublayer (relu, dropout=0) ----------
        normed = _rms(hidden, ln2_ref[l])
        hmid = jnp.maximum(
            jnp.dot(_bf16(normed), wi_ref[l],
                    preferred_element_type=jnp.float32), 0.0)
        hidden = hidden + jnp.dot(_bf16(hmid), woff_ref[l],
                                  preferred_element_type=jnp.float32)

    # ---------- epilogue: pool token 0 FIRST, then norm/classify B rows ----
    pooled = jnp.concatenate(
        [hidden[b * seq: b * seq + 1, :] for b in range(batch)], axis=0)  # (B,D)
    pooled = _rms(pooled, fln_ref[...])                        # final T5 RMSNorm

    mu = jnp.mean(pooled, axis=-1, keepdims=True)
    xc = pooled - mu
    var = jnp.mean(xc * xc, axis=-1, keepdims=True)
    y = xc * jax.lax.rsqrt(var + LN_EPS) * lng_ref[...] + lnb_ref[...]

    # classifier Linear(D, 1): VPU multiply + lane reduce (no MXU push).
    out_ref[...] = (jnp.sum(y * clfw_ref[...], axis=-1, keepdims=True)
                    + clfb_ref[...])


# ----------------- plain-JAX glue -----------------

def relative_position_bucket(rel_pos, num_buckets=REL_BUCKETS,
                             max_distance=REL_MAX_DIST):
    # bidirectional (encoder) bucketing, same math as HF T5Attention.
    num_buckets //= 2
    rb = (rel_pos > 0).astype(jnp.int32) * num_buckets
    rp = jnp.abs(rel_pos)
    max_exact = num_buckets // 2
    is_small = rp < max_exact
    rp_large = max_exact + (
        jnp.log(jnp.maximum(rp, 1).astype(jnp.float32) / max_exact)
        / math.log(max_distance / max_exact)
        * (num_buckets - max_exact)
    ).astype(jnp.int32)
    rp_large = jnp.minimum(rp_large, num_buckets - 1)
    return rb + jnp.where(is_small, rp, rp_large)


def compute_position_bias(rel_table, seq_len):
    ctx = jnp.arange(seq_len)[:, None]
    mem = jnp.arange(seq_len)[None, :]
    buckets = relative_position_bucket(mem - ctx)        # (S, S)
    vals = rel_table[buckets]                            # (S, S, H)
    return jnp.transpose(vals, (2, 0, 1))[None]          # (1, H, S, S)


def init_params(key):
    ks = iter(jax.random.split(key, 64))

    def nrm(shape, scale=0.05):
        return jax.random.normal(next(ks), shape, jnp.float32) * scale

    p = {
        'embed':    nrm((VOCAB, D_MODEL), 1.0),
        'rel_bias': nrm((REL_BUCKETS, N_HEADS), 0.1),
        'final_ln': jnp.ones((D_MODEL,), jnp.float32),
        'ln_gamma': jnp.ones((D_MODEL,), jnp.float32),
        'ln_beta':  jnp.zeros((D_MODEL,), jnp.float32),
        'clf_w':    nrm((D_MODEL, 1), 0.05),
        'clf_b':    jnp.zeros((1,), jnp.float32),
        'layers':   [],
    }
    for _ in range(N_LAYERS):
        p['layers'].append({
            'ln1':   jnp.ones((D_MODEL,), jnp.float32),
            'wq':    nrm((D_MODEL, INNER)),
            'wk':    nrm((D_MODEL, INNER)),
            'wv':    nrm((D_MODEL, INNER)),
            'wo':    nrm((INNER, D_MODEL)),
            'ln2':   jnp.ones((D_MODEL,), jnp.float32),
            'wi':    nrm((D_MODEL, D_FF)),
            'wo_ff': nrm((D_FF, D_MODEL)),
        })
    return p


def prepare_params(params, seq_len):
    """One-time packing: weight stacks / bf16 casts / position-bias cache.

    Hoisted OUT of the per-call jitted forward (perf feedback): the per-call
    path only does the embedding gather + the mask-dependent bias term.
    """
    layers = params['layers']
    return {
        'embed':    params['embed'],
        # rel-pos bias depends only on S -> cached once here.
        'pos_bias': compute_position_bias(params['rel_bias'], seq_len),  # (1,H,S,S)
        'ln1':  jnp.stack([l['ln1'] for l in layers])[:, None, :],       # (L,1,D)
        'ln2':  jnp.stack([l['ln2'] for l in layers])[:, None, :],       # (L,1,D)
        'wqkv': jnp.stack(
            [jnp.concatenate([l['wq'], l['wk'], l['wv']], axis=1)
             for l in layers]).astype(jnp.bfloat16),                     # (L,D,3I)
        'wo':   jnp.stack([l['wo'] for l in layers]
                          ).astype(jnp.bfloat16),                        # (L,I,D)
        'wi':   jnp.stack([l['wi'] for l in layers]
                          ).astype(jnp.bfloat16),                        # (L,D,F)
        'woff': jnp.stack([l['wo_ff'] for l in layers]
                          ).astype(jnp.bfloat16),                        # (L,F,D)
        'fln':  params['final_ln'][None, :],
        'lng':  params['ln_gamma'][None, :],
        'lnb':  params['ln_beta'][None, :],
        'clfw': params['clf_w'].reshape(1, D_MODEL),   # row vector for VPU reduce
        'clfb': params['clf_b'].reshape(1, 1),
    }


@jax.jit
def t5_cross_encoder_forward(packed, input_ids, attention_mask):
    B, S = input_ids.shape

    # Per-call XLA work is only the embedding gather and the mask term; all
    # hot compute runs inside the single fused Pallas kernel.
    hidden0 = packed['embed'][input_ids].reshape(B * S, D_MODEL)          # (B*S,D)

    ext = (1.0 - attention_mask.astype(jnp.float32))[:, None, None, :] * -1e9
    bias = (packed['pos_bias'] + ext).reshape(B * N_HEADS, S, S)          # (B*H,S,S)

    kernel = functools.partial(_fused_encoder_kernel, batch=B, seq=S)
    return pl.pallas_call(
        kernel,
        out_shape=jax.ShapeDtypeStruct((B, 1), jnp.float32),
        in_specs=[pl.BlockSpec(memory_space=VMEM)] * 13,
        out_specs=pl.BlockSpec(memory_space=VMEM),
    )(hidden0, bias, packed['ln1'], packed['wqkv'], packed['wo'], packed['ln2'],
      packed['wi'], packed['woff'], packed['fln'], packed['lng'], packed['lnb'],
      packed['clfw'], packed['clfb'])


if __name__ == "__main__":
    key = jax.random.PRNGKey(0)
    pkey, ikey = jax.random.split(key)
    params = init_params(pkey)

    B, S = 2, 8
    packed = prepare_params(params, S)   # one-time weight packing / bias cache

    input_ids = jax.random.randint(ikey, (B, S), 0, VOCAB, dtype=jnp.int32)
    attention_mask = jnp.ones((B, S), jnp.int32).at[1, 6:].set(0)  # pad row 1 tail

    logits = t5_cross_encoder_forward(packed, input_ids, attention_mask)
    logits = jax.block_until_ready(logits)
    assert logits.shape == (B, 1) and logits.dtype == jnp.float32
    print("KERNEL_OK")
</pallas_src>

<mosaic_0001>
module attributes {stable_mosaic.version = 11 : i64} {
  func.func @_fused_encoder_kernel(%arg0: memref<16x32xf32, #tpu.memory_space<vmem>>, %arg1: memref<8x8x8xf32, #tpu.memory_space<vmem>>, %arg2: memref<2x1x32xf32, #tpu.memory_space<vmem>>, %arg3: memref<2x32x96xbf16, #tpu.memory_space<vmem>>, %arg4: memref<2x32x32xbf16, #tpu.memory_space<vmem>>, %arg5: memref<2x1x32xf32, #tpu.memory_space<vmem>>, %arg6: memref<2x32x64xbf16, #tpu.memory_space<vmem>>, %arg7: memref<2x64x32xbf16, #tpu.memory_space<vmem>>, %arg8: memref<1x32xf32, #tpu.memory_space<vmem>>, %arg9: memref<1x32xf32, #tpu.memory_space<vmem>>, %arg10: memref<1x32xf32, #tpu.memory_space<vmem>>, %arg11: memref<1x32xf32, #tpu.memory_space<vmem>>, %arg12: memref<1x1xf32, #tpu.memory_space<vmem>>, %arg13: memref<2x1xf32, #tpu.memory_space<vmem>>) attributes {dimension_semantics = [], scalar_prefetch = 0 : i64, scratch_operands = 0 : i64, tpu.core_type = #tpu.core_type<tc>} {
    %c0 = arith.constant 0 : index
    %c0_0 = arith.constant 0 : index
    %0 = vector.load %arg0[%c0, %c0_0] : memref<16x32xf32, #tpu.memory_space<vmem>>, vector<16x32xf32>
    %c0_1 = arith.constant 0 : index
    %c0_2 = arith.constant 0 : index
    %c0_3 = arith.constant 0 : index
    %1 = vector.load %arg1[%c0_1, %c0_2, %c0_3] : memref<8x8x8xf32, #tpu.memory_space<vmem>>, vector<8x8x8xf32>
    %c0_4 = arith.constant 0 : index
    %c0_5 = arith.constant 0 : index
    %c0_6 = arith.constant 0 : index
    %2 = vector.load %arg2[%c0_4, %c0_5, %c0_6] : memref<2x1x32xf32, #tpu.memory_space<vmem>>, vector<1x1x32xf32>
    %3 = vector.shape_cast %2 : vector<1x1x32xf32> to vector<1x32xf32>
    %4 = arith.mulf %0, %0 : vector<16x32xf32>
    %cst = arith.constant dense<0.000000e+00> : vector<16xf32>
    %5 = vector.multi_reduction <add>, %4, %cst [1] : vector<16x32xf32> to vector<16xf32>
    %6 = vector.shape_cast %5 : vector<16xf32> to vector<16x1xf32>
    %cst_7 = arith.constant 3.200000e+01 : f32
    %7 = vector.broadcast %cst_7 : f32 to vector<16x1xf32>
    %8 = arith.divf %6, %7 : vector<16x1xf32>
    %cst_8 = arith.constant 9.99999997E-7 : f32
    %9 = vector.broadcast %cst_8 : f32 to vector<16x1xf32>
    %10 = arith.addf %8, %9 : vector<16x1xf32>
    %11 = math.rsqrt %10 : vector<16x1xf32>
    %12 = vector.broadcast %11 : vector<16x1xf32> to vector<16x32xf32>
    %13 = arith.mulf %0, %12 : vector<16x32xf32>
    %14 = vector.broadcast %3 : vector<1x32xf32> to vector<16x32xf32>
    %15 = arith.mulf %13, %14 : vector<16x32xf32>
    %16 = arith.truncf %15 : vector<16x32xf32> to vector<16x32xbf16>
    %c0_9 = arith.constant 0 : index
    %c0_10 = arith.constant 0 : index
    %c0_11 = arith.constant 0 : index
    %17 = vector.load %arg3[%c0_9, %c0_10, %c0_11] : memref<2x32x96xbf16, #tpu.memory_space<vmem>>, vector<1x32x96xbf16>
    %18 = vector.shape_cast %17 : vector<1x32x96xbf16> to vector<32x96xbf16>
    %cst_12 = arith.constant dense<0.000000e+00> : vector<16x96xf32>
    %19 = tpu.matmul %16, %18, %cst_12 {dimension_numbers = #tpu.dot_dimension_numbers<[1], [0], [0], [1], [0, 0, 1, 1], [], []>} : vector<16x32xbf16>, vector<32x96xbf16>, vector<16x96xf32> -> vector<16x96xf32>
    %20 = vector.extract_strided_slice %19 {offsets = [0, 0], sizes = [16, 8], strides = [1, 1]} : vector<16x96xf32> to vector<16x8xf32>
    %21 = vector.shape_cast %20 : vector<16x8xf32> to vector<2x1x8x8xf32>
    %22 = vector.extract_strided_slice %19 {offsets = [0, 8], sizes = [16, 8], strides = [1, 1]} : vector<16x96xf32> to vector<16x8xf32>
    %23 = vector.shape_cast %22 : vector<16x8xf32> to vector<2x1x8x8xf32>
    %24 = vector.extract_strided_slice %19 {offsets = [0, 16], sizes = [16, 8], strides = [1, 1]} : vector<16x96xf32> to vector<16x8xf32>
    %25 = vector.shape_cast %24 : vector<16x8xf32> to vector<2x1x8x8xf32>
    %26 = vector.extract_strided_slice %19 {offsets = [0, 24], sizes = [16, 8], strides = [1, 1]} : vector<16x96xf32> to vector<16x8xf32>
    %27 = vector.shape_cast %26 : vector<16x8xf32> to vector<2x1x8x8xf32>
    %28 = tpu.concatenate %21, %23, %25, %27 in 1 : vector<2x1x8x8xf32>, vector<2x1x8x8xf32>, vector<2x1x8x8xf32>, vector<2x1x8x8xf32> -> vector<2x4x8x8xf32>
    %29 = vector.shape_cast %28 : vector<2x4x8x8xf32> to vector<8x8x8xf32>
    %30 = arith.truncf %29 : vector<8x8x8xf32> to vector<8x8x8xbf16>
    %31 = vector.extract_strided_slice %19 {offsets = [0, 32], sizes = [16, 8], strides = [1, 1]} : vector<16x96xf32> to vector<16x8xf32>
    %32 = vector.shape_cast %31 : vector<16x8xf32> to vector<2x1x8x8xf32>
    %33 = vector.extract_strided_slice %19 {offsets = [0, 40], sizes = [16, 8], strides = [1, 1]} : vector<16x96xf32> to vector<16x8xf32>
    %34 = vector.shape_cast %33 : vector<16x8xf32> to vector<2x1x8x8xf32>
    %35 = vector.extract_strided_slice %19 {offsets = [0, 48], sizes = [16, 8], strides = [1, 1]} : vector<16x96xf32> to vector<16x8xf32>
    %36 = vector.shape_cast %35 : vector<16x8xf32> to vector<2x1x8x8xf32>
    %37 = vector.extract_strided_slice %19 {offsets = [0, 56], sizes = [16, 8], strides = [1, 1]} : vector<16x96xf32> to vector<16x8xf32>
    %38 = vector.shape_cast %37 : vector<16x8xf32> to vector<2x1x8x8xf32>
    %39 = tpu.concatenate %32, %34, %36, %38 in 1 : vector<2x1x8x8xf32>, vector<2x1x8x8xf32>, vector<2x1x8x8xf32>, vector<2x1x8x8xf32> -> vector<2x4x8x8xf32>
    %40 = vector.shape_cast %39 : vector<2x4x8x8xf32> to vector<8x8x8xf32>
    %41 = arith.truncf %40 : vector<8x8x8xf32> to vector<8x8x8xbf16>
    %42 = vector.extract_strided_slice %19 {offsets = [0, 64], sizes = [16, 8], strides = [1, 1]} : vector<16x96xf32> to vector<16x8xf32>
    %43 = vector.shape_cast %42 : vector<16x8xf32> to vector<2x1x8x8xf32>
    %44 = vector.extract_strided_slice %19 {offsets = [0, 72], sizes = [16, 8], strides = [1, 1]} : vector<16x96xf32> to vector<16x8xf32>
    %45 = vector.shape_cast %44 : vector<16x8xf32> to vector<2x1x8x8xf32>
    %46 = vector.extract_strided_slice %19 {offsets = [0, 80], sizes = [16, 8], strides = [1, 1]} : vector<16x96xf32> to vector<16x8xf32>
    %47 = vector.shape_cast %46 : vector<16x8xf32> to vector<2x1x8x8xf32>
    %48 = vector.extract_strided_slice %19 {offsets = [0, 88], sizes = [16, 8], strides = [1, 1]} : vector<16x96xf32> to vector<16x8xf32>
    %49 = vector.shape_cast %48 : vector<16x8xf32> to vector<2x1x8x8xf32>
    %50 = tpu.concatenate %43, %45, %47, %49 in 1 : vector<2x1x8x8xf32>, vector<2x1x8x8xf32>, vector<2x1x8x8xf32>, vector<2x1x8x8xf32> -> vector<2x4x8x8xf32>
    %51 = vector.shape_cast %50 : vector<2x4x8x8xf32> to vector<8x8x8xf32>
    %52 = arith.truncf %51 : vector<8x8x8xf32> to vector<8x8x8xbf16>
    "tpu.trace_start"() <{level = 10 : i32, message = "nqd,nkd->nqk"}> : () -> ()
    %cst_13 = arith.constant dense<0.000000e+00> : vector<8x8x8xf32>
    %53 = tpu.matmul %30, %41, %cst_13 {dimension_numbers = #tpu.dot_dimension_numbers<[2], [2], [1], [1], [0, 0, 0, 1, 1, 1], [0], [0]>} : vector<8x8x8xbf16>, vector<8x8x8xbf16>, vector<8x8x8xf32> -> vector<8x8x8xf32>
    "tpu.trace_stop"() : () -> ()
    %54 = arith.addf %53, %1 : vector<8x8x8xf32>
    %cst_14 = arith.constant dense<0xFF800000> : vector<8x8xf32>
    %55 = vector.multi_reduction <maximumf>, %54, %cst_14 [2] : vector<8x8x8xf32> to vector<8x8xf32>
    %56 = vector.shape_cast %55 : vector<8x8xf32> to vector<8x8x1xf32>
    %57 = vector.broadcast %56 : vector<8x8x1xf32> to vector<8x8x8xf32>
    %58 = arith.subf %54, %57 : vector<8x8x8xf32>
    %59 = math.exp %58 : vector<8x8x8xf32>
    %cst_15 = arith.constant dense<0.000000e+00> : vector<8x8xf32>
    %60 = vector.multi_reduction <add>, %59, %cst_15 [2] : vector<8x8x8xf32> to vector<8x8xf32>
    %61 = vector.shape_cast %60 : vector<8x8xf32> to vector<8x8x1xf32>
    %62 = tpu.reciprocal %61 {approx = true} : vector<8x8x1xf32> -> vector<8x8x1xf32>
    %63 = vector.broadcast %62 : vector<8x8x1xf32> to vector<8x8x8xf32>
    %64 = arith.mulf %59, %63 : vector<8x8x8xf32>
    %65 = arith.truncf %64 : vector<8x8x8xf32> to vector<8x8x8xbf16>
    "tpu.trace_start"() <{level = 10 : i32, message = "nqk,nkd->nqd"}> : () -> ()
    %cst_16 = arith.constant dense<0.000000e+00> : vector<8x8x8xf32>
    %66 = tpu.matmul %65, %52, %cst_16 {dimension_numbers = #tpu.dot_dimension_numbers<[2], [1], [1], [2], [0, 0, 0, 1, 1, 2], [0], [0]>} : vector<8x8x8xbf16>, vector<8x8x8xbf16>, vector<8x8x8xf32> -> vector<8x8x8xf32>
    "tpu.trace_stop"() : () -> ()
    %67 = vector.shape_cast %66 : vector<8x8x8xf32> to vector<2x4x8x8xf32>
    %68 = vector.extract_strided_slice %67 {offsets = [0, 0, 0, 0], sizes = [2, 1, 8, 8], strides = [1, 1, 1, 1]} : vector<2x4x8x8xf32> to vector<2x1x8x8xf32>
    %69 = vector.shape_cast %68 : vector<2x1x8x8xf32> to vector<2x8x8xf32>
    %70 = vector.shape_cast %69 : vector<2x8x8xf32> to vector<16x8xf32>
    %71 = vector.extract_strided_slice %67 {offsets = [0, 1, 0, 0], sizes = [2, 1, 8, 8], strides = [1, 1, 1, 1]} : vector<2x4x8x8xf32> to vector<2x1x8x8xf32>
    %72 = vector.shape_cast %71 : vector<2x1x8x8xf32> to vector<2x8x8xf32>
    %73 = vector.shape_cast %72 : vector<2x8x8xf32> to vector<16x8xf32>
    %74 = vector.extract_strided_slice %67 {offsets = [0, 2, 0, 0], sizes = [2, 1, 8, 8], strides = [1, 1, 1, 1]} : vector<2x4x8x8xf32> to vector<2x1x8x8xf32>
    %75 = vector.shape_cast %74 : vector<2x1x8x8xf32> to vector<2x8x8xf32>
    %76 = vector.shape_cast %75 : vector<2x8x8xf32> to vector<16x8xf32>
    %77 = vector.extract_strided_slice %67 {offsets = [0, 3, 0, 0], sizes = [2, 1, 8, 8], strides = [1, 1, 1, 1]} : vector<2x4x8x8xf32> to vector<2x1x8x8xf32>
    %78 = vector.shape_cast %77 : vector<2x1x8x8xf32> to vector<2x8x8xf32>
    %79 = vector.shape_cast %78 : vector<2x8x8xf32> to vector<16x8xf32>
    %80 = tpu.concatenate %70, %73, %76, %79 in 1 : vector<16x8xf32>, vector<16x8xf32>, vector<16x8xf32>, vector<16x8xf32> -> vector<16x32xf32>
    %81 = arith.truncf %80 : vector<16x32xf32> to vector<16x32xbf16>
    %c0_17 = arith.constant 0 : index
    %c0_18 = arith.constant 0 : index
    %c0_19 = arith.constant 0 : index
    %82 = vector.load %arg4[%c0_17, %c0_18, %c0_19] : memref<2x32x32xbf16, #tpu.memory_space<vmem>>, vector<1x32x32xbf16>
    %83 = vector.shape_cast %82 : vector<1x32x32xbf16> to vector<32x32xbf16>
    %cst_20 = arith.constant dense<0.000000e+00> : vector<16x32xf32>
    %84 = tpu.matmul %81, %83, %cst_20 {dimension_numbers = #tpu.dot_dimension_numbers<[1], [0], [0], [1], [0, 0, 1, 1], [], []>} : vector<16x32xbf16>, vector<32x32xbf16>, vector<16x32xf32> -> vector<16x32xf32>
    %85 = arith.addf %0, %84 : vector<16x32xf32>
    %c0_21 = arith.constant 0 : index
    %c0_22 = arith.constant 0 : index
    %c0_23 = arith.constant 0 : index
    %86 = vector.load %arg5[%c0_21, %c0_22, %c0_23] : memref<2x1x32xf32, #tpu.memory_space<vmem>>, vector<1x1x32xf32>
    %87 = vector.shape_cast %86 : vector<1x1x32xf32> to vector<1x32xf32>
    %88 = arith.mulf %85, %85 : vector<16x32xf32>
    %cst_24 = arith.constant dense<0.000000e+00> : vector<16xf32>
    %89 = vector.multi_reduction <add>, %88, %cst_24 [1] : vector<16x32xf32> to vector<16xf32>
    %90 = vector.shape_cast %89 : vector<16xf32> to vector<16x1xf32>
    %cst_25 = arith.constant 3.200000e+01 : f32
    %91 = vector.broadcast %cst_25 : f32 to vector<16x1xf32>
    %92 = arith.divf %90, %91 : vector<16x1xf32>
    %cst_26 = arith.constant 9.99999997E-7 : f32
    %93 = vector.broadcast %cst_26 : f32 to vector<16x1xf32>
    %94 = arith.addf %92, %93 : vector<16x1xf32>
    %95 = math.rsqrt %94 : vector<16x1xf32>
    %96 = vector.broadcast %95 : vector<16x1xf32> to vector<16x32xf32>
    %97 = arith.mulf %85, %96 : vector<16x32xf32>
    %98 = vector.broadcast %87 : vector<1x32xf32> to vector<16x32xf32>
    %99 = arith.mulf %97, %98 : vector<16x32xf32>
    %100 = arith.truncf %99 : vector<16x32xf32> to vector<16x32xbf16>
    %c0_27 = arith.constant 0 : index
    %c0_28 = arith.constant 0 : index
    %c0_29 = arith.constant 0 : index
    %101 = vector.load %arg6[%c0_27, %c0_28, %c0_29] : memref<2x32x64xbf16, #tpu.memory_space<vmem>>, vector<1x32x64xbf16>
    %102 = vector.shape_cast %101 : vector<1x32x64xbf16> to vector<32x64xbf16>
    %cst_30 = arith.constant dense<0.000000e+00> : vector<16x64xf32>
    %103 = tpu.matmul %100, %102, %cst_30 {dimension_numbers = #tpu.dot_dimension_numbers<[1], [0], [0], [1], [0, 0, 1, 1], [], []>} : vector<16x32xbf16>, vector<32x64xbf16>, vector<16x64xf32> -> vector<16x64xf32>
    %cst_31 = arith.constant 0.000000e+00 : f32
    %104 = vector.broadcast %cst_31 : f32 to vector<16x64xf32>
    %105 = arith.maximumf %103, %104 : vector<16x64xf32>
    %106 = arith.truncf %105 : vector<16x64xf32> to vector<16x64xbf16>
    %c0_32 = arith.constant 0 : index
    %c0_33 = arith.constant 0 : index
    %c0_34 = arith.constant 0 : index
    %107 = vector.load %arg7[%c0_32, %c0_33, %c0_34] : memref<2x64x32xbf16, #tpu.memory_space<vmem>>, vector<1x64x32xbf16>
    %108 = vector.shape_cast %107 : vector<1x64x32xbf16> to vector<64x32xbf16>
    %cst_35 = arith.constant dense<0.000000e+00> : vector<16x32xf32>
    %109 = tpu.matmul %106, %108, %cst_35 {dimension_numbers = #tpu.dot_dimension_numbers<[1], [0], [0], [1], [0, 0, 1, 1], [], []>} : vector<16x64xbf16>, vector<64x32xbf16>, vector<16x32xf32> -> vector<16x32xf32>
    %110 = arith.addf %85, %109 : vector<16x32xf32>
    %c1 = arith.constant 1 : index
    %c0_36 = arith.constant 0 : index
    %c0_37 = arith.constant 0 : index
    %111 = vector.load %arg2[%c1, %c0_36, %c0_37] : memref<2x1x32xf32, #tpu.memory_space<vmem>>, vector<1x1x32xf32>
    %112 = vector.shape_cast %111 : vector<1x1x32xf32> to vector<1x32xf32>
    %113 = arith.mulf %110, %110 : vector<16x32xf32>
    %cst_38 = arith.constant dense<0.000000e+00> : vector<16xf32>
    %114 = vector.multi_reduction <add>, %113, %cst_38 [1] : vector<16x32xf32> to vector<16xf32>
    %115 = vector.shape_cast %114 : vector<16xf32> to vector<16x1xf32>
    %cst_39 = arith.constant 3.200000e+01 : f32
    %116 = vector.broadcast %cst_39 : f32 to vector<16x1xf32>
    %117 = arith.divf %115, %116 : vector<16x1xf32>
    %cst_40 = arith.constant 9.99999997E-7 : f32
    %118 = vector.broadcast %cst_40 : f32 to vector<16x1xf32>
    %119 = arith.addf %117, %118 : vector<16x1xf32>
    %120 = math.rsqrt %119 : vector<16x1xf32>
    %121 = vector.broadcast %120 : vector<16x1xf32> to vector<16x32xf32>
    %122 = arith.mulf %110, %121 : vector<16x32xf32>
    %123 = vector.broadcast %112 : vector<1x32xf32> to vector<16x32xf32>
    %124 = arith.mulf %122, %123 : vector<16x32xf32>
    %125 = arith.truncf %124 : vector<16x32xf32> to vector<16x32xbf16>
    %c1_41 = arith.constant 1 : index
    %c0_42 = arith.constant 0 : index
    %c0_43 = arith.constant 0 : index
    %126 = vector.load %arg3[%c1_41, %c0_42, %c0_43] : memref<2x32x96xbf16, #tpu.memory_space<vmem>>, vector<1x32x96xbf16>
    %127 = vector.shape_cast %126 : vector<1x32x96xbf16> to vector<32x96xbf16>
    %cst_44 = arith.constant dense<0.000000e+00> : vector<16x96xf32>
    %128 = tpu.matmul %125, %127, %cst_44 {dimension_numbers = #tpu.dot_dimension_numbers<[1], [0], [0], [1], [0, 0, 1, 1], [], []>} : vector<16x32xbf16>, vector<32x96xbf16>, vector<16x96xf32> -> vector<16x96xf32>
    %129 = vector.extract_strided_slice %128 {offsets = [0, 0], sizes = [16, 8], strides = [1, 1]} : vector<16x96xf32> to vector<16x8xf32>
    %130 = vector.shape_cast %129 : vector<16x8xf32> to vector<2x1x8x8xf32>
    %131 = vector.extract_strided_slice %128 {offsets = [0, 8], sizes = [16, 8], strides = [1, 1]} : vector<16x96xf32> to vector<16x8xf32>
    %132 = vector.shape_cast %131 : vector<16x8xf32> to vector<2x1x8x8xf32>
    %133 = vector.extract_strided_slice %128 {offsets = [0, 16], sizes = [16, 8], strides = [1, 1]} : vector<16x96xf32> to vector<16x8xf32>
    %134 = vector.shape_cast %133 : vector<16x8xf32> to vector<2x1x8x8xf32>
    %135 = vector.extract_strided_slice %128 {offsets = [0, 24], sizes = [16, 8], strides = [1, 1]} : vector<16x96xf32> to vector<16x8xf32>
    %136 = vector.shape_cast %135 : vector<16x8xf32> to vector<2x1x8x8xf32>
    %137 = tpu.concatenate %130, %132, %134, %136 in 1 : vector<2x1x8x8xf32>, vector<2x1x8x8xf32>, vector<2x1x8x8xf32>, vector<2x1x8x8xf32> -> vector<2x4x8x8xf32>
    %138 = vector.shape_cast %137 : vector<2x4x8x8xf32> to vector<8x8x8xf32>
    %139 = arith.truncf %138 : vector<8x8x8xf32> to vector<8x8x8xbf16>
    %140 = vector.extract_strided_slice %128 {offsets = [0, 32], sizes = [16, 8], strides = [1, 1]} : vector<16x96xf32> to vector<16x8xf32>
    %141 = vector.shape_cast %140 : vector<16x8xf32> to vector<2x1x8x8xf32>
    %142 = vector.extract_strided_slice %128 {offsets = [0, 40], sizes = [16, 8], strides = [1, 1]} : vector<16x96xf32> to vector<16x8xf32>
    %143 = vector.shape_cast %142 : vector<16x8xf32> to vector<2x1x8x8xf32>
    %144 = vector.extract_strided_slice %128 {offsets = [0, 48], sizes = [16, 8], strides = [1, 1]} : vector<16x96xf32> to vector<16x8xf32>
    %145 = vector.shape_cast %144 : vector<16x8xf32> to vector<2x1x8x8xf32>
    %146 = vector.extract_strided_slice %128 {offsets = [0, 56], sizes = [16, 8], strides = [1, 1]} : vector<16x96xf32> to vector<16x8xf32>
    %147 = vector.shape_cast %146 : vector<16x8xf32> to vector<2x1x8x8xf32>
    %148 = tpu.concatenate %141, %143, %145, %147 in 1 : vector<2x1x8x8xf32>, vector<2x1x8x8xf32>, vector<2x1x8x8xf32>, vector<2x1x8x8xf32> -> vector<2x4x8x8xf32>
    %149 = vector.shape_cast %148 : vector<2x4x8x8xf32> to vector<8x8x8xf32>
    %150 = arith.truncf %149 : vector<8x8x8xf32> to vector<8x8x8xbf16>
    %151 = vector.extract_strided_slice %128 {offsets = [0, 64], sizes = [16, 8], strides = [1, 1]} : vector<16x96xf32> to vector<16x8xf32>
    %152 = vector.shape_cast %151 : vector<16x8xf32> to vector<2x1x8x8xf32>
    %153 = vector.extract_strided_slice %128 {offsets = [0, 72], sizes = [16, 8], strides = [1, 1]} : vector<16x96xf32> to vector<16x8xf32>
    %154 = vector.shape_cast %153 : vector<16x8xf32> to vector<2x1x8x8xf32>
    %155 = vector.extract_strided_slice %128 {offsets = [0, 80], sizes = [16, 8], strides = [1, 1]} : vector<16x96xf32> to vector<16x8xf32>
    %156 = vector.shape_cast %155 : vector<16x8xf32> to vector<2x1x8x8xf32>
    %157 = vector.extract_strided_slice %128 {offsets = [0, 88], sizes = [16, 8], strides = [1, 1]} : vector<16x96xf32> to vector<16x8xf32>
    %158 = vector.shape_cast %157 : vector<16x8xf32> to vector<2x1x8x8xf32>
    %159 = tpu.concatenate %152, %154, %156, %158 in 1 : vector<2x1x8x8xf32>, vector<2x1x8x8xf32>, vector<2x1x8x8xf32>, vector<2x1x8x8xf32> -> vector<2x4x8x8xf32>
    %160 = vector.shape_cast %159 : vector<2x4x8x8xf32> to vector<8x8x8xf32>
    %161 = arith.truncf %160 : vector<8x8x8xf32> to vector<8x8x8xbf16>
    "tpu.trace_start"() <{level = 10 : i32, message = "nqd,nkd->nqk"}> : () -> ()
    %cst_45 = arith.constant dense<0.000000e+00> : vector<8x8x8xf32>
    %162 = tpu.matmul %139, %150, %cst_45 {dimension_numbers = #tpu.dot_dimension_numbers<[2], [2], [1], [1], [0, 0, 0, 1, 1, 1], [0], [0]>} : vector<8x8x8xbf16>, vector<8x8x8xbf16>, vector<8x8x8xf32> -> vector<8x8x8xf32>
    "tpu.trace_stop"() : () -> ()
    %163 = arith.addf %162, %1 : vector<8x8x8xf32>
    %cst_46 = arith.constant dense<0xFF800000> : vector<8x8xf32>
    %164 = vector.multi_reduction <maximumf>, %163, %cst_46 [2] : vector<8x8x8xf32> to vector<8x8xf32>
    %165 = vector.shape_cast %164 : vector<8x8xf32> to vector<8x8x1xf32>
    %166 = vector.broadcast %165 : vector<8x8x1xf32> to vector<8x8x8xf32>
    %167 = arith.subf %163, %166 : vector<8x8x8xf32>
    %168 = math.exp %167 : vector<8x8x8xf32>
    %cst_47 = arith.constant dense<0.000000e+00> : vector<8x8xf32>
    %169 = vector.multi_reduction <add>, %168, %cst_47 [2] : vector<8x8x8xf32> to vector<8x8xf32>
    %170 = vector.shape_cast %169 : vector<8x8xf32> to vector<8x8x1xf32>
    %171 = tpu.reciprocal %170 {approx = true} : vector<8x8x1xf32> -> vector<8x8x1xf32>
    %172 = vector.broadcast %171 : vector<8x8x1xf32> to vector<8x8x8xf32>
    %173 = arith.mulf %168, %172 : vector<8x8x8xf32>
    %174 = arith.truncf %173 : vector<8x8x8xf32> to vector<8x8x8xbf16>
    "tpu.trace_start"() <{level = 10 : i32, message = "nqk,nkd->nqd"}> : () -> ()
    %cst_48 = arith.constant dense<0.000000e+00> : vector<8x8x8xf32>
    %175 = tpu.matmul %174, %161, %cst_48 {dimension_numbers = #tpu.dot_dimension_numbers<[2], [1], [1], [2], [0, 0, 0, 1, 1, 2], [0], [0]>} : vector<8x8x8xbf16>, vector<8x8x8xbf16>, vector<8x8x8xf32> -> vector<8x8x8xf32>
    "tpu.trace_stop"() : () -> ()
    %176 = vector.shape_cast %175 : vector<8x8x8xf32> to vector<2x4x8x8xf32>
    %177 = vector.extract_strided_slice %176 {offsets = [0, 0, 0, 0], sizes = [2, 1, 8, 8], strides = [1, 1, 1, 1]} : vector<2x4x8x8xf32> to vector<2x1x8x8xf32>
    %178 = vector.shape_cast %177 : vector<2x1x8x8xf32> to vector<2x8x8xf32>
    %179 = vector.shape_cast %178 : vector<2x8x8xf32> to vector<16x8xf32>
    %180 = vector.extract_strided_slice %176 {offsets = [0, 1, 0, 0], sizes = [2, 1, 8, 8], strides = [1, 1, 1, 1]} : vector<2x4x8x8xf32> to vector<2x1x8x8xf32>
    %181 = vector.shape_cast %180 : vector<2x1x8x8xf32> to vector<2x8x8xf32>
    %182 = vector.shape_cast %181 : vector<2x8x8xf32> to vector<16x8xf32>
    %183 = vector.extract_strided_slice %176 {offsets = [0, 2, 0, 0], sizes = [2, 1, 8, 8], strides = [1, 1, 1, 1]} : vector<2x4x8x8xf32> to vector<2x1x8x8xf32>
    %184 = vector.shape_cast %183 : vector<2x1x8x8xf32> to vector<2x8x8xf32>
    %185 = vector.shape_cast %184 : vector<2x8x8xf32> to vector<16x8xf32>
    %186 = vector.extract_strided_slice %176 {offsets = [0, 3, 0, 0], sizes = [2, 1, 8, 8], strides = [1, 1, 1, 1]} : vector<2x4x8x8xf32> to vector<2x1x8x8xf32>
    %187 = vector.shape_cast %186 : vector<2x1x8x8xf32> to vector<2x8x8xf32>
    %188 = vector.shape_cast %187 : vector<2x8x8xf32> to vector<16x8xf32>
    %189 = tpu.concatenate %179, %182, %185, %188 in 1 : vector<16x8xf32>, vector<16x8xf32>, vector<16x8xf32>, vector<16x8xf32> -> vector<16x32xf32>
    %190 = arith.truncf %189 : vector<16x32xf32> to vector<16x32xbf16>
    %c1_49 = arith.constant 1 : index
    %c0_50 = arith.constant 0 : index
    %c0_51 = arith.constant 0 : index
    %191 = vector.load %arg4[%c1_49, %c0_50, %c0_51] : memref<2x32x32xbf16, #tpu.memory_space<vmem>>, vector<1x32x32xbf16>
    %192 = vector.shape_cast %191 : vector<1x32x32xbf16> to vector<32x32xbf16>
    %cst_52 = arith.constant dense<0.000000e+00> : vector<16x32xf32>
    %193 = tpu.matmul %190, %192, %cst_52 {dimension_numbers = #tpu.dot_dimension_numbers<[1], [0], [0], [1], [0, 0, 1, 1], [], []>} : vector<16x32xbf16>, vector<32x32xbf16>, vector<16x32xf32> -> vector<16x32xf32>
    %194 = arith.addf %110, %193 : vector<16x32xf32>
    %c1_53 = arith.constant 1 : index
    %c0_54 = arith.constant 0 : index
    %c0_55 = arith.constant 0 : index
    %195 = vector.load %arg5[%c1_53, %c0_54, %c0_55] : memref<2x1x32xf32, #tpu.memory_space<vmem>>, vector<1x1x32xf32>
    %196 = vector.shape_cast %195 : vector<1x1x32xf32> to vector<1x32xf32>
    %197 = arith.mulf %194, %194 : vector<16x32xf32>
    %cst_56 = arith.constant dense<0.000000e+00> : vector<16xf32>
    %198 = vector.multi_reduction <add>, %197, %cst_56 [1] : vector<16x32xf32> to vector<16xf32>
    %199 = vector.shape_cast %198 : vector<16xf32> to vector<16x1xf32>
    %cst_57 = arith.constant 3.200000e+01 : f32
    %200 = vector.broadcast %cst_57 : f32 to vector<16x1xf32>
    %201 = arith.divf %199, %200 : vector<16x1xf32>
    %cst_58 = arith.constant 9.99999997E-7 : f32
    %202 = vector.broadcast %cst_58 : f32 to vector<16x1xf32>
    %203 = arith.addf %201, %202 : vector<16x1xf32>
    %204 = math.rsqrt %203 : vector<16x1xf32>
    %205 = vector.broadcast %204 : vector<16x1xf32> to vector<16x32xf32>
    %206 = arith.mulf %194, %205 : vector<16x32xf32>
    %207 = vector.broadcast %196 : vector<1x32xf32> to vector<16x32xf32>
    %208 = arith.mulf %206, %207 : vector<16x32xf32>
    %209 = arith.truncf %208 : vector<16x32xf32> to vector<16x32xbf16>
    %c1_59 = arith.constant 1 : index
    %c0_60 = arith.constant 0 : index
    %c0_61 = arith.constant 0 : index
    %210 = vector.load %arg6[%c1_59, %c0_60, %c0_61] : memref<2x32x64xbf16, #tpu.memory_space<vmem>>, vector<1x32x64xbf16>
    %211 = vector.shape_cast %210 : vector<1x32x64xbf16> to vector<32x64xbf16>
    %cst_62 = arith.constant dense<0.000000e+00> : vector<16x64xf32>
    %212 = tpu.matmul %209, %211, %cst_62 {dimension_numbers = #tpu.dot_dimension_numbers<[1], [0], [0], [1], [0, 0, 1, 1], [], []>} : vector<16x32xbf16>, vector<32x64xbf16>, vector<16x64xf32> -> vector<16x64xf32>
    %cst_63 = arith.constant 0.000000e+00 : f32
    %213 = vector.broadcast %cst_63 : f32 to vector<16x64xf32>
    %214 = arith.maximumf %212, %213 : vector<16x64xf32>
    %215 = arith.truncf %214 : vector<16x64xf32> to vector<16x64xbf16>
    %c1_64 = arith.constant 1 : index
    %c0_65 = arith.constant 0 : index
    %c0_66 = arith.constant 0 : index
    %216 = vector.load %arg7[%c1_64, %c0_65, %c0_66] : memref<2x64x32xbf16, #tpu.memory_space<vmem>>, vector<1x64x32xbf16>
    %217 = vector.shape_cast %216 : vector<1x64x32xbf16> to vector<64x32xbf16>
    %cst_67 = arith.constant dense<0.000000e+00> : vector<16x32xf32>
    %218 = tpu.matmul %215, %217, %cst_67 {dimension_numbers = #tpu.dot_dimension_numbers<[1], [0], [0], [1], [0, 0, 1, 1], [], []>} : vector<16x64xbf16>, vector<64x32xbf16>, vector<16x32xf32> -> vector<16x32xf32>
    %219 = arith.addf %194, %218 : vector<16x32xf32>
    %220 = vector.extract_strided_slice %219 {offsets = [0, 0], sizes = [1, 32], strides = [1, 1]} : vector<16x32xf32> to vector<1x32xf32>
    %221 = vector.extract_strided_slice %219 {offsets = [8, 0], sizes = [1, 32], strides = [1, 1]} : vector<16x32xf32> to vector<1x32xf32>
    %222 = tpu.concatenate %220, %221 in 0 : vector<1x32xf32>, vector<1x32xf32> -> vector<2x32xf32>
    %c0_68 = arith.constant 0 : index
    %c0_69 = arith.constant 0 : index
    %223 = vector.load %arg8[%c0_68, %c0_69] : memref<1x32xf32, #tpu.memory_space<vmem>>, vector<1x32xf32>
    %224 = arith.mulf %222, %222 : vector<2x32xf32>
    %cst_70 = arith.constant dense<0.000000e+00> : vector<2xf32>
    %225 = vector.multi_reduction <add>, %224, %cst_70 [1] : vector<2x32xf32> to vector<2xf32>
    %226 = vector.shape_cast %225 : vector<2xf32> to vector<2x1xf32>
    %cst_71 = arith.constant 3.200000e+01 : f32
    %227 = vector.broadcast %cst_71 : f32 to vector<2x1xf32>
    %228 = arith.divf %226, %227 : vector<2x1xf32>
    %cst_72 = arith.constant 9.99999997E-7 : f32
    %229 = vector.broadcast %cst_72 : f32 to vector<2x1xf32>
    %230 = arith.addf %228, %229 : vector<2x1xf32>
    %231 = math.rsqrt %230 : vector<2x1xf32>
    %232 = vector.broadcast %231 : vector<2x1xf32> to vector<2x32xf32>
    %233 = arith.mulf %222, %232 : vector<2x32xf32>
    %234 = vector.broadcast %223 : vector<1x32xf32> to vector<2x32xf32>
    %235 = arith.mulf %233, %234 : vector<2x32xf32>
    %cst_73 = arith.constant dense<0.000000e+00> : vector<2xf32>
    %236 = vector.multi_reduction <add>, %235, %cst_73 [1] : vector<2x32xf32> to vector<2xf32>
    %237 = vector.shape_cast %236 : vector<2xf32> to vector<2x1xf32>
    %cst_74 = arith.constant 3.200000e+01 : f32
    %238 = vector.broadcast %cst_74 : f32 to vector<2x1xf32>
    %239 = arith.divf %237, %238 : vector<2x1xf32>
    %240 = vector.broadcast %239 : vector<2x1xf32> to vector<2x32xf32>
    %241 = arith.subf %235, %240 : vector<2x32xf32>
    %242 = arith.mulf %241, %241 : vector<2x32xf32>
    %cst_75 = arith.constant dense<0.000000e+00> : vector<2xf32>
    %243 = vector.multi_reduction <add>, %242, %cst_75 [1] : vector<2x32xf32> to vector<2xf32>
    %244 = vector.shape_cast %243 : vector<2xf32> to vector<2x1xf32>
    %cst_76 = arith.constant 3.200000e+01 : f32
    %245 = vector.broadcast %cst_76 : f32 to vector<2x1xf32>
    %246 = arith.divf %244, %245 : vector<2x1xf32>
    %cst_77 = arith.constant 9.99999974E-6 : f32
    %247 = vector.broadcast %cst_77 : f32 to vector<2x1xf32>
    %248 = arith.addf %246, %247 : vector<2x1xf32>
    %249 = math.rsqrt %248 : vector<2x1xf32>
    %250 = vector.broadcast %249 : vector<2x1xf32> to vector<2x32xf32>
    %251 = arith.mulf %241, %250 : vector<2x32xf32>
    %c0_78 = arith.constant 0 : index
    %c0_79 = arith.constant 0 : index
    %252 = vector.load %arg9[%c0_78, %c0_79] : memref<1x32xf32, #tpu.memory_space<vmem>>, vector<1x32xf32>
    %253 = vector.broadcast %252 : vector<1x32xf32> to vector<2x32xf32>
    %254 = arith.mulf %251, %253 : vector<2x32xf32>
    %c0_80 = arith.constant 0 : index
    %c0_81 = arith.constant 0 : index
    %255 = vector.load %arg10[%c0_80, %c0_81] : memref<1x32xf32, #tpu.memory_space<vmem>>, vector<1x32xf32>
    %256 = vector.broadcast %255 : vector<1x32xf32> to vector<2x32xf32>
    %257 = arith.addf %254, %256 : vector<2x32xf32>
    %c0_82 = arith.constant 0 : index
    %c0_83 = arith.constant 0 : index
    %258 = vector.load %arg11[%c0_82, %c0_83] : memref<1x32xf32, #tpu.memory_space<vmem>>, vector<1x32xf32>
    %259 = vector.broadcast %258 : vector<1x32xf32> to vector<2x32xf32>
    %260 = arith.mulf %257, %259 : vector<2x32xf32>
    %cst_84 = arith.constant dense<0.000000e+00> : vector<2xf32>
    %261 = vector.multi_reduction <add>, %260, %cst_84 [1] : vector<2x32xf32> to vector<2xf32>
    %262 = vector.shape_cast %261 : vector<2xf32> to vector<2x1xf32>
    %c0_85 = arith.constant 0 : index
    %c0_86 = arith.constant 0 : index
    %263 = vector.load %arg12[%c0_85, %c0_86] : memref<1x1xf32, #tpu.memory_space<vmem>>, vector<1x1xf32>
    %264 = vector.broadcast %263 : vector<1x1xf32> to vector<2x1xf32>
    %265 = arith.addf %262, %264 : vector<2x1xf32>
    %c0_87 = arith.constant 0 : index
    %c0_88 = arith.constant 0 : index
    %266 = vector.load %arg13[%c0_87, %c0_88] : memref<2x1xf32, #tpu.memory_space<vmem>>, vector<2x1xf32>
    tpu.vector_store %arg13[%c0_87, %c0_88], %265 {strides = array<i32>} : memref<2x1xf32, #tpu.memory_space<vmem>>, vector<2x1xf32>,
    return
  }
}

</mosaic_0001>

<llo_original>
// kernel: t5_cross_encoder_forward.1
$region0: #{t5_cross_encoder_forward.1}
  #allocation0 [shape = 'u32[]', space=smem, size = 0x4, offset = 0x4, fixed_abs, tag = 'smem constant byte address 0x4 - core index']
  #allocation1 [shape = 'u32[144,128]{1,0:T(1,128)}', space=vmem, size = 0x12000, scoped, tag = 'internal scratch']
  #allocation2 [shape = 'f32[1,1]{1,0:T(1,128)S(1)}', space=vmem, size = 0x200, scoped, tag = 'scoped memory for t5_cross_encoder_forward.1']
  %s0 = inlined_call_operand.vmem [shape: f32[16,32], index: 0, kind: input, shape index: {}]
  %s1 = inlined_call_operand.vmem [shape: f32[8,8,8], index: 1, kind: input, shape index: {}]
  %s2 = inlined_call_operand.vmem [shape: f32[2,1,32], index: 2, kind: input, shape index: {}]
  %s3 = inlined_call_operand.vmem [shape: bf16[2,32,96], index: 3, kind: input, shape index: {}]
  %s4 = inlined_call_operand.vmem [shape: bf16[2,32,32], index: 4, kind: input, shape index: {}]
  %s5 = inlined_call_operand.vmem [shape: f32[2,1,32], index: 5, kind: input, shape index: {}]
  %s6 = inlined_call_operand.vmem [shape: bf16[2,32,64], index: 6, kind: input, shape index: {}]
  %s7 = inlined_call_operand.vmem [shape: bf16[2,64,32], index: 7, kind: input, shape index: {}]
  %s8 = inlined_call_operand.vmem [shape: f32[1,32], index: 8, kind: input, shape index: {}]
  %s9 = inlined_call_operand.vmem [shape: f32[1,32], index: 9, kind: input, shape index: {}]
  %s10 = inlined_call_operand.vmem [shape: f32[1,32], index: 10, kind: input, shape index: {}]
  %s11 = inlined_call_operand.vmem [shape: f32[1,32], index: 11, kind: input, shape index: {}]
  %s12 = inlined_call_operand.<no memory space> [shape: f32[1,1], index: 12, kind: input, shape index: {}]
  %s13 = inlined_call_operand.vmem [shape: f32[2,1], index: 13, kind: output, shape index: {}]
  %s14 = sld [smem:[#allocation0]]
  $region62: #{t5_cross_encoder_forward.1} parent=0
    _
  %s16 = ssub.s32 1, %s14
  %s17 = scalar_select 0, %s16, %s14
  %v18 = vstv %s12
  %19 = vst [vmem:[#allocation2] sm:$0x1] %v18
  // Predicated region
  $region2: #{t5_cross_encoder_forward.1} parent=0 // pred_check
    _
  $region3: #{t5_cross_encoder_forward.1} parent=0 // pred_check_branch
    %21 = sbr.rel (0) target = $region5
  $region4: #{t5_cross_encoder_forward.1} parent=0 // pred_region
    _
  $region5: #{t5_cross_encoder_forward.1} parent=0 // pred_fallthru
    _
  // Predicated region
  $region6: #{t5_cross_encoder_forward.1} parent=0 // pred_check
    _
  $region7: #{t5_cross_encoder_forward.1} parent=0 // pred_check_branch
    %23 = sbr.rel (0) target = $region9
  $region8: #{t5_cross_encoder_forward.1} parent=0 // pred_region
    _
  $region9: #{t5_cross_encoder_forward.1} parent=0 // pred_fallthru
    _
  // Predicated region
  $region10: #{t5_cross_encoder_forward.1} parent=0 // pred_check
    _
  $region11: #{t5_cross_encoder_forward.1} parent=0 // pred_check_branch
    %25 = sbr.rel (0) target = $region13
  $region12: #{t5_cross_encoder_forward.1} parent=0 // pred_region
    _
  $region13: #{t5_cross_encoder_forward.1} parent=0 // pred_fallthru
    _
  // Predicated region
  $region14: #{t5_cross_encoder_forward.1} parent=0 // pred_check
    _
  $region15: #{t5_cross_encoder_forward.1} parent=0 // pred_check_branch
    %27 = sbr.rel (0) target = $region17
  $region16: #{t5_cross_encoder_forward.1} parent=0 // pred_region
    _
  $region17: #{t5_cross_encoder_forward.1} parent=0 // pred_fallthru
    _
  // Predicated region
  $region18: #{t5_cross_encoder_forward.1} parent=0 // pred_check
    _
  $region19: #{t5_cross_encoder_forward.1} parent=0 // pred_check_branch
    %29 = sbr.rel (0) target = $region21
  $region20: #{t5_cross_encoder_forward.1} parent=0 // pred_region
    _
  $region21: #{t5_cross_encoder_forward.1} parent=0 // pred_fallthru
    _
  // Predicated region
  $region22: #{t5_cross_encoder_forward.1} parent=0 // pred_check
    _
  $region23: #{t5_cross_encoder_forward.1} parent=0 // pred_check_branch
    %31 = sbr.rel (0) target = $region25
  $region24: #{t5_cross_encoder_forward.1} parent=0 // pred_region
    _
  $region25: #{t5_cross_encoder_forward.1} parent=0 // pred_fallthru
    _
  // Predicated region
  $region26: #{t5_cross_encoder_forward.1} parent=0 // pred_check
    _
  $region27: #{t5_cross_encoder_forward.1} parent=0 // pred_check_branch
    %33 = sbr.rel (0) target = $region29
  $region28: #{t5_cross_encoder_forward.1} parent=0 // pred_region
    _
  $region29: #{t5_cross_encoder_forward.1} parent=0 // pred_fallthru
    _
  // Predicated region
  $region30: #{t5_cross_encoder_forward.1} parent=0 // pred_check
    _
  $region31: #{t5_cross_encoder_forward.1} parent=0 // pred_check_branch
    %35 = sbr.rel (0) target = $region33
  $region32: #{t5_cross_encoder_forward.1} parent=0 // pred_region
    _
  $region33: #{t5_cross_encoder_forward.1} parent=0 // pred_fallthru
    _
  // Predicated region
  $region34: #{t5_cross_encoder_forward.1} parent=0 // pred_check
    _
  $region35: #{t5_cross_encoder_forward.1} parent=0 // pred_check_branch
    %37 = sbr.rel (0) target = $region37
  $region36: #{t5_cross_encoder_forward.1} parent=0 // pred_region
    _
  $region37: #{t5_cross_encoder_forward.1} parent=0 // pred_fallthru
    _
  // Predicated region
  $region38: #{t5_cross_encoder_forward.1} parent=0 // pred_check
    _
  $region39: #{t5_cross_encoder_forward.1} parent=0 // pred_check_branch
    %39 = sbr.rel (0) target = $region41
  $region40: #{t5_cross_encoder_forward.1} parent=0 // pred_region
    _
  $region41: #{t5_cross_encoder_forward.1} parent=0 // pred_fallthru
    _
  // Predicated region
  $region42: #{t5_cross_encoder_forward.1} parent=0 // pred_check
    _
  $region43: #{t5_cross_encoder_forward.1} parent=0 // pred_check_branch
    %41 = sbr.rel (0) target = $region45
  $region44: #{t5_cross_encoder_forward.1} parent=0 // pred_region
    _
  $region45: #{t5_cross_encoder_forward.1} parent=0 // pred_fallthru
    _
  // Predicated region
  $region46: #{t5_cross_encoder_forward.1} parent=0 // pred_check
    _
  $region47: #{t5_cross_encoder_forward.1} parent=0 // pred_check_branch
    %43 = sbr.rel (0) target = $region49
  $region48: #{t5_cross_encoder_forward.1} parent=0 // pred_region
    _
  $region49: #{t5_cross_encoder_forward.1} parent=0 // pred_fallthru
    _
  // Predicated region
  $region50: #{t5_cross_encoder_forward.1} parent=0 // pred_check
    _
  $region51: #{t5_cross_encoder_forward.1} parent=0 // pred_check_branch
    %45 = sbr.rel (0) target = $region53
  $region52: #{t5_cross_encoder_forward.1} parent=0 // pred_region
    _
  $region53: #{t5_cross_encoder_forward.1} parent=0 // pred_fallthru
    _
  %v47 = vld [vmem:[%s0] sm:$0xff]
  %v48 = vld [vmem:[%s0 + $0x8] sm:$0xff]
  %v49 = vld [vmem:[%s1] sm:$0xff]
  %v50 = vld [vmem:[%s1 + $0x8] sm:$0xff]
  %v51 = vld [vmem:[%s1 + $0x10] sm:$0xff]
  %v52 = vld [vmem:[%s1 + $0x18] sm:$0xff]
  %v53 = vld [vmem:[%s1 + $0x20] sm:$0xff]
  %v54 = vld [vmem:[%s1 + $0x28] sm:$0xff]
  %v55 = vld [vmem:[%s1 + $0x30] sm:$0xff]
  %v56 = vld [vmem:[%s1 + $0x38] sm:$0xff]
  %v57 = vld [vmem:[%s2] sm:$0x1]
  %v58 = vmul.f32 %v47, %v47
  %v59 = vmul.f32 %v48, %v48
  %vm60 = vcmask 261120
  %v61 = vsel %vm60, %v58, 0.0
  %62 = vadd.xlane.f32.xlu0 %v61
  %v63 = vpop.xlane.xlu0 %62
  %v64 = vsel %vm60, %v59, 0.0
  %65 = vadd.xlane.f32.xlu0 %v64
  %v66 = vpop.xlane.xlu0 %65
  %v67 = vrcp.pop 32.0
  %v68 = vmul.f32 %v63, %v67
  %v69 = vmul.f32 %v66, %v67
  %v70 = vadd.f32 %v68, 1e-06
  %v71 = vadd.f32 %v69, 1e-06
  %v72 = vrsqrt.pop %v70
  %v73 = vrsqrt.pop %v71
  %v74 = vmul.f32 %v47, %v72
  %v75 = vmul.f32 %v48, %v73
  %v77 = vlaneseq
  %v78 = vshrl.u32 %v77, 7
  %v79 = vsub.s32 0, %v78
  %v80 = vrot.slane %v57, %v79
  %v82 = vmul.f32 %v74, %v80
  %v83 = vmul.f32 %v75, %v80
  %v84 = vpack.c.bf16 %v83, %v82
  %v85 = vld [vmem:[%s3] sm:$0xf]
  %v86 = vld [vmem:[%s3 + $0x4] sm:$0xf]
  %v87 = vld [vmem:[%s3 + $0x8] sm:$0xf]
  %v88 = vld [vmem:[%s3 + $0xc] sm:$0xf]
  %v93 = vunpack.c.l.b16 %v85
  %v94 = vunpack.c.l.b16 %v86
  %v95 = vunpack.c.l.b16 %v87
  %v96 = vunpack.c.l.b16 %v88
  %v97 = vpack.c.b16 %v94, %v93
  %v98 = vpack.c.b16 %v96, %v95
  %v102 = vsel %vm60, %v84, 0
  %104 = vmatprep.subr.bf16.mxu0 0
  %105 = vmatpush1.bf16.msra.mxu0 %v97
  %106 = vmatprep.subr.bf16.mxu0 0
  %107 = vmatpush1.bf16.msra.mxu0 %v98
  %108 = vmatprep.subr.bf16.mxu0 0
  %109 = vmatpush1.bf16.msra.mxu0 0
  %110 = vmatprep.subr.bf16.mxu0 0
  %111 = vmatpush1.bf16.msra.mxu0 0
  %112 = vmatprep.subr.bf16.mxu0 0
  %113 = vmatpush1.bf16.msra.mxu0 0
  %114 = vmatprep.subr.bf16.mxu0 0
  %115 = vmatpush1.bf16.msra.mxu0 0
  %116 = vmatprep.subr.bf16.mxu0 0
  %117 = vmatpush1.bf16.msra.mxu0 0
  %118 = vmatprep.subr.bf16.mxu0 0
  %119 = vmatpush1.bf16.msra.mxu0 0
  %120 = vmatprep.subr.bf16.mxu0 0
  %121 = vmatpush1.bf16.msra.mxu0 0
  %122 = vmatprep.subr.bf16.mxu0 0
  %123 = vmatpush1.bf16.msra.mxu0 0
  %124 = vmatprep.subr.bf16.mxu0 0
  %125 = vmatpush1.bf16.msra.mxu0 0
  %126 = vmatprep.subr.bf16.mxu0 0
  %127 = vmatpush1.bf16.msra.mxu0 0
  %128 = vmatprep.subr.bf16.mxu0 0
  %129 = vmatpush1.bf16.msra.mxu0 0
  %130 = vmatprep.subr.bf16.mxu0 0
  %131 = vmatpush1.bf16.msra.mxu0 0
  %132 = vmatprep.subr.bf16.mxu0 0
  %133 = vmatpush1.bf16.msra.mxu0 0
  %134 = vmatprep.subr.bf16.mxu0 0
  %135 = vmatpush1.bf16.msra.mxu0 0
  %136 = vmatprep.mubr.bf16.mxu0 0
  %137 = vmatmul.mubr.bf16.gmra.mrb[0].mxu0 %v102
  %v138 = vpop.f32.mrb[0].mxu0
  %v139 = vadd.f32 0.0, %v138
  %v140 = vpop.f32.mrb[0].mxu0
  %v141 = vpop.f32.mrb[0].mxu0
  %v142 = vadd.f32 0.0, %v141
  %v143 = vpop.f32.mrb[0].mxu0
  %144 = vdwg.mxu0
  %147 = vrot.lane.b32.xlu0 %v139, 120
  %v148 = vpop.permute.xlu0 %147
  %149 = vrot.lane.b32.xlu0 %v142, 120
  %v150 = vpop.permute.xlu0 %149
  %153 = vrot.lane.b32.xlu0 %v139, 112
  %v154 = vpop.permute.xlu0 %153
  %155 = vrot.lane.b32.xlu0 %v142, 112
  %v156 = vpop.permute.xlu0 %155
  %159 = vrot.lane.b32.xlu0 %v139, 104
  %v160 = vpop.permute.xlu0 %159
  %161 = vrot.lane.b32.xlu0 %v142, 104
  %v162 = vpop.permute.xlu0 %161
  %v165 = vpack.c.bf16 %v139, %v139
  %v166 = vpack.c.bf16 %v148, %v148
  %v167 = vpack.c.bf16 %v154, %v154
  %v168 = vpack.c.bf16 %v160, %v160
  %v169 = vpack.c.bf16 %v142, %v142
  %v170 = vpack.c.bf16 %v150, %v150
  %v171 = vpack.c.bf16 %v156, %v156
  %v172 = vpack.c.bf16 %v162, %v162
  %174 = vrot.lane.b32.xlu0 %v165, 96
  %v175 = vpop.permute.xlu0 %174
  %vm176 = vcmask 64512
  %v178 = vsel %vm176, %v165, 0
  %v181 = vsel %vm176, %v175, 0
  %183 = vmatprep.subr.bf16.mxu0 0
  %184 = vmatpush1.bf16.xpose.msra.mxu0 %v181
  %185 = vmatprep.subr.bf16.mxu0 0
  %186 = vmatpush1.bf16.xpose.msra.mxu0 0
  %187 = vmatprep.subr.bf16.mxu0 0
  %188 = vmatpush1.bf16.xpose.msra.mxu0 0
  %189 = vmatprep.subr.bf16.mxu0 0
  %190 = vmatpush1.bf16.xpose.msra.mxu0 0
  %191 = vmatprep.subr.bf16.mxu0 0
  %192 = vmatpush1.bf16.xpose.msra.mxu0 0
  %193 = vmatprep.subr.bf16.mxu0 0
  %194 = vmatpush1.bf16.xpose.msra.mxu0 0
  %195 = vmatprep.subr.bf16.mxu0 0
  %196 = vmatpush1.bf16.xpose.msra.mxu0 0
  %197 = vmatprep.subr.bf16.mxu0 0
  %198 = vmatpush1.bf16.xpose.msra.mxu0 0
  %199 = vmatprep.subr.bf16.mxu0 0
  %200 = vmatpush1.bf16.xpose.msra.mxu0 0
  %201 = vmatprep.subr.bf16.mxu0 0
  %202 = vmatpush1.bf16.xpose.msra.mxu0 0
  %203 = vmatprep.subr.bf16.mxu0 0
  %204 = vmatpush1.bf16.xpose.msra.mxu0 0
  %205 = vmatprep.subr.bf16.mxu0 0
  %206 = vmatpush1.bf16.xpose.msra.mxu0 0
  %207 = vmatprep.subr.bf16.mxu0 0
  %208 = vmatpush1.bf16.xpose.msra.mxu0 0
  %209 = vmatprep.subr.bf16.mxu0 0
  %210 = vmatpush1.bf16.xpose.msra.mxu0 0
  %211 = vmatprep.subr.bf16.mxu0 0
  %212 = vmatpush1.bf16.xpose.msra.mxu0 0
  %213 = vmatprep.subr.bf16.mxu0 0
  %214 = vmatpush1.bf16.xpose.msra.mxu0 0
  %215 = vmatprep.mubr.bf16.mxu0 0
  %216 = vmatmul.mubr.bf16.gmra.mrb[0].mxu0 %v178
  %v217 = vpop.f32.mrb[0].mxu0
  %v218 = vadd.f32 %v49, %v217
  %v219 = vpop.f32.mrb[0].mxu0
  %v220 = vpop.f32.mrb[0].mxu0
  %v221 = vpop.f32.mrb[0].mxu0
  %222 = vdwg.mxu0
  %224 = vrot.lane.b32.xlu0 %v166, 96
  %v225 = vpop.permute.xlu0 %224
  %v227 = vsel %vm176, %v166, 0
  %v230 = vsel %vm176, %v225, 0
  %232 = vmatprep.subr.bf16.mxu0 0
  %233 = vmatpush1.bf16.xpose.msra.mxu0 %v230
  %234 = vmatprep.subr.bf16.mxu0 0
  %235 = vmatpush1.bf16.xpose.msra.mxu0 0
  %236 = vmatprep.subr.bf16.mxu0 0
  %237 = vmatpush1.bf16.xpose.msra.mxu0 0
  %238 = vmatprep.subr.bf16.mxu0 0
  %239 = vmatpush1.bf16.xpose.msra.mxu0 0
  %240 = vmatprep.subr.bf16.mxu0 0
  %241 = vmatpush1.bf16.xpose.msra.mxu0 0
  %242 = vmatprep.subr.bf16.mxu0 0
  %243 = vmatpush1.bf16.xpose.msra.mxu0 0
  %244 = vmatprep.subr.bf16.mxu0 0
  %245 = vmatpush1.bf16.xpose.msra.mxu0 0
  %246 = vmatprep.subr.bf16.mxu0 0
  %247 = vmatpush1.bf16.xpose.msra.mxu0 0
  %248 = vmatprep.subr.bf16.mxu0 0
  %249 = vmatpush1.bf16.xpose.msra.mxu0 0
  %250 = vmatprep.subr.bf16.mxu0 0
  %251 = vmatpush1.bf16.xpose.msra.mxu0 0
  %252 = vmatprep.subr.bf16.mxu0 0
  %253 = vmatpush1.bf16.xpose.msra.mxu0 0
  %254 = vmatprep.subr.bf16.mxu0 0
  %255 = vmatpush1.bf16.xpose.msra.mxu0 0
  %256 = vmatprep.subr.bf16.mxu0 0
  %257 = vmatpush1.bf16.xpose.msra.mxu0 0
  %258 = vmatprep.subr.bf16.mxu0 0
  %259 = vmatpush1.bf16.xpose.msra.mxu0 0
  %260 = vmatprep.subr.bf16.mxu0 0
  %261 = vmatpush1.bf16.xpose.msra.mxu0 0
  %262 = vmatprep.subr.bf16.mxu0 0
  %263 = vmatpush1.bf16.xpose.msra.mxu0 0
  %264 = vmatprep.mubr.bf16.mxu0 0
  %265 = vmatmul.mubr.bf16.gmra.mrb[0].mxu0 %v227
  %v266 = vpop.f32.mrb[0].mxu0
  %v267 = vadd.f32 %v50, %v266
  %v268 = vpop.f32.mrb[0].mxu0
  %v269 = vpop.f32.mrb[0].mxu0
  %v270 = vpop.f32.mrb[0].mxu0
  %271 = vdwg.mxu0
  %273 = vrot.lane.b32.xlu0 %v167, 96
  %v274 = vpop.permute.xlu0 %273
  %v276 = vsel %vm176, %v167, 0
  %v279 = vsel %vm176, %v274, 0
  %281 = vmatprep.subr.bf16.mxu0 0
  %282 = vmatpush1.bf16.xpose.msra.mxu0 %v279
  %283 = vmatprep.subr.bf16.mxu0 0
  %284 = vmatpush1.bf16.xpose.msra.mxu0 0
  %285 = vmatprep.subr.bf16.mxu0 0
  %286 = vmatpush1.bf16.xpose.msra.mxu0 0
  %287 = vmatprep.subr.bf16.mxu0 0
  %288 = vmatpush1.bf16.xpose.msra.mxu0 0
  %289 = vmatprep.subr.bf16.mxu0 0
  %290 = vmatpush1.bf16.xpose.msra.mxu0 0
  %291 = vmatprep.subr.bf16.mxu0 0
  %292 = vmatpush1.bf16.xpose.msra.mxu0 0
  %293 = vmatprep.subr.bf16.mxu0 0
  %294 = vmatpush1.bf16.xpose.msra.mxu0 0
  %295 = vmatprep.subr.bf16.mxu0 0
  %296 = vmatpush1.bf16.xpose.msra.mxu0 0
  %297 = vmatprep.subr.bf16.mxu0 0
  %298 = vmatpush1.bf16.xpose.msra.mxu0 0
  %299 = vmatprep.subr.bf16.mxu0 0
  %300 = vmatpush1.bf16.xpose.msra.mxu0 0
  %301 = vmatprep.subr.bf16.mxu0 0
  %302 = vmatpush1.bf16.xpose.msra.mxu0 0
  %303 = vmatprep.subr.bf16.mxu0 0
  %304 = vmatpush1.bf16.xpose.msra.mxu0 0
  %305 = vmatprep.subr.bf16.mxu0 0
  %306 = vmatpush1.bf16.xpose.msra.mxu0 0
  %307 = vmatprep.subr.bf16.mxu0 0
  %308 = vmatpush1.bf16.xpose.msra.mxu0 0
  %309 = vmatprep.subr.bf16.mxu0 0
  %310 = vmatpush1.bf16.xpose.msra.mxu0 0
  %311 = vmatprep.subr.bf16.mxu0 0
  %312 = vmatpush1.bf16.xpose.msra.mxu0 0
  %313 = vmatprep.mubr.bf16.mxu0 0
  %314 = vmatmul.mubr.bf16.gmra.mrb[0].mxu0 %v276
  %v315 = vpop.f32.mrb[0].mxu0
  %v316 = vadd.f32 %v51, %v315
  %v317 = vpop.f32.mrb[0].mxu0
  %v318 = vpop.f32.mrb[0].mxu0
  %v319 = vpop.f32.mrb[0].mxu0
  %320 = vdwg.mxu0
  %322 = vrot.lane.b32.xlu0 %v168, 96
  %v323 = vpop.permute.xlu0 %322
  %v325 = vsel %vm176, %v168, 0
  %v328 = vsel %vm176, %v323, 0
  %330 = vmatprep.subr.bf16.mxu0 0
  %331 = vmatpush1.bf16.xpose.msra.mxu0 %v328
  %332 = vmatprep.subr.bf16.mxu0 0
  %333 = vmatpush1.bf16.xpose.msra.mxu0 0
  %334 = vmatprep.subr.bf16.mxu0 0
  %335 = vmatpush1.bf16.xpose.msra.mxu0 0
  %336 = vmatprep.subr.bf16.mxu0 0
  %337 = vmatpush1.bf16.xpose.msra.mxu0 0
  %338 = vmatprep.subr.bf16.mxu0 0
  %339 = vmatpush1.bf16.xpose.msra.mxu0 0
  %340 = vmatprep.subr.bf16.mxu0 0
  %341 = vmatpush1.bf16.xpose.msra.mxu0 0
  %342 = vmatprep.subr.bf16.mxu0 0
  %343 = vmatpush1.bf16.xpose.msra.mxu0 0
  %344 = vmatprep.subr.bf16.mxu0 0
  %345 = vmatpush1.bf16.xpose.msra.mxu0 0
  %346 = vmatprep.subr.bf16.mxu0 0
  %347 = vmatpush1.bf16.xpose.msra.mxu0 0
  %348 = vmatprep.subr.bf16.mxu0 0
  %349 = vmatpush1.bf16.xpose.msra.mxu0 0
  %350 = vmatprep.subr.bf16.mxu0 0
  %351 = vmatpush1.bf16.xpose.msra.mxu0 0
  %352 = vmatprep.subr.bf16.mxu0 0
  %353 = vmatpush1.bf16.xpose.msra.mxu0 0
  %354 = vmatprep.subr.bf16.mxu0 0
  %355 = vmatpush1.bf16.xpose.msra.mxu0 0
  %356 = vmatprep.subr.bf16.mxu0 0
  %357 = vmatpush1.bf16.xpose.msra.mxu0 0
  %358 = vmatprep.subr.bf16.mxu0 0
  %359 = vmatpush1.bf16.xpose.msra.mxu0 0
  %360 = vmatprep.subr.bf16.mxu0 0
  %361 = vmatpush1.bf16.xpose.msra.mxu0 0
  %362 = vmatprep.mubr.bf16.mxu0 0
  %363 = vmatmul.mubr.bf16.gmra.mrb[0].mxu0 %v325
  %v364 = vpop.f32.mrb[0].mxu0
  %v365 = vadd.f32 %v52, %v364
  %v366 = vpop.f32.mrb[0].mxu0
  %v367 = vpop.f32.mrb[0].mxu0
  %v368 = vpop.f32.mrb[0].mxu0
  %369 = vdwg.mxu0
  %371 = vrot.lane.b32.xlu0 %v169, 96
  %v372 = vpop.permute.xlu0 %371
  %v374 = vsel %vm176, %v169, 0
  %v377 = vsel %vm176, %v372, 0
  %379 = vmatprep.subr.bf16.mxu0 0
  %380 = vmatpush1.bf16.xpose.msra.mxu0 %v377
  %381 = vmatprep.subr.bf16.mxu0 0
  %382 = vmatpush1.bf16.xpose.msra.mxu0 0
  %383 = vmatprep.subr.bf16.mxu0 0
  %384 = vmatpush1.bf16.xpose.msra.mxu0 0
  %385 = vmatprep.subr.bf16.mxu0 0
  %386 = vmatpush1.bf16.xpose.msra.mxu0 0
  %387 = vmatprep.subr.bf16.mxu0 0
  %388 = vmatpush1.bf16.xpose.msra.mxu0 0
  %389 = vmatprep.subr.bf16.mxu0 0
  %390 = vmatpush1.bf16.xpose.msra.mxu0 0
  %391 = vmatprep.subr.bf16.mxu0 0
  %392 = vmatpush1.bf16.xpose.msra.mxu0 0
  %393 = vmatprep.subr.bf16.mxu0 0
  %394 = vmatpush1.bf16.xpose.msra.mxu0 0
  %395 = vmatprep.subr.bf16.mxu0 0
  %396 = vmatpush1.bf16.xpose.msra.mxu0 0
  %397 = vmatprep.subr.bf16.mxu0 0
  %398 = vmatpush1.bf16.xpose.msra.mxu0 0
  %399 = vmatprep.subr.bf16.mxu0 0
  %400 = vmatpush1.bf16.xpose.msra.mxu0 0
  %401 = vmatprep.subr.bf16.mxu0 0
  %402 = vmatpush1.bf16.xpose.msra.mxu0 0
  %403 = vmatprep.subr.bf16.mxu0 0
  %404 = vmatpush1.bf16.xpose.msra.mxu0 0
  %405 = vmatprep.subr.bf16.mxu0 0
  %406 = vmatpush1.bf16.xpose.msra.mxu0 0
  %407 = vmatprep.subr.bf16.mxu0 0
  %408 = vmatpush1.bf16.xpose.msra.mxu0 0
  %409 = vmatprep.subr.bf16.mxu0 0
  %410 = vmatpush1.bf16.xpose.msra.mxu0 0
  %411 = vmatprep.mubr.bf16.mxu0 0
  %412 = vmatmul.mubr.bf16.gmra.mrb[0].mxu0 %v374
  %v413 = vpop.f32.mrb[0].mxu0
  %v414 = vadd.f32 %v53, %v413
  %v415 = vpop.f32.mrb[0].mxu0
  %v416 = vpop.f32.mrb[0].mxu0
  %v417 = vpop.f32.mrb[0].mxu0
  %418 = vdwg.mxu0
  %420 = vrot.lane.b32.xlu0 %v170, 96
  %v421 = vpop.permute.xlu0 %420
  %v423 = vsel %vm176, %v170, 0
  %v426 = vsel %vm176, %v421, 0
  %428 = vmatprep.subr.bf16.mxu0 0
  %429 = vmatpush1.bf16.xpose.msra.mxu0 %v426
  %430 = vmatprep.subr.bf16.mxu0 0
  %431 = vmatpush1.bf16.xpose.msra.mxu0 0
  %432 = vmatprep.subr.bf16.mxu0 0
  %433 = vmatpush1.bf16.xpose.msra.mxu0 0
  %434 = vmatprep.subr.bf16.mxu0 0
  %435 = vmatpush1.bf16.xpose.msra.mxu0 0
  %436 = vmatprep.subr.bf16.mxu0 0
  %437 = vmatpush1.bf16.xpose.msra.mxu0 0
  %438 = vmatprep.subr.bf16.mxu0 0
  %439 = vmatpush1.bf16.xpose.msra.mxu0 0
  %440 = vmatprep.subr.bf16.mxu0 0
  %441 = vmatpush1.bf16.xpose.msra.mxu0 0
  %442 = vmatprep.subr.bf16.mxu0 0
  %443 = vmatpush1.bf16.xpose.msra.mxu0 0
  %444 = vmatprep.subr.bf16.mxu0 0
  %445 = vmatpush1.bf16.xpose.msra.mxu0 0
  %446 = vmatprep.subr.bf16.mxu0 0
  %447 = vmatpush1.bf16.xpose.msra.mxu0 0
  %448 = vmatprep.subr.bf16.mxu0 0
  %449 = vmatpush1.bf16.xpose.msra.mxu0 0
  %450 = vmatprep.subr.bf16.mxu0 0
  %451 = vmatpush1.bf16.xpose.msra.mxu0 0
  %452 = vmatprep.subr.bf16.mxu0 0
  %453 = vmatpush1.bf16.xpose.msra.mxu0 0
  %454 = vmatprep.subr.bf16.mxu0 0
  %455 = vmatpush1.bf16.xpose.msra.mxu0 0
  %456 = vmatprep.subr.bf16.mxu0 0
  %457 = vmatpush1.bf16.xpose.msra.mxu0 0
  %458 = vmatprep.subr.bf16.mxu0 0
  %459 = vmatpush1.bf16.xpose.msra.mxu0 0
  %460 = vmatprep.mubr.bf16.mxu0 0
  %461 = vmatmul.mubr.bf16.gmra.mrb[0].mxu0 %v423
  %v462 = vpop.f32.mrb[0].mxu0
  %v463 = vadd.f32 %v54, %v462
  %v464 = vpop.f32.mrb[0].mxu0
  %v465 = vpop.f32.mrb[0].mxu0
  %v466 = vpop.f32.mrb[0].mxu0
  %467 = vdwg.mxu0
  %469 = vrot.lane.b32.xlu0 %v171, 96
  %v470 = vpop.permute.xlu0 %469
  %v472 = vsel %vm176, %v171, 0
  %v475 = vsel %vm176, %v470, 0
  %477 = vmatprep.subr.bf16.mxu0 0
  %478 = vmatpush1.bf16.xpose.msra.mxu0 %v475
  %479 = vmatprep.subr.bf16.mxu0 0
  %480 = vmatpush1.bf16.xpose.msra.mxu0 0
  %481 = vmatprep.subr.bf16.mxu0 0
  %482 = vmatpush1.bf16.xpose.msra.mxu0 0
  %483 = vmatprep.subr.bf16.mxu0 0
  %484 = vmatpush1.bf16.xpose.msra.mxu0 0
  %485 = vmatprep.subr.bf16.mxu0 0
  %486 = vmatpush1.bf16.xpose.msra.mxu0 0
  %487 = vmatprep.subr.bf16.mxu0 0
  %488 = vmatpush1.bf16.xpose.msra.mxu0 0
  %489 = vmatprep.subr.bf16.mxu0 0
  %490 = vmatpush1.bf16.xpose.msra.mxu0 0
  %491 = vmatprep.subr.bf16.mxu0 0
  %492 = vmatpush1.bf16.xpose.msra.mxu0 0
  %493 = vmatprep.subr.bf16.mxu0 0
  %494 = vmatpush1.bf16.xpose.msra.mxu0 0
  %495 = vmatprep.subr.bf16.mxu0 0
  %496 = vmatpush1.bf16.xpose.msra.mxu0 0
  %497 = vmatprep.subr.bf16.mxu0 0
  %498 = vmatpush1.bf16.xpose.msra.mxu0 0
  %499 = vmatprep.subr.bf16.mxu0 0
  %500 = vmatpush1.bf16.xpose.msra.mxu0 0
  %501 = vmatprep.subr.bf16.mxu0 0
  %502 = vmatpush1.bf16.xpose.msra.mxu0 0
  %503 = vmatprep.subr.bf16.mxu0 0
  %504 = vmatpush1.bf16.xpose.msra.mxu0 0
  %505 = vmatprep.subr.bf16.mxu0 0
  %506 = vmatpush1.bf16.xpose.msra.mxu0 0
  %507 = vmatprep.subr.bf16.mxu0 0
  %508 = vmatpush1.bf16.xpose.msra.mxu0 0
  %509 = vmatprep.mubr.bf16.mxu0 0
  %510 = vmatmul.mubr.bf16.gmra.mrb[0].mxu0 %v472
  %v511 = vpop.f32.mrb[0].mxu0
  %v512 = vadd.f32 %v55, %v511
  %v513 = vpop.f32.mrb[0].mxu0
  %v514 = vpop.f32.mrb[0].mxu0
  %v515 = vpop.f32.mrb[0].mxu0
  %516 = vdwg.mxu0
  %518 = vrot.lane.b32.xlu0 %v172, 96
  %v519 = vpop.permute.xlu0 %518
  %v521 = vsel %vm176, %v172, 0
  %v524 = vsel %vm176, %v519, 0
  %526 = vmatprep.subr.bf16.mxu0 0
  %527 = vmatpush1.bf16.xpose.msra.mxu0 %v524
  %528 = vmatprep.subr.bf16.mxu0 0
  %529 = vmatpush1.bf16.xpose.msra.mxu0 0
  %530 = vmatprep.subr.bf16.mxu0 0
  %531 = vmatpush1.bf16.xpose.msra.mxu0 0
  %532 = vmatprep.subr.bf16.mxu0 0
  %533 = vmatpush1.bf16.xpose.msra.mxu0 0
  %534 = vmatprep.subr.bf16.mxu0 0
  %535 = vmatpush1.bf16.xpose.msra.mxu0 0
  %536 = vmatprep.subr.bf16.mxu0 0
  %537 = vmatpush1.bf16.xpose.msra.mxu0 0
  %538 = vmatprep.subr.bf16.mxu0 0
  %539 = vmatpush1.bf16.xpose.msra.mxu0 0
  %540 = vmatprep.subr.bf16.mxu0 0
  %541 = vmatpush1.bf16.xpose.msra.mxu0 0
  %542 = vmatprep.subr.bf16.mxu0 0
  %543 = vmatpush1.bf16.xpose.msra.mxu0 0
  %544 = vmatprep.subr.bf16.mxu0 0
  %545 = vmatpush1.bf16.xpose.msra.mxu0 0
  %546 = vmatprep.subr.bf16.mxu0 0
  %547 = vmatpush1.bf16.xpose.msra.mxu0 0
  %548 = vmatprep.subr.bf16.mxu0 0
  %549 = vmatpush1.bf16.xpose.msra.mxu0 0
  %550 = vmatprep.subr.bf16.mxu0 0
  %551 = vmatpush1.bf16.xpose.msra.mxu0 0
  %552 = vmatprep.subr.bf16.mxu0 0
  %553 = vmatpush1.bf16.xpose.msra.mxu0 0
  %554 = vmatprep.subr.bf16.mxu0 0
  %555 = vmatpush1.bf16.xpose.msra.mxu0 0
  %556 = vmatprep.subr.bf16.mxu0 0
  %557 = vmatpush1.bf16.xpose.msra.mxu0 0
  %558 = vmatprep.mubr.bf16.mxu0 0
  %559 = vmatmul.mubr.bf16.gmra.mrb[0].mxu0 %v521
  %v560 = vpop.f32.mrb[0].mxu0
  %v561 = vadd.f32 %v56, %v560
  %v562 = vpop.f32.mrb[0].mxu0
  %v563 = vpop.f32.mrb[0].mxu0
  %v564 = vpop.f32.mrb[0].mxu0
  %565 = vdwg.mxu0
  %v566 = vsel %vm176, %v218, -inf
  %567 = vmax.xlane.f32.xlu0 %v566
  %v568 = vpop.xlane.xlu0 %567
  %v569 = vsel %vm176, %v267, -inf
  %570 = vmax.xlane.f32.xlu0 %v569
  %v571 = vpop.xlane.xlu0 %570
  %v572 = vsel %vm176, %v316, -inf
  %573 = vmax.xlane.f32.xlu0 %v572
  %v574 = vpop.xlane.xlu0 %573
  %v575 = vsel %vm176, %v365, -inf
  %576 = vmax.xlane.f32.xlu0 %v575
  %v577 = vpop.xlane.xlu0 %576
  %v578 = vsel %vm176, %v414, -inf
  %579 = vmax.xlane.f32.xlu0 %v578
  %v580 = vpop.xlane.xlu0 %579
  %v581 = vsel %vm176, %v463, -inf
  %582 = vmax.xlane.f32.xlu0 %v581
  %v583 = vpop.xlane.xlu0 %582
  %v584 = vsel %vm176, %v512, -inf
  %585 = vmax.xlane.f32.xlu0 %v584
  %v586 = vpop.xlane.xlu0 %585
  %v587 = vsel %vm176, %v561, -inf
  %588 = vmax.xlane.f32.xlu0 %v587
  %v589 = vpop.xlane.xlu0 %588
  %v590 = vsub.f32 %v218, %v568
  %v591 = vsub.f32 %v267, %v571
  %v592 = vsub.f32 %v316, %v574
  %v593 = vsub.f32 %v365, %v577
  %v594 = vsub.f32 %v414, %v580
  %v595 = vsub.f32 %v463, %v583
  %v596 = vsub.f32 %v512, %v586
  %v597 = vsub.f32 %v561, %v589
  %v598 = vmul.f32 %v590, 1.442695
  %v599 = vpow.pop %v598
  %v600 = vmul.f32 %v591, 1.442695
  %v601 = vpow.pop %v600
  %v602 = vmul.f32 %v592, 1.442695
  %v603 = vpow.pop %v602
  %v604 = vmul.f32 %v593, 1.442695
  %v605 = vpow.pop %v604
  %v606 = vmul.f32 %v594, 1.442695
  %v607 = vpow.pop %v606
  %v608 = vmul.f32 %v595, 1.442695
  %v609 = vpow.pop %v608
  %v610 = vmul.f32 %v596, 1.442695
  %v611 = vpow.pop %v610
  %v612 = vmul.f32 %v597, 1.442695
  %v613 = vpow.pop %v612
  %v614 = vsel %vm176, %v599, 0.0
  %615 = vadd.xlane.f32.xlu0 %v614
  %v616 = vpop.xlane.xlu0 %615
  %v617 = vsel %vm176, %v601, 0.0
  %618 = vadd.xlane.f32.xlu0 %v617
  %v619 = vpop.xlane.xlu0 %618
  %v620 = vsel %vm176, %v603, 0.0
  %621 = vadd.xlane.f32.xlu0 %v620
  %v622 = vpop.xlane.xlu0 %621
  %v623 = vsel %vm176, %v605, 0.0
  %624 = vadd.xlane.f32.xlu0 %v623
  %v625 = vpop.xlane.xlu0 %624
  %v626 = vsel %vm176, %v607, 0.0
  %627 = vadd.xlane.f32.xlu0 %v626
  %v628 = vpop.xlane.xlu0 %627
  %v629 = vsel %vm176, %v609, 0.0
  %630 = vadd.xlane.f32.xlu0 %v629
  %v631 = vpop.xlane.xlu0 %630
  %v632 = vsel %vm176, %v611, 0.0
  %633 = vadd.xlane.f32.xlu0 %v632
  %v634 = vpop.xlane.xlu0 %633
  %v635 = vsel %vm176, %v613, 0.0
  %636 = vadd.xlane.f32.xlu0 %v635
  %v637 = vpop.xlane.xlu0 %636
  %v638 = vrcp.pop %v616
  %v639 = vrcp.pop %v619
  %v640 = vrcp.pop %v622
  %v641 = vrcp.pop %v625
  %v642 = vrcp.pop %v628
  %v643 = vrcp.pop %v631
  %v644 = vrcp.pop %v634
  %v645 = vrcp.pop %v637
  %v646 = vmul.f32 %v599, %v638
  %v647 = vmul.f32 %v601, %v639
  %v648 = vmul.f32 %v603, %v640
  %v649 = vmul.f32 %v605, %v641
  %v650 = vmul.f32 %v607, %v642
  %v651 = vmul.f32 %v609, %v643
  %v652 = vmul.f32 %v611, %v644
  %v653 = vmul.f32 %v613, %v645
  %v654 = vpack.c.bf16 %v646, %v646
  %v655 = vpack.c.bf16 %v647, %v647
  %v656 = vpack.c.bf16 %v648, %v648
  %v657 = vpack.c.bf16 %v649, %v649
  %v658 = vpack.c.bf16 %v650, %v650
  %v659 = vpack.c.bf16 %v651, %v651
  %v660 = vpack.c.bf16 %v652, %v652
  %v661 = vpack.c.bf16 %v653, %v653
  %662 = vrot.lane.b32.xlu0 %v165, 64
  %v663 = vpop.permute.xlu0 %662
  %v665 = vsel %vm176, %v654, 0
  %vm667 = vcmask 1043456
  %v669 = vsel %vm667, %v663, 0
  %671 = vmatprep.subr.bf16.mxu0 0
  %672 = vmatpush1.bf16.msra.mxu0 %v669
  %673 = vmatprep.subr.bf16.mxu0 0
  %674 = vmatpush1.bf16.msra.mxu0 0
  %675 = vmatprep.subr.bf16.mxu0 0
  %676 = vmatpush1.bf16.msra.mxu0 0
  %677 = vmatprep.subr.bf16.mxu0 0
  %678 = vmatpush1.bf16.msra.mxu0 0
  %679 = vmatprep.subr.bf16.mxu0 0
  %680 = vmatpush1.bf16.msra.mxu0 0
  %681 = vmatprep.subr.bf16.mxu0 0
  %682 = vmatpush1.bf16.msra.mxu0 0
  %683 = vmatprep.subr.bf16.mxu0 0
  %684 = vmatpush1.bf16.msra.mxu0 0
  %685 = vmatprep.subr.bf16.mxu0 0
  %686 = vmatpush1.bf16.msra.mxu0 0
  %687 = vmatprep.subr.bf16.mxu0 0
  %688 = vmatpush1.bf16.msra.mxu0 0
  %689 = vmatprep.subr.bf16.mxu0 0
  %690 = vmatpush1.bf16.msra.mxu0 0
  %691 = vmatprep.subr.bf16.mxu0 0
  %692 = vmatpush1.bf16.msra.mxu0 0
  %693 = vmatprep.subr.bf16.mxu0 0
  %694 = vmatpush1.bf16.msra.mxu0 0
  %695 = vmatprep.subr.bf16.mxu0 0
  %696 = vmatpush1.bf16.msra.mxu0 0
  %697 = vmatprep.subr.bf16.mxu0 0
  %698 = vmatpush1.bf16.msra.mxu0 0
  %699 = vmatprep.subr.bf16.mxu0 0
  %700 = vmatpush1.bf16.msra.mxu0 0
  %701 = vmatprep.subr.bf16.mxu0 0
  %702 = vmatpush1.bf16.msra.mxu0 0
  %703 = vmatprep.mubr.bf16.mxu0 0
  %704 = vmatmul.mubr.bf16.gmra.mrb[0].mxu0 %v665
  %v705 = vpop.f32.mrb[0].mxu0
  %v706 = vadd.f32 0.0, %v705
  %v707 = vpop.f32.mrb[0].mxu0
  %v708 = vpop.f32.mrb[0].mxu0
  %v709 = vpop.f32.mrb[0].mxu0
  %710 = vdwg.mxu0
  %711 = vrot.lane.b32.xlu0 %v166, 64
  %v712 = vpop.permute.xlu0 %711
  %v714 = vsel %vm176, %v655, 0
  %v717 = vsel %vm667, %v712, 0
  %719 = vmatprep.subr.bf16.mxu0 0
  %720 = vmatpush1.bf16.msra.mxu0 %v717
  %721 = vmatprep.subr.bf16.mxu0 0
  %722 = vmatpush1.bf16.msra.mxu0 0
  %723 = vmatprep.subr.bf16.mxu0 0
  %724 = vmatpush1.bf16.msra.mxu0 0
  %725 = vmatprep.subr.bf16.mxu0 0
  %726 = vmatpush1.bf16.msra.mxu0 0
  %727 = vmatprep.subr.bf16.mxu0 0
  %728 = vmatpush1.bf16.msra.mxu0 0
  %729 = vmatprep.subr.bf16.mxu0 0
  %730 = vmatpush1.bf16.msra.mxu0 0
  %731 = vmatprep.subr.bf16.mxu0 0
  %732 = vmatpush1.bf16.msra.mxu0 0
  %733 = vmatprep.subr.bf16.mxu0 0
  %734 = vmatpush1.bf16.msra.mxu0 0
  %735 = vmatprep.subr.bf16.mxu0 0
  %736 = vmatpush1.bf16.msra.mxu0 0
  %737 = vmatprep.subr.bf16.mxu0 0
  %738 = vmatpush1.bf16.msra.mxu0 0
  %739 = vmatprep.subr.bf16.mxu0 0
  %740 = vmatpush1.bf16.msra.mxu0 0
  %741 = vmatprep.subr.bf16.mxu0 0
  %742 = vmatpush1.bf16.msra.mxu0 0
  %743 = vmatprep.subr.bf16.mxu0 0
  %744 = vmatpush1.bf16.msra.mxu0 0
  %745 = vmatprep.subr.bf16.mxu0 0
  %746 = vmatpush1.bf16.msra.mxu0 0
  %747 = vmatprep.subr.bf16.mxu0 0
  %748 = vmatpush1.bf16.msra.mxu0 0
  %749 = vmatprep.subr.bf16.mxu0 0
  %750 = vmatpush1.bf16.msra.mxu0 0
  %751 = vmatprep.mubr.bf16.mxu0 0
  %752 = vmatmul.mubr.bf16.gmra.mrb[0].mxu0 %v714
  %v753 = vpop.f32.mrb[0].mxu0
  %v754 = vadd.f32 0.0, %v753
  %v755 = vpop.f32.mrb[0].mxu0
  %v756 = vpop.f32.mrb[0].mxu0
  %v757 = vpop.f32.mrb[0].mxu0
  %758 = vdwg.mxu0
  %759 = vrot.lane.b32.xlu0 %v167, 64
  %v760 = vpop.permute.xlu0 %759
  %v762 = vsel %vm176, %v656, 0
  %v765 = vsel %vm667, %v760, 0
  %767 = vmatprep.subr.bf16.mxu0 0
  %768 = vmatpush1.bf16.msra.mxu0 %v765
  %769 = vmatprep.subr.bf16.mxu0 0
  %770 = vmatpush1.bf16.msra.mxu0 0
  %771 = vmatprep.subr.bf16.mxu0 0
  %772 = vmatpush1.bf16.msra.mxu0 0
  %773 = vmatprep.subr.bf16.mxu0 0
  %774 = vmatpush1.bf16.msra.mxu0 0
  %775 = vmatprep.subr.bf16.mxu0 0
  %776 = vmatpush1.bf16.msra.mxu0 0
  %777 = vmatprep.subr.bf16.mxu0 0
  %778 = vmatpush1.bf16.msra.mxu0 0
  %779 = vmatprep.subr.bf16.mxu0 0
  %780 = vmatpush1.bf16.msra.mxu0 0
  %781 = vmatprep.subr.bf16.mxu0 0
  %782 = vmatpush1.bf16.msra.mxu0 0
  %783 = vmatprep.subr.bf16.mxu0 0
  %784 = vmatpush1.bf16.msra.mxu0 0
  %785 = vmatprep.subr.bf16.mxu0 0
  %786 = vmatpush1.bf16.msra.mxu0 0
  %787 = vmatprep.subr.bf16.mxu0 0
  %788 = vmatpush1.bf16.msra.mxu0 0
  %789 = vmatprep.subr.bf16.mxu0 0
  %790 = vmatpush1.bf16.msra.mxu0 0
  %791 = vmatprep.subr.bf16.mxu0 0
  %792 = vmatpush1.bf16.msra.mxu0 0
  %793 = vmatprep.subr.bf16.mxu0 0
  %794 = vmatpush1.bf16.msra.mxu0 0
  %795 = vmatprep.subr.bf16.mxu0 0
  %796 = vmatpush1.bf16.msra.mxu0 0
  %797 = vmatprep.subr.bf16.mxu0 0
  %798 = vmatpush1.bf16.msra.mxu0 0
  %799 = vmatprep.mubr.bf16.mxu0 0
  %800 = vmatmul.mubr.bf16.gmra.mrb[0].mxu0 %v762
  %v801 = vpop.f32.mrb[0].mxu0
  %v802 = vadd.f32 0.0, %v801
  %v803 = vpop.f32.mrb[0].mxu0
  %v804 = vpop.f32.mrb[0].mxu0
  %v805 = vpop.f32.mrb[0].mxu0
  %806 = vdwg.mxu0
  %807 = vrot.lane.b32.xlu0 %v168, 64
  %v808 = vpop.permute.xlu0 %807
  %v810 = vsel %vm176, %v657, 0
  %v813 = vsel %vm667, %v808, 0
  %815 = vmatprep.subr.bf16.mxu0 0
  %816 = vmatpush1.bf16.msra.mxu0 %v813
  %817 = vmatprep.subr.bf16.mxu0 0
  %818 = vmatpush1.bf16.msra.mxu0 0
  %819 = vmatprep.subr.bf16.mxu0 0
  %820 = vmatpush1.bf16.msra.mxu0 0
  %821 = vmatprep.subr.bf16.mxu0 0
  %822 = vmatpush1.bf16.msra.mxu0 0
  %823 = vmatprep.subr.bf16.mxu0 0
  %824 = vmatpush1.bf16.msra.mxu0 0
  %825 = vmatprep.subr.bf16.mxu0 0
  %826 = vmatpush1.bf16.msra.mxu0 0
  %827 = vmatprep.subr.bf16.mxu0 0
  %828 = vmatpush1.bf16.msra.mxu0 0
  %829 = vmatprep.subr.bf16.mxu0 0
  %830 = vmatpush1.bf16.msra.mxu0 0
  %831 = vmatprep.subr.bf16.mxu0 0
  %832 = vmatpush1.bf16.msra.mxu0 0
  %833 = vmatprep.subr.bf16.mxu0 0
  %834 = vmatpush1.bf16.msra.mxu0 0
  %835 = vmatprep.subr.bf16.mxu0 0
  %836 = vmatpush1.bf16.msra.mxu0 0
  %837 = vmatprep.subr.bf16.mxu0 0
  %838 = vmatpush1.bf16.msra.mxu0 0
  %839 = vmatprep.subr.bf16.mxu0 0
  %840 = vmatpush1.bf16.msra.mxu0 0
  %841 = vmatprep.subr.bf16.mxu0 0
  %842 = vmatpush1.bf16.msra.mxu0 0
  %843 = vmatprep.subr.bf16.mxu0 0
  %844 = vmatpush1.bf16.msra.mxu0 0
  %845 = vmatprep.subr.bf16.mxu0 0
  %846 = vmatpush1.bf16.msra.mxu0 0
  %847 = vmatprep.mubr.bf16.mxu0 0
  %848 = vmatmul.mubr.bf16.gmra.mrb[0].mxu0 %v810
  %v849 = vpop.f32.mrb[0].mxu0
  %v850 = vadd.f32 0.0, %v849
  %v851 = vpop.f32.mrb[0].mxu0
  %v852 = vpop.f32.mrb[0].mxu0
  %v853 = vpop.f32.mrb[0].mxu0
  %854 = vdwg.mxu0
  %855 = vrot.lane.b32.xlu0 %v169, 64
  %v856 = vpop.permute.xlu0 %855
  %v858 = vsel %vm176, %v658, 0
  %v861 = vsel %vm667, %v856, 0
  %863 = vmatprep.subr.bf16.mxu0 0
  %864 = vmatpush1.bf16.msra.mxu0 %v861
  %865 = vmatprep.subr.bf16.mxu0 0
  %866 = vmatpush1.bf16.msra.mxu0 0
  %867 = vmatprep.subr.bf16.mxu0 0
  %868 = vmatpush1.bf16.msra.mxu0 0
  %869 = vmatprep.subr.bf16.mxu0 0
  %870 = vmatpush1.bf16.msra.mxu0 0
  %871 = vmatprep.subr.bf16.mxu0 0
  %872 = vmatpush1.bf16.msra.mxu0 0
  %873 = vmatprep.subr.bf16.mxu0 0
  %874 = vmatpush1.bf16.msra.mxu0 0
  %875 = vmatprep.subr.bf16.mxu0 0
  %876 = vmatpush1.bf16.msra.mxu0 0
  %877 = vmatprep.subr.bf16.mxu0 0
  %878 = vmatpush1.bf16.msra.mxu0 0
  %879 = vmatprep.subr.bf16.mxu0 0
  %880 = vmatpush1.bf16.msra.mxu0 0
  %881 = vmatprep.subr.bf16.mxu0 0
  %882 = vmatpush1.bf16.msra.mxu0 0
  %883 = vmatprep.subr.bf16.mxu0 0
  %884 = vmatpush1.bf16.msra.mxu0 0
  %885 = vmatprep.subr.bf16.mxu0 0
  %886 = vmatpush1.bf16.msra.mxu0 0
  %887 = vmatprep.subr.bf16.mxu0 0
  %888 = vmatpush1.bf16.msra.mxu0 0
  %889 = vmatprep.subr.bf16.mxu0 0
  %890 = vmatpush1.bf16.msra.mxu0 0
  %891 = vmatprep.subr.bf16.mxu0 0
  %892 = vmatpush1.bf16.msra.mxu0 0
  %893 = vmatprep.subr.bf16.mxu0 0
  %894 = vmatpush1.bf16.msra.mxu0 0
  %895 = vmatprep.mubr.bf16.mxu0 0
  %896 = vmatmul.mubr.bf16.gmra.mrb[0].mxu0 %v858
  %v897 = vpop.f32.mrb[0].mxu0
  %v898 = vadd.f32 0.0, %v897
  %v899 = vpop.f32.mrb[0].mxu0
  %v900 = vpop.f32.mrb[0].mxu0
  %v901 = vpop.f32.mrb[0].mxu0
  %902 = vdwg.mxu0
  %903 = vrot.lane.b32.xlu0 %v170, 64
  %v904 = vpop.permute.xlu0 %903
  %v906 = vsel %vm176, %v659, 0
  %v909 = vsel %vm667, %v904, 0
  %911 = vmatprep.subr.bf16.mxu0 0
  %912 = vmatpush1.bf16.msra.mxu0 %v909
  %913 = vmatprep.subr.bf16.mxu0 0
  %914 = vmatpush1.bf16.msra.mxu0 0
  %915 = vmatprep.subr.bf16.mxu0 0
  %916 = vmatpush1.bf16.msra.mxu0 0
  %917 = vmatprep.subr.bf16.mxu0 0
  %918 = vmatpush1.bf16.msra.mxu0 0
  %919 = vmatprep.subr.bf16.mxu0 0
  %920 = vmatpush1.bf16.msra.mxu0 0
  %921 = vmatprep.subr.bf16.mxu0 0
  %922 = vmatpush1.bf16.msra.mxu0 0
  %923 = vmatprep.subr.bf16.mxu0 0
  %924 = vmatpush1.bf16.msra.mxu0 0
  %925 = vmatprep.subr.bf16.mxu0 0
  %926 = vmatpush1.bf16.msra.mxu0 0
  %927 = vmatprep.subr.bf16.mxu0 0
  %928 = vmatpush1.bf16.msra.mxu0 0
  %929 = vmatprep.subr.bf16.mxu0 0
  %930 = vmatpush1.bf16.msra.mxu0 0
  %931 = vmatprep.subr.bf16.mxu0 0
  %932 = vmatpush1.bf16.msra.mxu0 0
  %933 = vmatprep.subr.bf16.mxu0 0
  %934 = vmatpush1.bf16.msra.mxu0 0
  %935 = vmatprep.subr.bf16.mxu0 0
  %936 = vmatpush1.bf16.msra.mxu0 0
  %937 = vmatprep.subr.bf16.mxu0 0
  %938 = vmatpush1.bf16.msra.mxu0 0
  %939 = vmatprep.subr.bf16.mxu0 0
  %940 = vmatpush1.bf16.msra.mxu0 0
  %941 = vmatprep.subr.bf16.mxu0 0
  %942 = vmatpush1.bf16.msra.mxu0 0
  %943 = vmatprep.mubr.bf16.mxu0 0
  %944 = vmatmul.mubr.bf16.gmra.mrb[0].mxu0 %v906
  %v945 = vpop.f32.mrb[0].mxu0
  %v946 = vadd.f32 0.0, %v945
  %v947 = vpop.f32.mrb[0].mxu0
  %v948 = vpop.f32.mrb[0].mxu0
  %v949 = vpop.f32.mrb[0].mxu0
  %950 = vdwg.mxu0
  %951 = vrot.lane.b32.xlu0 %v171, 64
  %v952 = vpop.permute.xlu0 %951
  %v954 = vsel %vm176, %v660, 0
  %v957 = vsel %vm667, %v952, 0
  %959 = vmatprep.subr.bf16.mxu0 0
  %960 = vmatpush1.bf16.msra.mxu0 %v957
  %961 = vmatprep.subr.bf16.mxu0 0
  %962 = vmatpush1.bf16.msra.mxu0 0
  %963 = vmatprep.subr.bf16.mxu0 0
  %964 = vmatpush1.bf16.msra.mxu0 0
  %965 = vmatprep.subr.bf16.mxu0 0
  %966 = vmatpush1.bf16.msra.mxu0 0
  %967 = vmatprep.subr.bf16.mxu0 0
  %968 = vmatpush1.bf16.msra.mxu0 0
  %969 = vmatprep.subr.bf16.mxu0 0
  %970 = vmatpush1.bf16.msra.mxu0 0
  %971 = vmatprep.subr.bf16.mxu0 0
  %972 = vmatpush1.bf16.msra.mxu0 0
  %973 = vmatprep.subr.bf16.mxu0 0
  %974 = vmatpush1.bf16.msra.mxu0 0
  %975 = vmatprep.subr.bf16.mxu0 0
  %976 = vmatpush1.bf16.msra.mxu0 0
  %977 = vmatprep.subr.bf16.mxu0 0
  %978 = vmatpush1.bf16.msra.mxu0 0
  %979 = vmatprep.subr.bf16.mxu0 0
  %980 = vmatpush1.bf16.msra.mxu0 0
  %981 = vmatprep.subr.bf16.mxu0 0
  %982 = vmatpush1.bf16.msra.mxu0 0
  %983 = vmatprep.subr.bf16.mxu0 0
  %984 = vmatpush1.bf16.msra.mxu0 0
  %985 = vmatprep.subr.bf16.mxu0 0
  %986 = vmatpush1.bf16.msra.mxu0 0
  %987 = vmatprep.subr.bf16.mxu0 0
  %988 = vmatpush1.bf16.msra.mxu0 0
  %989 = vmatprep.subr.bf16.mxu0 0
  %990 = vmatpush1.bf16.msra.mxu0 0
  %991 = vmatprep.mubr.bf16.mxu0 0
  %992 = vmatmul.mubr.bf16.gmra.mrb[0].mxu0 %v954
  %v993 = vpop.f32.mrb[0].mxu0
  %v994 = vadd.f32 0.0, %v993
  %v995 = vpop.f32.mrb[0].mxu0
  %v996 = vpop.f32.mrb[0].mxu0
  %v997 = vpop.f32.mrb[0].mxu0
  %998 = vdwg.mxu0
  %999 = vrot.lane.b32.xlu0 %v172, 64
  %v1000 = vpop.permute.xlu0 %999
  %v1002 = vsel %vm176, %v661, 0
  %v1005 = vsel %vm667, %v1000, 0
  %1007 = vmatprep.subr.bf16.mxu0 0
  %1008 = vmatpush1.bf16.msra.mxu0 %v1005
  %1009 = vmatprep.subr.bf16.mxu0 0
  %1010 = vmatpush1.bf16.msra.mxu0 0
  %1011 = vmatprep.subr.bf16.mxu0 0
  %1012 = vmatpush1.bf16.msra.mxu0 0
  %1013 = vmatprep.subr.bf16.mxu0 0
  %1014 = vmatpush1.bf16.msra.mxu0 0
  %1015 = vmatprep.subr.bf16.mxu0 0
  %1016 = vmatpush1.bf16.msra.mxu0 0
  %1017 = vmatprep.subr.bf16.mxu0 0
  %1018 = vmatpush1.bf16.msra.mxu0 0
  %1019 = vmatprep.subr.bf16.mxu0 0
  %1020 = vmatpush1.bf16.msra.mxu0 0
  %1021 = vmatprep.subr.bf16.mxu0 0
  %1022 = vmatpush1.bf16.msra.mxu0 0
  %1023 = vmatprep.subr.bf16.mxu0 0
  %1024 = vmatpush1.bf16.msra.mxu0 0
  %1025 = vmatprep.subr.bf16.mxu0 0
  %1026 = vmatpush1.bf16.msra.mxu0 0
  %1027 = vmatprep.subr.bf16.mxu0 0
  %1028 = vmatpush1.bf16.msra.mxu0 0
  %1029 = vmatprep.subr.bf16.mxu0 0
  %1030 = vmatpush1.bf16.msra.mxu0 0
  %1031 = vmatprep.subr.bf16.mxu0 0
  %1032 = vmatpush1.bf16.msra.mxu0 0
  %1033 = vmatprep.subr.bf16.mxu0 0
  %1034 = vmatpush1.bf16.msra.mxu0 0
  %1035 = vmatprep.subr.bf16.mxu0 0
  %1036 = vmatpush1.bf16.msra.mxu0 0
  %1037 = vmatprep.subr.bf16.mxu0 0
  %1038 = vmatpush1.bf16.msra.mxu0 0
  %1039 = vmatprep.mubr.bf16.mxu0 0
  %1040 = vmatmul.mubr.bf16.gmra.mrb[0].mxu0 %v1002
  %v1041 = vpop.f32.mrb[0].mxu0
  %v1042 = vadd.f32 0.0, %v1041
  %v1043 = vpop.f32.mrb[0].mxu0
  %v1044 = vpop.f32.mrb[0].mxu0
  %v1045 = vpop.f32.mrb[0].mxu0
  %1046 = vdwg.mxu0
  %1049 = vrot.lane.b32.xlu0 %v754, 8
  %v1050 = vpop.permute.xlu0 %1049
  %1051 = vrot.lane.b32.xlu0 %v946, 8
  %v1052 = vpop.permute.xlu0 %1051
  %1057 = vrot.lane.b32.xlu0 %v802, 16
  %v1058 = vpop.permute.xlu0 %1057
  %1059 = vrot.lane.b32.xlu0 %v994, 16
  %v1060 = vpop.permute.xlu0 %1059
  %1065 = vrot.lane.b32.xlu0 %v850, 24
  %v1066 = vpop.permute.xlu0 %1065
  %1067 = vrot.lane.b32.xlu0 %v1042, 24
  %v1068 = vpop.permute.xlu0 %1067
  %v1071 = vsel %vm176, %v706, %v1050
  %v1072 = vsel %vm176, %v898, %v1052
  %vm1073 = vcmask 130048
  %v1074 = vsel %vm1073, %v1071, %v1058
  %v1075 = vsel %vm1073, %v1072, %v1060
  %vm1076 = vcmask 195584
  %v1077 = vsel %vm1076, %v1074, %v1066
  %v1078 = vsel %vm1076, %v1075, %v1068
  %v1079 = vpack.c.bf16 %v1078, %v1077
  %v1080 = vld [vmem:[%s4] sm:$0xf]
  %v1081 = vld [vmem:[%s4 + $0x4] sm:$0xf]
  %v1082 = vld [vmem:[%s4 + $0x8] sm:$0xf]
  %v1083 = vld [vmem:[%s4 + $0xc] sm:$0xf]
  %v1088 = vunpack.c.l.b16 %v1080
  %v1089 = vunpack.c.l.b16 %v1081
  %v1090 = vunpack.c.l.b16 %v1082
  %v1091 = vunpack.c.l.b16 %v1083
  %v1092 = vpack.c.b16 %v1089, %v1088
  %v1093 = vpack.c.b16 %v1091, %v1090
  %v1097 = vsel %vm60, %v1079, 0
  %1099 = vmatprep.subr.bf16.mxu0 0
  %1100 = vmatpush1.bf16.msra.mxu0 %v1092
  %1101 = vmatprep.subr.bf16.mxu0 0
  %1102 = vmatpush1.bf16.msra.mxu0 %v1093
  %1103 = vmatprep.subr.bf16.mxu0 0
  %1104 = vmatpush1.bf16.msra.mxu0 0
  %1105 = vmatprep.subr.bf16.mxu0 0
  %1106 = vmatpush1.bf16.msra.mxu0 0
  %1107 = vmatprep.subr.bf16.mxu0 0
  %1108 = vmatpush1.bf16.msra.mxu0 0
  %1109 = vmatprep.subr.bf16.mxu0 0
  %1110 = vmatpush1.bf16.msra.mxu0 0
  %1111 = vmatprep.subr.bf16.mxu0 0
  %1112 = vmatpush1.bf16.msra.mxu0 0
  %1113 = vmatprep.subr.bf16.mxu0 0
  %1114 = vmatpush1.bf16.msra.mxu0 0
  %1115 = vmatprep.subr.bf16.mxu0 0
  %1116 = vmatpush1.bf16.msra.mxu0 0
  %1117 = vmatprep.subr.bf16.mxu0 0
  %1118 = vmatpush1.bf16.msra.mxu0 0
  %1119 = vmatprep.subr.bf16.mxu0 0
  %1120 = vmatpush1.bf16.msra.mxu0 0
  %1121 = vmatprep.subr.bf16.mxu0 0
  %1122 = vmatpush1.bf16.msra.mxu0 0
  %1123 = vmatprep.subr.bf16.mxu0 0
  %1124 = vmatpush1.bf16.msra.mxu0 0
  %1125 = vmatprep.subr.bf16.mxu0 0
  %1126 = vmatpush1.bf16.msra.mxu0 0
  %1127 = vmatprep.subr.bf16.mxu0 0
  %1128 = vmatpush1.bf16.msra.mxu0 0
  %1129 = vmatprep.subr.bf16.mxu0 0
  %1130 = vmatpush1.bf16.msra.mxu0 0
  %1131 = vmatprep.mubr.bf16.mxu0 0
  %1132 = vmatmul.mubr.bf16.gmra.mrb[0].mxu0 %v1097
  %v1133 = vpop.f32.mrb[0].mxu0
  %v1134 = vadd.f32 0.0, %v1133
  %v1135 = vpop.f32.mrb[0].mxu0
  %v1136 = vpop.f32.mrb[0].mxu0
  %v1137 = vadd.f32 0.0, %v1136
  %v1138 = vpop.f32.mrb[0].mxu0
  %1139 = vdwg.mxu0
  %v1140 = vadd.f32 %v47, %v1134
  %v1141 = vadd.f32 %v48, %v1137
  %v1142 = vld [vmem:[%s5] sm:$0x1]
  %v1143 = vmul.f32 %v1140, %v1140
  %v1144 = vmul.f32 %v1141, %v1141
  %v1145 = vsel %vm60, %v1143, 0.0
  %1146 = vadd.xlane.f32.xlu0 %v1145
  %v1147 = vpop.xlane.xlu0 %1146
  %v1148 = vsel %vm60, %v1144, 0.0
  %1149 = vadd.xlane.f32.xlu0 %v1148
  %v1150 = vpop.xlane.xlu0 %1149
  %v1151 = vmul.f32 %v1147, %v67
  %v1152 = vmul.f32 %v1150, %v67
  %v1153 = vadd.f32 %v1151, 1e-06
  %v1154 = vadd.f32 %v1152, 1e-06
  %v1155 = vrsqrt.pop %v1153
  %v1156 = vrsqrt.pop %v1154
  %v1157 = vmul.f32 %v1140, %v1155
  %v1158 = vmul.f32 %v1141, %v1156
  %v1160 = vlaneseq
  %v1161 = vshrl.u32 %v1160, 7
  %v1162 = vsub.s32 0, %v1161
  %v1163 = vrot.slane %v1142, %v1162
  %v1165 = vmul.f32 %v1157, %v1163
  %v1166 = vmul.f32 %v1158, %v1163
  %v1167 = vpack.c.bf16 %v1166, %v1165
  %v1168 = vld [vmem:[%s6] sm:$0xf]
  %v1169 = vld [vmem:[%s6 + $0x4] sm:$0xf]
  %v1170 = vld [vmem:[%s6 + $0x8] sm:$0xf]
  %v1171 = vld [vmem:[%s6 + $0xc] sm:$0xf]
  %v1176 = vunpack.c.l.b16 %v1168
  %v1177 = vunpack.c.l.b16 %v1169
  %v1178 = vunpack.c.l.b16 %v1170
  %v1179 = vunpack.c.l.b16 %v1171
  %v1180 = vpack.c.b16 %v1177, %v1176
  %v1181 = vpack.c.b16 %v1179, %v1178
  %v1185 = vsel %vm60, %v1167, 0
  %1187 = vmatprep.subr.bf16.mxu0 0
  %1188 = vmatpush1.bf16.msra.mxu0 %v1180
  %1189 = vmatprep.subr.bf16.mxu0 0
  %1190 = vmatpush1.bf16.msra.mxu0 %v1181
  %1191 = vmatprep.subr.bf16.mxu0 0
  %1192 = vmatpush1.bf16.msra.mxu0 0
  %1193 = vmatprep.subr.bf16.mxu0 0
  %1194 = vmatpush1.bf16.msra.mxu0 0
  %1195 = vmatprep.subr.bf16.mxu0 0
  %1196 = vmatpush1.bf16.msra.mxu0 0
  %1197 = vmatprep.subr.bf16.mxu0 0
  %1198 = vmatpush1.bf16.msra.mxu0 0
  %1199 = vmatprep.subr.bf16.mxu0 0
  %1200 = vmatpush1.bf16.msra.mxu0 0
  %1201 = vmatprep.subr.bf16.mxu0 0
  %1202 = vmatpush1.bf16.msra.mxu0 0
  %1203 = vmatprep.subr.bf16.mxu0 0
  %1204 = vmatpush1.bf16.msra.mxu0 0
  %1205 = vmatprep.subr.bf16.mxu0 0
  %1206 = vmatpush1.bf16.msra.mxu0 0
  %1207 = vmatprep.subr.bf16.mxu0 0
  %1208 = vmatpush1.bf16.msra.mxu0 0
  %1209 = vmatprep.subr.bf16.mxu0 0
  %1210 = vmatpush1.bf16.msra.mxu0 0
  %1211 = vmatprep.subr.bf16.mxu0 0
  %1212 = vmatpush1.bf16.msra.mxu0 0
  %1213 = vmatprep.subr.bf16.mxu0 0
  %1214 = vmatpush1.bf16.msra.mxu0 0
  %1215 = vmatprep.subr.bf16.mxu0 0
  %1216 = vmatpush1.bf16.msra.mxu0 0
  %1217 = vmatprep.subr.bf16.mxu0 0
  %1218 = vmatpush1.bf16.msra.mxu0 0
  %1219 = vmatprep.mubr.bf16.mxu0 0
  %1220 = vmatmul.mubr.bf16.gmra.mrb[0].mxu0 %v1185
  %v1221 = vpop.f32.mrb[0].mxu0
  %v1222 = vadd.f32 0.0, %v1221
  %v1223 = vpop.f32.mrb[0].mxu0
  %v1224 = vpop.f32.mrb[0].mxu0
  %v1225 = vadd.f32 0.0, %v1224
  %v1226 = vpop.f32.mrb[0].mxu0
  %1227 = vdwg.mxu0
  %v1228 = vmax.f32 %v1222, 0.0
  %v1229 = vmax.f32 %v1225, 0.0
  %v1230 = vpack.c.bf16 %v1229, %v1228
  %v1231 = vld [vmem:[%s7] sm:$0xf]
  %v1232 = vld [vmem:[%s7 + $0x4] sm:$0xf]
  %v1233 = vld [vmem:[%s7 + $0x8] sm:$0xf]
  %v1234 = vld [vmem:[%s7 + $0xc] sm:$0xf]
  %v1235 = vld [vmem:[%s7 + $0x10] sm:$0xf]
  %v1236 = vld [vmem:[%s7 + $0x14] sm:$0xf]
  %v1237 = vld [vmem:[%s7 + $0x18] sm:$0xf]
  %v1238 = vld [vmem:[%s7 + $0x1c] sm:$0xf]
  %v1247 = vunpack.c.l.b16 %v1231
  %v1248 = vunpack.c.l.b16 %v1232
  %v1249 = vunpack.c.l.b16 %v1233
  %v1250 = vunpack.c.l.b16 %v1234
  %v1251 = vunpack.c.l.b16 %v1235
  %v1252 = vunpack.c.l.b16 %v1236
  %v1253 = vunpack.c.l.b16 %v1237
  %v1254 = vunpack.c.l.b16 %v1238
  %v1255 = vpack.c.b16 %v1248, %v1247
  %v1256 = vpack.c.b16 %v1250, %v1249
  %v1257 = vpack.c.b16 %v1252, %v1251
  %v1258 = vpack.c.b16 %v1254, %v1253
  %vm1263 = vcmask 523264
  %v1265 = vsel %vm1263, %v1230, 0
  %1267 = vmatprep.subr.bf16.mxu0 0
  %1268 = vmatpush1.bf16.msra.mxu0 %v1255
  %1269 = vmatprep.subr.bf16.mxu0 0
  %1270 = vmatpush1.bf16.msra.mxu0 %v1256
  %1271 = vmatprep.subr.bf16.mxu0 0
  %1272 = vmatpush1.bf16.msra.mxu0 %v1257
  %1273 = vmatprep.subr.bf16.mxu0 0
  %1274 = vmatpush1.bf16.msra.mxu0 %v1258
  %1275 = vmatprep.subr.bf16.mxu0 0
  %1276 = vmatpush1.bf16.msra.mxu0 0
  %1277 = vmatprep.subr.bf16.mxu0 0
  %1278 = vmatpush1.bf16.msra.mxu0 0
  %1279 = vmatprep.subr.bf16.mxu0 0
  %1280 = vmatpush1.bf16.msra.mxu0 0
  %1281 = vmatprep.subr.bf16.mxu0 0
  %1282 = vmatpush1.bf16.msra.mxu0 0
  %1283 = vmatprep.subr.bf16.mxu0 0
  %1284 = vmatpush1.bf16.msra.mxu0 0
  %1285 = vmatprep.subr.bf16.mxu0 0
  %1286 = vmatpush1.bf16.msra.mxu0 0
  %1287 = vmatprep.subr.bf16.mxu0 0
  %1288 = vmatpush1.bf16.msra.mxu0 0
  %1289 = vmatprep.subr.bf16.mxu0 0
  %1290 = vmatpush1.bf16.msra.mxu0 0
  %1291 = vmatprep.subr.bf16.mxu0 0
  %1292 = vmatpush1.bf16.msra.mxu0 0
  %1293 = vmatprep.subr.bf16.mxu0 0
  %1294 = vmatpush1.bf16.msra.mxu0 0
  %1295 = vmatprep.subr.bf16.mxu0 0
  %1296 = vmatpush1.bf16.msra.mxu0 0
  %1297 = vmatprep.subr.bf16.mxu0 0
  %1298 = vmatpush1.bf16.msra.mxu0 0
  %1299 = vmatprep.mubr.bf16.mxu0 0
  %1300 = vmatmul.mubr.bf16.gmra.mrb[0].mxu0 %v1265
  %v1301 = vpop.f32.mrb[0].mxu0
  %v1302 = vadd.f32 0.0, %v1301
  %v1303 = vpop.f32.mrb[0].mxu0
  %v1304 = vpop.f32.mrb[0].mxu0
  %v1305 = vadd.f32 0.0, %v1304
  %v1306 = vpop.f32.mrb[0].mxu0
  %1307 = vdwg.mxu0
  %v1308 = vadd.f32 %v1140, %v1302
  %v1309 = vadd.f32 %v1141, %v1305
  %s1310 = scalar_lea.vmem %s2, 1
  %v1311 = vld [vmem:[%s1310] sm:$0x1]
  %v1312 = vmul.f32 %v1308, %v1308
  %v1313 = vmul.f32 %v1309, %v1309
  %v1314 = vsel %vm60, %v1312, 0.0
  %1315 = vadd.xlane.f32.xlu0 %v1314
  %v1316 = vpop.xlane.xlu0 %1315
  %v1317 = vsel %vm60, %v1313, 0.0
  %1318 = vadd.xlane.f32.xlu0 %v1317
  %v1319 = vpop.xlane.xlu0 %1318
  %v1320 = vmul.f32 %v1316, %v67
  %v1321 = vmul.f32 %v1319, %v67
  %v1322 = vadd.f32 %v1320, 1e-06
  %v1323 = vadd.f32 %v1321, 1e-06
  %v1324 = vrsqrt.pop %v1322
  %v1325 = vrsqrt.pop %v1323
  %v1326 = vmul.f32 %v1308, %v1324
  %v1327 = vmul.f32 %v1309, %v1325
  %v1329 = vlaneseq
  %v1330 = vshrl.u32 %v1329, 7
  %v1331 = vsub.s32 0, %v1330
  %v1332 = vrot.slane %v1311, %v1331
  %v1334 = vmul.f32 %v1326, %v1332
  %v1335 = vmul.f32 %v1327, %v1332
  %v1336 = vpack.c.bf16 %v1335, %v1334
  %s1337 = scalar_lea.vmem %s3, 16
  %v1338 = vld [vmem:[%s1337] sm:$0xf]
  %v1339 = vld [vmem:[%s1337 + $0x4] sm:$0xf]
  %v1340 = vld [vmem:[%s1337 + $0x8] sm:$0xf]
  %v1341 = vld [vmem:[%s1337 + $0xc] sm:$0xf]
  %v1346 = vunpack.c.l.b16 %v1338
  %v1347 = vunpack.c.l.b16 %v1339
  %v1348 = vunpack.c.l.b16 %v1340
  %v1349 = vunpack.c.l.b16 %v1341
  %v1350 = vpack.c.b16 %v1347, %v1346
  %v1351 = vpack.c.b16 %v1349, %v1348
  %v1355 = vsel %vm60, %v1336, 0
  %1357 = vmatprep.subr.bf16.mxu0 0
  %1358 = vmatpush1.bf16.msra.mxu0 %v1350
  %1359 = vmatprep.subr.bf16.mxu0 0
  %1360 = vmatpush1.bf16.msra.mxu0 %v1351
  %1361 = vmatprep.subr.bf16.mxu0 0
  %1362 = vmatpush1.bf16.msra.mxu0 0
  %1363 = vmatprep.subr.bf16.mxu0 0
  %1364 = vmatpush1.bf16.msra.mxu0 0
  %1365 = vmatprep.subr.bf16.mxu0 0
  %1366 = vmatpush1.bf16.msra.mxu0 0
  %1367 = vmatprep.subr.bf16.mxu0 0
  %1368 = vmatpush1.bf16.msra.mxu0 0
  %1369 = vmatprep.subr.bf16.mxu0 0
  %1370 = vmatpush1.bf16.msra.mxu0 0
  %1371 = vmatprep.subr.bf16.mxu0 0
  %1372 = vmatpush1.bf16.msra.mxu0 0
  %1373 = vmatprep.subr.bf16.mxu0 0
  %1374 = vmatpush1.bf16.msra.mxu0 0
  %1375 = vmatprep.subr.bf16.mxu0 0
  %1376 = vmatpush1.bf16.msra.mxu0 0
  %1377 = vmatprep.subr.bf16.mxu0 0
  %1378 = vmatpush1.bf16.msra.mxu0 0
  %1379 = vmatprep.subr.bf16.mxu0 0
  %1380 = vmatpush1.bf16.msra.mxu0 0
  %1381 = vmatprep.subr.bf16.mxu0 0
  %1382 = vmatpush1.bf16.msra.mxu0 0
  %1383 = vmatprep.subr.bf16.mxu0 0
  %1384 = vmatpush1.bf16.msra.mxu0 0
  %1385 = vmatprep.subr.bf16.mxu0 0
  %1386 = vmatpush1.bf16.msra.mxu0 0
  %1387 = vmatprep.subr.bf16.mxu0 0
  %1388 = vmatpush1.bf16.msra.mxu0 0
  %1389 = vmatprep.mubr.bf16.mxu0 0
  %1390 = vmatmul.mubr.bf16.gmra.mrb[0].mxu0 %v1355
  %v1391 = vpop.f32.mrb[0].mxu0
  %v1392 = vadd.f32 0.0, %v1391
  %v1393 = vpop.f32.mrb[0].mxu0
  %v1394 = vpop.f32.mrb[0].mxu0
  %v1395 = vadd.f32 0.0, %v1394
  %v1396 = vpop.f32.mrb[0].mxu0
  %1397 = vdwg.mxu0
  %1400 = vrot.lane.b32.xlu0 %v1392, 120
  %v1401 = vpop.permute.xlu0 %1400
  %1402 = vrot.lane.b32.xlu0 %v1395, 120
  %v1403 = vpop.permute.xlu0 %1402
  %1406 = vrot.lane.b32.xlu0 %v1392, 112
  %v1407 = vpop.permute.xlu0 %1406
  %1408 = vrot.lane.b32.xlu0 %v1395, 112
  %v1409 = vpop.permute.xlu0 %1408
  %1412 = vrot.lane.b32.xlu0 %v1392, 104
  %v1413 = vpop.permute.xlu0 %1412
  %1414 = vrot.lane.b32.xlu0 %v1395, 104
  %v1415 = vpop.permute.xlu0 %1414
  %v1418 = vpack.c.bf16 %v1392, %v1392
  %v1419 = vpack.c.bf16 %v1401, %v1401
  %v1420 = vpack.c.bf16 %v1407, %v1407
  %v1421 = vpack.c.bf16 %v1413, %v1413
  %v1422 = vpack.c.bf16 %v1395, %v1395
  %v1423 = vpack.c.bf16 %v1403, %v1403
  %v1424 = vpack.c.bf16 %v1409, %v1409
  %v1425 = vpack.c.bf16 %v1415, %v1415
  %1427 = vrot.lane.b32.xlu0 %v1418, 96
  %v1428 = vpop.permute.xlu0 %1427
  %v1430 = vsel %vm176, %v1418, 0
  %v1433 = vsel %vm176, %v1428, 0
  %1435 = vmatprep.subr.bf16.mxu0 0
  %1436 = vmatpush1.bf16.xpose.msra.mxu0 %v1433
  %1437 = vmatprep.subr.bf16.mxu0 0
  %1438 = vmatpush1.bf16.xpose.msra.mxu0 0
  %1439 = vmatprep.subr.bf16.mxu0 0
  %1440 = vmatpush1.bf16.xpose.msra.mxu0 0
  %1441 = vmatprep.subr.bf16.mxu0 0
  %1442 = vmatpush1.bf16.xpose.msra.mxu0 0
  %1443 = vmatprep.subr.bf16.mxu0 0
  %1444 = vmatpush1.bf16.xpose.msra.mxu0 0
  %1445 = vmatprep.subr.bf16.mxu0 0
  %1446 = vmatpush1.bf16.xpose.msra.mxu0 0
  %1447 = vmatprep.subr.bf16.mxu0 0
  %1448 = vmatpush1.bf16.xpose.msra.mxu0 0
  %1449 = vmatprep.subr.bf16.mxu0 0
  %1450 = vmatpush1.bf16.xpose.msra.mxu0 0
  %1451 = vmatprep.subr.bf16.mxu0 0
  %1452 = vmatpush1.bf16.xpose.msra.mxu0 0
  %1453 = vmatprep.subr.bf16.mxu0 0
  %1454 = vmatpush1.bf16.xpose.msra.mxu0 0
  %1455 = vmatprep.subr.bf16.mxu0 0
  %1456 = vmatpush1.bf16.xpose.msra.mxu0 0
  %1457 = vmatprep.subr.bf16.mxu0 0
  %1458 = vmatpush1.bf16.xpose.msra.mxu0 0
  %1459 = vmatprep.subr.bf16.mxu0 0
  %1460 = vmatpush1.bf16.xpose.msra.mxu0 0
  %1461 = vmatprep.subr.bf16.mxu0 0
  %1462 = vmatpush1.bf16.xpose.msra.mxu0 0
  %1463 = vmatprep.subr.bf16.mxu0 0
  %1464 = vmatpush1.bf16.xpose.msra.mxu0 0
  %1465 = vmatprep.subr.bf16.mxu0 0
  %1466 = vmatpush1.bf16.xpose.msra.mxu0 0
  %1467 = vmatprep.mubr.bf16.mxu0 0
  %1468 = vmatmul.mubr.bf16.gmra.mrb[0].mxu0 %v1430
  %v1469 = vpop.f32.mrb[0].mxu0
  %v1470 = vadd.f32 %v49, %v1469
  %v1471 = vpop.f32.mrb[0].mxu0
  %v1472 = vpop.f32.mrb[0].mxu0
  %v1473 = vpop.f32.mrb[0].mxu0
  %1474 = vdwg.mxu0
  %1476 = vrot.lane.b32.xlu0 %v1419, 96
  %v1477 = vpop.permute.xlu0 %1476
  %v1479 = vsel %vm176, %v1419, 0
  %v1482 = vsel %vm176, %v1477, 0
  %1484 = vmatprep.subr.bf16.mxu0 0
  %1485 = vmatpush1.bf16.xpose.msra.mxu0 %v1482
  %1486 = vmatprep.subr.bf16.mxu0 0
  %1487 = vmatpush1.bf16.xpose.msra.mxu0 0
  %1488 = vmatprep.subr.bf16.mxu0 0
  %1489 = vmatpush1.bf16.xpose.msra.mxu0 0
  %1490 = vmatprep.subr.bf16.mxu0 0
  %1491 = vmatpush1.bf16.xpose.msra.mxu0 0
  %1492 = vmatprep.subr.bf16.mxu0 0
  %1493 = vmatpush1.bf16.xpose.msra.mxu0 0
  %1494 = vmatprep.subr.bf16.mxu0 0
  %1495 = vmatpush1.bf16.xpose.msra.mxu0 0
  %1496 = vmatprep.subr.bf16.mxu0 0
  %1497 = vmatpush1.bf16.xpose.msra.mxu0 0
  %1498 = vmatprep.subr.bf16.mxu0 0
  %1499 = vmatpush1.bf16.xpose.msra.mxu0 0
  %1500 = vmatprep.subr.bf16.mxu0 0
  %1501 = vmatpush1.bf16.xpose.msra.mxu0 0
  %1502 = vmatprep.subr.bf16.mxu0 0
  %1503 = vmatpush1.bf16.xpose.msra.mxu0 0
  %1504 = vmatprep.subr.bf16.mxu0 0
  %1505 = vmatpush1.bf16.xpose.msra.mxu0 0
  %1506 = vmatprep.subr.bf16.mxu0 0
  %1507 = vmatpush1.bf16.xpose.msra.mxu0 0
  %1508 = vmatprep.subr.bf16.mxu0 0
  %1509 = vmatpush1.bf16.xpose.msra.mxu0 0
  %1510 = vmatprep.subr.bf16.mxu0 0
  %1511 = vmatpush1.bf16.xpose.msra.mxu0 0
  %1512 = vmatprep.subr.bf16.mxu0 0
  %1513 = vmatpush1.bf16.xpose.msra.mxu0 0
  %1514 = vmatprep.subr.bf16.mxu0 0
  %1515 = vmatpush1.bf16.xpose.msra.mxu0 0
  %1516 = vmatprep.mubr.bf16.mxu0 0
  %1517 = vmatmul.mubr.bf16.gmra.mrb[0].mxu0 %v1479
  %v1518 = vpop.f32.mrb[0].mxu0
  %v1519 = vadd.f32 %v50, %v1518
  %v1520 = vpop.f32.mrb[0].mxu0
  %v1521 = vpop.f32.mrb[0].mxu0
  %v1522 = vpop.f32.mrb[0].mxu0
  %1523 = vdwg.mxu0
  %1525 = vrot.lane.b32.xlu0 %v1420, 96
  %v1526 = vpop.permute.xlu0 %1525
  %v1528 = vsel %vm176, %v1420, 0
  %v1531 = vsel %vm176, %v1526, 0
  %1533 = vmatprep.subr.bf16.mxu0 0
  %1534 = vmatpush1.bf16.xpose.msra.mxu0 %v1531
  %1535 = vmatprep.subr.bf16.mxu0 0
  %1536 = vmatpush1.bf16.xpose.msra.mxu0 0
  %1537 = vmatprep.subr.bf16.mxu0 0
  %1538 = vmatpush1.bf16.xpose.msra.mxu0 0
  %1539 = vmatprep.subr.bf16.mxu0 0
  %1540 = vmatpush1.bf16.xpose.msra.mxu0 0
  %1541 = vmatprep.subr.bf16.mxu0 0
  %1542 = vmatpush1.bf16.xpose.msra.mxu0 0
  %1543 = vmatprep.subr.bf16.mxu0 0
  %1544 = vmatpush1.bf16.xpose.msra.mxu0 0
  %1545 = vmatprep.subr.bf16.mxu0 0
  %1546 = vmatpush1.bf16.xpose.msra.mxu0 0
  %1547 = vmatprep.subr.bf16.mxu0 0
  %1548 = vmatpush1.bf16.xpose.msra.mxu0 0
  %1549 = vmatprep.subr.bf16.mxu0 0
  %1550 = vmatpush1.bf16.xpose.msra.mxu0 0
  %1551 = vmatprep.subr.bf16.mxu0 0
  %1552 = vmatpush1.bf16.xpose.msra.mxu0 0
  %1553 = vmatprep.subr.bf16.mxu0 0
  %1554 = vmatpush1.bf16.xpose.msra.mxu0 0
  %1555 = vmatprep.subr.bf16.mxu0 0
  %1556 = vmatpush1.bf16.xpose.msra.mxu0 0
  %1557 = vmatprep.subr.bf16.mxu0 0
  %1558 = vmatpush1.bf16.xpose.msra.mxu0 0
  %1559 = vmatprep.subr.bf16.mxu0 0
  %1560 = vmatpush1.bf16.xpose.msra.mxu0 0
  %1561 = vmatprep.subr.bf16.mxu0 0
  %1562 = vmatpush1.bf16.xpose.msra.mxu0 0
  %1563 = vmatprep.subr.bf16.mxu0 0
  %1564 = vmatpush1.bf16.xpose.msra.mxu0 0
  %1565 = vmatprep.mubr.bf16.mxu0 0
  %1566 = vmatmul.mubr.bf16.gmra.mrb[0].mxu0 %v1528
  %v1567 = vpop.f32.mrb[0].mxu0
  %v1568 = vadd.f32 %v51, %v1567
  %v1569 = vpop.f32.mrb[0].mxu0
  %v1570 = vpop.f32.mrb[0].mxu0
  %v1571 = vpop.f32.mrb[0].mxu0
  %1572 = vdwg.mxu0
  %1574 = vrot.lane.b32.xlu0 %v1421, 96
  %v1575 = vpop.permute.xlu0 %1574
  %v1577 = vsel %vm176, %v1421, 0
  %v1580 = vsel %vm176, %v1575, 0
  %1582 = vmatprep.subr.bf16.mxu0 0
  %1583 = vmatpush1.bf16.xpose.msra.mxu0 %v1580
  %1584 = vmatprep.subr.bf16.mxu0 0
  %1585 = vmatpush1.bf16.xpose.msra.mxu0 0
  %1586 = vmatprep.subr.bf16.mxu0 0
  %1587 = vmatpush1.bf16.xpose.msra.mxu0 0
  %1588 = vmatprep.subr.bf16.mxu0 0
  %1589 = vmatpush1.bf16.xpose.msra.mxu0 0
  %1590 = vmatprep.subr.bf16.mxu0 0
  %1591 = vmatpush1.bf16.xpose.msra.mxu0 0
  %1592 = vmatprep.subr.bf16.mxu0 0
  %1593 = vmatpush1.bf16.xpose.msra.mxu0 0
  %1594 = vmatprep.subr.bf16.mxu0 0
  %1595 = vmatpush1.bf16.xpose.msra.mxu0 0
  %1596 = vmatprep.subr.bf16.mxu0 0
  %1597 = vmatpush1.bf16.xpose.msra.mxu0 0
  %1598 = vmatprep.subr.bf16.mxu0 0
  %1599 = vmatpush1.bf16.xpose.msra.mxu0 0
  %1600 = vmatprep.subr.bf16.mxu0 0
  %1601 = vmatpush1.bf16.xpose.msra.mxu0 0
  %1602 = vmatprep.subr.bf16.mxu0 0
  %1603 = vmatpush1.bf16.xpose.msra.mxu0 0
  %1604 = vmatprep.subr.bf16.mxu0 0
  %1605 = vmatpush1.bf16.xpose.msra.mxu0 0
  %1606 = vmatprep.subr.bf16.mxu0 0
  %1607 = vmatpush1.bf16.xpose.msra.mxu0 0
  %1608 = vmatprep.subr.bf16.mxu0 0
  %1609 = vmatpush1.bf16.xpose.msra.mxu0 0
  %1610 = vmatprep.subr.bf16.mxu0 0
  %1611 = vmatpush1.bf16.xpose.msra.mxu0 0
  %1612 = vmatprep.subr.bf16.mxu0 0
  %1613 = vmatpush1.bf16.xpose.msra.mxu0 0
  %1614 = vmatprep.mubr.bf16.mxu0 0
  %1615 = vmatmul.mubr.bf16.gmra.mrb[0].mxu0 %v1577
  %v1616 = vpop.f32.mrb[0].mxu0
  %v1617 = vadd.f32 %v52, %v1616
  %v1618 = vpop.f32.mrb[0].mxu0
  %v1619 = vpop.f32.mrb[0].mxu0
  %v1620 = vpop.f32.mrb[0].mxu0
  %1621 = vdwg.mxu0
  %1623 = vrot.lane.b32.xlu0 %v1422, 96
  %v1624 = vpop.permute.xlu0 %1623
  %v1626 = vsel %vm176, %v1422, 0
  %v1629 = vsel %vm176, %v1624, 0
  %1631 = vmatprep.subr.bf16.mxu0 0
  %1632 = vmatpush1.bf16.xpose.msra.mxu0 %v1629
  %1633 = vmatprep.subr.bf16.mxu0 0
  %1634 = vmatpush1.bf16.xpose.msra.mxu0 0
  %1635 = vmatprep.subr.bf16.mxu0 0
  %1636 = vmatpush1.bf16.xpose.msra.mxu0 0
  %1637 = vmatprep.subr.bf16.mxu0 0
  %1638 = vmatpush1.bf16.xpose.msra.mxu0 0
  %1639 = vmatprep.subr.bf16.mxu0 0
  %1640 = vmatpush1.bf16.xpose.msra.mxu0 0
  %1641 = vmatprep.subr.bf16.mxu0 0
  %1642 = vmatpush1.bf16.xpose.msra.mxu0 0
  %1643 = vmatprep.subr.bf16.mxu0 0
  %1644 = vmatpush1.bf16.xpose.msra.mxu0 0
  %1645 = vmatprep.subr.bf16.mxu0 0
  %1646 = vmatpush1.bf16.xpose.msra.mxu0 0
  %1647 = vmatprep.subr.bf16.mxu0 0
  %1648 = vmatpush1.bf16.xpose.msra.mxu0 0
  %1649 = vmatprep.subr.bf16.mxu0 0
  %1650 = vmatpush1.bf16.xpose.msra.mxu0 0
  %1651 = vmatprep.subr.bf16.mxu0 0
  %1652 = vmatpush1.bf16.xpose.msra.mxu0 0
  %1653 = vmatprep.subr.bf16.mxu0 0
  %1654 = vmatpush1.bf16.xpose.msra.mxu0 0
  %1655 = vmatprep.subr.bf16.mxu0 0
  %1656 = vmatpush1.bf16.xpose.msra.mxu0 0
  %1657 = vmatprep.subr.bf16.mxu0 0
  %1658 = vmatpush1.bf16.xpose.msra.mxu0 0
  %1659 = vmatprep.subr.bf16.mxu0 0
  %1660 = vmatpush1.bf16.xpose.msra.mxu0 0
  %1661 = vmatprep.subr.bf16.mxu0 0
  %1662 = vmatpush1.bf16.xpose.msra.mxu0 0
  %1663 = vmatprep.mubr.bf16.mxu0 0
  %1664 = vmatmul.mubr.bf16.gmra.mrb[0].mxu0 %v1626
  %v1665 = vpop.f32.mrb[0].mxu0
  %v1666 = vadd.f32 %v53, %v1665
  %v1667 = vpop.f32.mrb[0].mxu0
  %v1668 = vpop.f32.mrb[0].mxu0
  %v1669 = vpop.f32.mrb[0].mxu0
  %1670 = vdwg.mxu0
  %1672 = vrot.lane.b32.xlu0 %v1423, 96
  %v1673 = vpop.permute.xlu0 %1672
  %v1675 = vsel %vm176, %v1423, 0
  %v1678 = vsel %vm176, %v1673, 0
  %1680 = vmatprep.subr.bf16.mxu0 0
  %1681 = vmatpush1.bf16.xpose.msra.mxu0 %v1678
  %1682 = vmatprep.subr.bf16.mxu0 0
  %1683 = vmatpush1.bf16.xpose.msra.mxu0 0
  %1684 = vmatprep.subr.bf16.mxu0 0
  %1685 = vmatpush1.bf16.xpose.msra.mxu0 0
  %1686 = vmatprep.subr.bf16.mxu0 0
  %1687 = vmatpush1.bf16.xpose.msra.mxu0 0
  %1688 = vmatprep.subr.bf16.mxu0 0
  %1689 = vmatpush1.bf16.xpose.msra.mxu0 0
  %1690 = vmatprep.subr.bf16.mxu0 0
  %1691 = vmatpush1.bf16.xpose.msra.mxu0 0
  %1692 = vmatprep.subr.bf16.mxu0 0
  %1693 = vmatpush1.bf16.xpose.msra.mxu0 0
  %1694 = vmatprep.subr.bf16.mxu0 0
  %1695 = vmatpush1.bf16.xpose.msra.mxu0 0
  %1696 = vmatprep.subr.bf16.mxu0 0
  %1697 = vmatpush1.bf16.xpose.msra.mxu0 0
  %1698 = vmatprep.subr.bf16.mxu0 0
  %1699 = vmatpush1.bf16.xpose.msra.mxu0 0
  %1700 = vmatprep.subr.bf16.mxu0 0
  %1701 = vmatpush1.bf16.xpose.msra.mxu0 0
  %1702 = vmatprep.subr.bf16.mxu0 0
  %1703 = vmatpush1.bf16.xpose.msra.mxu0 0
  %1704 = vmatprep.subr.bf16.mxu0 0
  %1705 = vmatpush1.bf16.xpose.msra.mxu0 0
  %1706 = vmatprep.subr.bf16.mxu0 0
  %1707 = vmatpush1.bf16.xpose.msra.mxu0 0
  %1708 = vmatprep.subr.bf16.mxu0 0
  %1709 = vmatpush1.bf16.xpose.msra.mxu0 0
  %1710 = vmatprep.subr.bf16.mxu0 0
  %1711 = vmatpush1.bf16.xpose.msra.mxu0 0
  %1712 = vmatprep.mubr.bf16.mxu0 0
  %1713 = vmatmul.mubr.bf16.gmra.mrb[0].mxu0 %v1675
  %v1714 = vpop.f32.mrb[0].mxu0
  %v1715 = vadd.f32 %v54, %v1714
  %v1716 = vpop.f32.mrb[0].mxu0
  %v1717 = vpop.f32.mrb[0].mxu0
  %v1718 = vpop.f32.mrb[0].mxu0
  %1719 = vdwg.mxu0
  %1721 = vrot.lane.b32.xlu0 %v1424, 96
  %v1722 = vpop.permute.xlu0 %1721
  %v1724 = vsel %vm176, %v1424, 0
  %v1727 = vsel %vm176, %v1722, 0
  %1729 = vmatprep.subr.bf16.mxu0 0
  %1730 = vmatpush1.bf16.xpose.msra.mxu0 %v1727
  %1731 = vmatprep.subr.bf16.mxu0 0
  %1732 = vmatpush1.bf16.xpose.msra.mxu0 0
  %1733 = vmatprep.subr.bf16.mxu0 0
  %1734 = vmatpush1.bf16.xpose.msra.mxu0 0
  %1735 = vmatprep.subr.bf16.mxu0 0
  %1736 = vmatpush1.bf16.xpose.msra.mxu0 0
  %1737 = vmatprep.subr.bf16.mxu0 0
  %1738 = vmatpush1.bf16.xpose.msra.mxu0 0
  %1739 = vmatprep.subr.bf16.mxu0 0
  %1740 = vmatpush1.bf16.xpose.msra.mxu0 0
  %1741 = vmatprep.subr.bf16.mxu0 0
  %1742 = vmatpush1.bf16.xpose.msra.mxu0 0
  %1743 = vmatprep.subr.bf16.mxu0 0
  %1744 = vmatpush1.bf16.xpose.msra.mxu0 0
  %1745 = vmatprep.subr.bf16.mxu0 0
  %1746 = vmatpush1.bf16.xpose.msra.mxu0 0
  %1747 = vmatprep.subr.bf16.mxu0 0
  %1748 = vmatpush1.bf16.xpose.msra.mxu0 0
  %1749 = vmatprep.subr.bf16.mxu0 0
  %1750 = vmatpush1.bf16.xpose.msra.mxu0 0
  %1751 = vmatprep.subr.bf16.mxu0 0
  %1752 = vmatpush1.bf16.xpose.msra.mxu0 0
  %1753 = vmatprep.subr.bf16.mxu0 0
  %1754 = vmatpush1.bf16.xpose.msra.mxu0 0
  %1755 = vmatprep.subr.bf16.mxu0 0
  %1756 = vmatpush1.bf16.xpose.msra.mxu0 0
  %1757 = vmatprep.subr.bf16.mxu0 0
  %1758 = vmatpush1.bf16.xpose.msra.mxu0 0
  %1759 = vmatprep.subr.bf16.mxu0 0
  %1760 = vmatpush1.bf16.xpose.msra.mxu0 0
  %1761 = vmatprep.mubr.bf16.mxu0 0
  %1762 = vmatmul.mubr.bf16.gmra.mrb[0].mxu0 %v1724
  %v1763 = vpop.f32.mrb[0].mxu0
  %v1764 = vadd.f32 %v55, %v1763
  %v1765 = vpop.f32.mrb[0].mxu0
  %v1766 = vpop.f32.mrb[0].mxu0
  %v1767 = vpop.f32.mrb[0].mxu0
  %1768 = vdwg.mxu0
  %1770 = vrot.lane.b32.xlu0 %v1425, 96
  %v1771 = vpop.permute.xlu0 %1770
  %v1773 = vsel %vm176, %v1425, 0
  %v1776 = vsel %vm176, %v1771, 0
  %1778 = vmatprep.subr.bf16.mxu0 0
  %1779 = vmatpush1.bf16.xpose.msra.mxu0 %v1776
  %1780 = vmatprep.subr.bf16.mxu0 0
  %1781 = vmatpush1.bf16.xpose.msra.mxu0 0
  %1782 = vmatprep.subr.bf16.mxu0 0
  %1783 = vmatpush1.bf16.xpose.msra.mxu0 0
  %1784 = vmatprep.subr.bf16.mxu0 0
  %1785 = vmatpush1.bf16.xpose.msra.mxu0 0
  %1786 = vmatprep.subr.bf16.mxu0 0
  %1787 = vmatpush1.bf16.xpose.msra.mxu0 0
  %1788 = vmatprep.subr.bf16.mxu0 0
  %1789 = vmatpush1.bf16.xpose.msra.mxu0 0
  %1790 = vmatprep.subr.bf16.mxu0 0
  %1791 = vmatpush1.bf16.xpose.msra.mxu0 0
  %1792 = vmatprep.subr.bf16.mxu0 0
  %1793 = vmatpush1.bf16.xpose.msra.mxu0 0
  %1794 = vmatprep.subr.bf16.mxu0 0
  %1795 = vmatpush1.bf16.xpose.msra.mxu0 0
  %1796 = vmatprep.subr.bf16.mxu0 0
  %1797 = vmatpush1.bf16.xpose.msra.mxu0 0
  %1798 = vmatprep.subr.bf16.mxu0 0
  %1799 = vmatpush1.bf16.xpose.msra.mxu0 0
  %1800 = vmatprep.subr.bf16.mxu0 0
  %1801 = vmatpush1.bf16.xpose.msra.mxu0 0
  %1802 = vmatprep.subr.bf16.mxu0 0
  %1803 = vmatpush1.bf16.xpose.msra.mxu0 0
  %1804 = vmatprep.subr.bf16.mxu0 0
  %1805 = vmatpush1.bf16.xpose.msra.mxu0 0
  %1806 = vmatprep.subr.bf16.mxu0 0
  %1807 = vmatpush1.bf16.xpose.msra.mxu0 0
  %1808 = vmatprep.subr.bf16.mxu0 0
  %1809 = vmatpush1.bf16.xpose.msra.mxu0 0
  %1810 = vmatprep.mubr.bf16.mxu0 0
  %1811 = vmatmul.mubr.bf16.gmra.mrb[0].mxu0 %v1773
  %v1812 = vpop.f32.mrb[0].mxu0
  %v1813 = vadd.f32 %v56, %v1812
  %v1814 = vpop.f32.mrb[0].mxu0
  %v1815 = vpop.f32.mrb[0].mxu0
  %v1816 = vpop.f32.mrb[0].mxu0
  %1817 = vdwg.mxu0
  %v1818 = vsel %vm176, %v1470, -inf
  %1819 = vmax.xlane.f32.xlu0 %v1818
  %v1820 = vpop.xlane.xlu0 %1819
  %v1821 = vsel %vm176, %v1519, -inf
  %1822 = vmax.xlane.f32.xlu0 %v1821
  %v1823 = vpop.xlane.xlu0 %1822
  %v1824 = vsel %vm176, %v1568, -inf
  %1825 = vmax.xlane.f32.xlu0 %v1824
  %v1826 = vpop.xlane.xlu0 %1825
  %v1827 = vsel %vm176, %v1617, -inf
  %1828 = vmax.xlane.f32.xlu0 %v1827
  %v1829 = vpop.xlane.xlu0 %1828
  %v1830 = vsel %vm176, %v1666, -inf
  %1831 = vmax.xlane.f32.xlu0 %v1830
  %v1832 = vpop.xlane.xlu0 %1831
  %v1833 = vsel %vm176, %v1715, -inf
  %1834 = vmax.xlane.f32.xlu0 %v1833
  %v1835 = vpop.xlane.xlu0 %1834
  %v1836 = vsel %vm176, %v1764, -inf
  %1837 = vmax.xlane.f32.xlu0 %v1836
  %v1838 = vpop.xlane.xlu0 %1837
  %v1839 = vsel %vm176, %v1813, -inf
  %1840 = vmax.xlane.f32.xlu0 %v1839
  %v1841 = vpop.xlane.xlu0 %1840
  %v1842 = vsub.f32 %v1470, %v1820
  %v1843 = vsub.f32 %v1519, %v1823
  %v1844 = vsub.f32 %v1568, %v1826
  %v1845 = vsub.f32 %v1617, %v1829
  %v1846 = vsub.f32 %v1666, %v1832
  %v1847 = vsub.f32 %v1715, %v1835
  %v1848 = vsub.f32 %v1764, %v1838
  %v1849 = vsub.f32 %v1813, %v1841
  %v1850 = vmul.f32 %v1842, 1.442695
  %v1851 = vpow.pop %v1850
  %v1852 = vmul.f32 %v1843, 1.442695
  %v1853 = vpow.pop %v1852
  %v1854 = vmul.f32 %v1844, 1.442695
  %v1855 = vpow.pop %v1854
  %v1856 = vmul.f32 %v1845, 1.442695
  %v1857 = vpow.pop %v1856
  %v1858 = vmul.f32 %v1846, 1.442695
  %v1859 = vpow.pop %v1858
  %v1860 = vmul.f32 %v1847, 1.442695
  %v1861 = vpow.pop %v1860
  %v1862 = vmul.f32 %v1848, 1.442695
  %v1863 = vpow.pop %v1862
  %v1864 = vmul.f32 %v1849, 1.442695
  %v1865 = vpow.pop %v1864
  %v1866 = vsel %vm176, %v1851, 0.0
  %1867 = vadd.xlane.f32.xlu0 %v1866
  %v1868 = vpop.xlane.xlu0 %1867
  %v1869 = vsel %vm176, %v1853, 0.0
  %1870 = vadd.xlane.f32.xlu0 %v1869
  %v1871 = vpop.xlane.xlu0 %1870
  %v1872 = vsel %vm176, %v1855, 0.0
  %1873 = vadd.xlane.f32.xlu0 %v1872
  %v1874 = vpop.xlane.xlu0 %1873
  %v1875 = vsel %vm176, %v1857, 0.0
  %1876 = vadd.xlane.f32.xlu0 %v1875
  %v1877 = vpop.xlane.xlu0 %1876
  %v1878 = vsel %vm176, %v1859, 0.0
  %1879 = vadd.xlane.f32.xlu0 %v1878
  %v1880 = vpop.xlane.xlu0 %1879
  %v1881 = vsel %vm176, %v1861, 0.0
  %1882 = vadd.xlane.f32.xlu0 %v1881
  %v1883 = vpop.xlane.xlu0 %1882
  %v1884 = vsel %vm176, %v1863, 0.0
  %1885 = vadd.xlane.f32.xlu0 %v1884
  %v1886 = vpop.xlane.xlu0 %1885
  %v1887 = vsel %vm176, %v1865, 0.0
  %1888 = vadd.xlane.f32.xlu0 %v1887
  %v1889 = vpop.xlane.xlu0 %1888
  %v1890 = vrcp.pop %v1868
  %v1891 = vrcp.pop %v1871
  %v1892 = vrcp.pop %v1874
  %v1893 = vrcp.pop %v1877
  %v1894 = vrcp.pop %v1880
  %v1895 = vrcp.pop %v1883
  %v1896 = vrcp.pop %v1886
  %v1897 = vrcp.pop %v1889
  %v1898 = vmul.f32 %v1851, %v1890
  %v1899 = vmul.f32 %v1853, %v1891
  %v1900 = vmul.f32 %v1855, %v1892
  %v1901 = vmul.f32 %v1857, %v1893
  %v1902 = vmul.f32 %v1859, %v1894
  %v1903 = vmul.f32 %v1861, %v1895
  %v1904 = vmul.f32 %v1863, %v1896
  %v1905 = vmul.f32 %v1865, %v1897
  %v1906 = vpack.c.bf16 %v1898, %v1898
  %v1907 = vpack.c.bf16 %v1899, %v1899
  %v1908 = vpack.c.bf16 %v1900, %v1900
  %v1909 = vpack.c.bf16 %v1901, %v1901
  %v1910 = vpack.c.bf16 %v1902, %v1902
  %v1911 = vpack.c.bf16 %v1903, %v1903
  %v1912 = vpack.c.bf16 %v1904, %v1904
  %v1913 = vpack.c.bf16 %v1905, %v1905
  %1914 = vrot.lane.b32.xlu0 %v1418, 64
  %v1915 = vpop.permute.xlu0 %1914
  %v1917 = vsel %vm176, %v1906, 0
  %v1920 = vsel %vm667, %v1915, 0
  %1922 = vmatprep.subr.bf16.mxu0 0
  %1923 = vmatpush1.bf16.msra.mxu0 %v1920
  %1924 = vmatprep.subr.bf16.mxu0 0
  %1925 = vmatpush1.bf16.msra.mxu0 0
  %1926 = vmatprep.subr.bf16.mxu0 0
  %1927 = vmatpush1.bf16.msra.mxu0 0
  %1928 = vmatprep.subr.bf16.mxu0 0
  %1929 = vmatpush1.bf16.msra.mxu0 0
  %1930 = vmatprep.subr.bf16.mxu0 0
  %1931 = vmatpush1.bf16.msra.mxu0 0
  %1932 = vmatprep.subr.bf16.mxu0 0
  %1933 = vmatpush1.bf16.msra.mxu0 0
  %1934 = vmatprep.subr.bf16.mxu0 0
  %1935 = vmatpush1.bf16.msra.mxu0 0
  %1936 = vmatprep.subr.bf16.mxu0 0
  %1937 = vmatpush1.bf16.msra.mxu0 0
  %1938 = vmatprep.subr.bf16.mxu0 0
  %1939 = vmatpush1.bf16.msra.mxu0 0
  %1940 = vmatprep.subr.bf16.mxu0 0
  %1941 = vmatpush1.bf16.msra.mxu0 0
  %1942 = vmatprep.subr.bf16.mxu0 0
  %1943 = vmatpush1.bf16.msra.mxu0 0
  %1944 = vmatprep.subr.bf16.mxu0 0
  %1945 = vmatpush1.bf16.msra.mxu0 0
  %1946 = vmatprep.subr.bf16.mxu0 0
  %1947 = vmatpush1.bf16.msra.mxu0 0
  %1948 = vmatprep.subr.bf16.mxu0 0
  %1949 = vmatpush1.bf16.msra.mxu0 0
  %1950 = vmatprep.subr.bf16.mxu0 0
  %1951 = vmatpush1.bf16.msra.mxu0 0
  %1952 = vmatprep.subr.bf16.mxu0 0
  %1953 = vmatpush1.bf16.msra.mxu0 0
  %1954 = vmatprep.mubr.bf16.mxu0 0
  %1955 = vmatmul.mubr.bf16.gmra.mrb[0].mxu0 %v1917
  %v1956 = vpop.f32.mrb[0].mxu0
  %v1957 = vadd.f32 0.0, %v1956
  %v1958 = vpop.f32.mrb[0].mxu0
  %v1959 = vpop.f32.mrb[0].mxu0
  %v1960 = vpop.f32.mrb[0].mxu0
  %1961 = vdwg.mxu0
  %1962 = vrot.lane.b32.xlu0 %v1419, 64
  %v1963 = vpop.permute.xlu0 %1962
  %v1965 = vsel %vm176, %v1907, 0
  %v1968 = vsel %vm667, %v1963, 0
  %1970 = vmatprep.subr.bf16.mxu0 0
  %1971 = vmatpush1.bf16.msra.mxu0 %v1968
  %1972 = vmatprep.subr.bf16.mxu0 0
  %1973 = vmatpush1.bf16.msra.mxu0 0
  %1974 = vmatprep.subr.bf16.mxu0 0
  %1975 = vmatpush1.bf16.msra.mxu0 0
  %1976 = vmatprep.subr.bf16.mxu0 0
  %1977 = vmatpush1.bf16.msra.mxu0 0
  %1978 = vmatprep.subr.bf16.mxu0 0
  %1979 = vmatpush1.bf16.msra.mxu0 0
  %1980 = vmatprep.subr.bf16.mxu0 0
  %1981 = vmatpush1.bf16.msra.mxu0 0
  %1982 = vmatprep.subr.bf16.mxu0 0
  %1983 = vmatpush1.bf16.msra.mxu0 0
  %1984 = vmatprep.subr.bf16.mxu0 0
  %1985 = vmatpush1.bf16.msra.mxu0 0
  %1986 = vmatprep.subr.bf16.mxu0 0
  %1987 = vmatpush1.bf16.msra.mxu0 0
  %1988 = vmatprep.subr.bf16.mxu0 0
  %1989 = vmatpush1.bf16.msra.mxu0 0
  %1990 = vmatprep.subr.bf16.mxu0 0
  %1991 = vmatpush1.bf16.msra.mxu0 0
  %1992 = vmatprep.subr.bf16.mxu0 0
  %1993 = vmatpush1.bf16.msra.mxu0 0
  %1994 = vmatprep.subr.bf16.mxu0 0
  %1995 = vmatpush1.bf16.msra.mxu0 0
  %1996 = vmatprep.subr.bf16.mxu0 0
  %1997 = vmatpush1.bf16.msra.mxu0 0
  %1998 = vmatprep.subr.bf16.mxu0 0
  %1999 = vmatpush1.bf16.msra.mxu0 0
  %2000 = vmatprep.subr.bf16.mxu0 0
  %2001 = vmatpush1.bf16.msra.mxu0 0
  %2002 = vmatprep.mubr.bf16.mxu0 0
  %2003 = vmatmul.mubr.bf16.gmra.mrb[0].mxu0 %v1965
  %v2004 = vpop.f32.mrb[0].mxu0
  %v2005 = vadd.f32 0.0, %v2004
  %v2006 = vpop.f32.mrb[0].mxu0
  %v2007 = vpop.f32.mrb[0].mxu0
  %v2008 = vpop.f32.mrb[0].mxu0
  %2009 = vdwg.mxu0
  %2010 = vrot.lane.b32.xlu0 %v1420, 64
  %v2011 = vpop.permute.xlu0 %2010
  %v2013 = vsel %vm176, %v1908, 0
  %v2016 = vsel %vm667, %v2011, 0
  %2018 = vmatprep.subr.bf16.mxu0 0
  %2019 = vmatpush1.bf16.msra.mxu0 %v2016
  %2020 = vmatprep.subr.bf16.mxu0 0
  %2021 = vmatpush1.bf16.msra.mxu0 0
  %2022 = vmatprep.subr.bf16.mxu0 0
  %2023 = vmatpush1.bf16.msra.mxu0 0
  %2024 = vmatprep.subr.bf16.mxu0 0
  %2025 = vmatpush1.bf16.msra.mxu0 0
  %2026 = vmatprep.subr.bf16.mxu0 0
  %2027 = vmatpush1.bf16.msra.mxu0 0
  %2028 = vmatprep.subr.bf16.mxu0 0
  %2029 = vmatpush1.bf16.msra.mxu0 0
  %2030 = vmatprep.subr.bf16.mxu0 0
  %2031 = vmatpush1.bf16.msra.mxu0 0
  %2032 = vmatprep.subr.bf16.mxu0 0
  %2033 = vmatpush1.bf16.msra.mxu0 0
  %2034 = vmatprep.subr.bf16.mxu0 0
  %2035 = vmatpush1.bf16.msra.mxu0 0
  %2036 = vmatprep.subr.bf16.mxu0 0
  %2037 = vmatpush1.bf16.msra.mxu0 0
  %2038 = vmatprep.subr.bf16.mxu0 0
  %2039 = vmatpush1.bf16.msra.mxu0 0
  %2040 = vmatprep.subr.bf16.mxu0 0
  %2041 = vmatpush1.bf16.msra.mxu0 0
  %2042 = vmatprep.subr.bf16.mxu0 0
  %2043 = vmatpush1.bf16.msra.mxu0 0
  %2044 = vmatprep.subr.bf16.mxu0 0
  %2045 = vmatpush1.bf16.msra.mxu0 0
  %2046 = vmatprep.subr.bf16.mxu0 0
  %2047 = vmatpush1.bf16.msra.mxu0 0
  %2048 = vmatprep.subr.bf16.mxu0 0
  %2049 = vmatpush1.bf16.msra.mxu0 0
  %2050 = vmatprep.mubr.bf16.mxu0 0
  %2051 = vmatmul.mubr.bf16.gmra.mrb[0].mxu0 %v2013
  %v2052 = vpop.f32.mrb[0].mxu0
  %v2053 = vadd.f32 0.0, %v2052
  %v2054 = vpop.f32.mrb[0].mxu0
  %v2055 = vpop.f32.mrb[0].mxu0
  %v2056 = vpop.f32.mrb[0].mxu0
  %2057 = vdwg.mxu0
  %2058 = vrot.lane.b32.xlu0 %v1421, 64
  %v2059 = vpop.permute.xlu0 %2058
  %v2061 = vsel %vm176, %v1909, 0
  %v2064 = vsel %vm667, %v2059, 0
  %2066 = vmatprep.subr.bf16.mxu0 0
  %2067 = vmatpush1.bf16.msra.mxu0 %v2064
  %2068 = vmatprep.subr.bf16.mxu0 0
  %2069 = vmatpush1.bf16.msra.mxu0 0
  %2070 = vmatprep.subr.bf16.mxu0 0
  %2071 = vmatpush1.bf16.msra.mxu0 0
  %2072 = vmatprep.subr.bf16.mxu0 0
  %2073 = vmatpush1.bf16.msra.mxu0 0
  %2074 = vmatprep.subr.bf16.mxu0 0
  %2075 = vmatpush1.bf16.msra.mxu0 0
  %2076 = vmatprep.subr.bf16.mxu0 0
  %2077 = vmatpush1.bf16.msra.mxu0 0
  %2078 = vmatprep.subr.bf16.mxu0 0
  %2079 = vmatpush1.bf16.msra.mxu0 0
  %2080 = vmatprep.subr.bf16.mxu0 0
  %2081 = vmatpush1.bf16.msra.mxu0 0
  %2082 = vmatprep.subr.bf16.mxu0 0
  %2083 = vmatpush1.bf16.msra.mxu0 0
  %2084 = vmatprep.subr.bf16.mxu0 0
  %2085 = vmatpush1.bf16.msra.mxu0 0
  %2086 = vmatprep.subr.bf16.mxu0 0
  %2087 = vmatpush1.bf16.msra.mxu0 0
  %2088 = vmatprep.subr.bf16.mxu0 0
  %2089 = vmatpush1.bf16.msra.mxu0 0
  %2090 = vmatprep.subr.bf16.mxu0 0
  %2091 = vmatpush1.bf16.msra.mxu0 0
  %2092 = vmatprep.subr.bf16.mxu0 0
  %2093 = vmatpush1.bf16.msra.mxu0 0
  %2094 = vmatprep.subr.bf16.mxu0 0
  %2095 = vmatpush1.bf16.msra.mxu0 0
  %2096 = vmatprep.subr.bf16.mxu0 0
  %2097 = vmatpush1.bf16.msra.mxu0 0
  %2098 = vmatprep.mubr.bf16.mxu0 0
  %2099 = vmatmul.mubr.bf16.gmra.mrb[0].mxu0 %v2061
  %v2100 = vpop.f32.mrb[0].mxu0
  %v2101 = vadd.f32 0.0, %v2100
  %v2102 = vpop.f32.mrb[0].mxu0
  %v2103 = vpop.f32.mrb[0].mxu0
  %v2104 = vpop.f32.mrb[0].mxu0
  %2105 = vdwg.mxu0
  %2106 = vrot.lane.b32.xlu0 %v1422, 64
  %v2107 = vpop.permute.xlu0 %2106
  %v2109 = vsel %vm176, %v1910, 0
  %v2112 = vsel %vm667, %v2107, 0
  %2114 = vmatprep.subr.bf16.mxu0 0
  %2115 = vmatpush1.bf16.msra.mxu0 %v2112
  %2116 = vmatprep.subr.bf16.mxu0 0
  %2117 = vmatpush1.bf16.msra.mxu0 0
  %2118 = vmatprep.subr.bf16.mxu0 0
  %2119 = vmatpush1.bf16.msra.mxu0 0
  %2120 = vmatprep.subr.bf16.mxu0 0
  %2121 = vmatpush1.bf16.msra.mxu0 0
  %2122 = vmatprep.subr.bf16.mxu0 0
  %2123 = vmatpush1.bf16.msra.mxu0 0
  %2124 = vmatprep.subr.bf16.mxu0 0
  %2125 = vmatpush1.bf16.msra.mxu0 0
  %2126 = vmatprep.subr.bf16.mxu0 0
  %2127 = vmatpush1.bf16.msra.mxu0 0
  %2128 = vmatprep.subr.bf16.mxu0 0
  %2129 = vmatpush1.bf16.msra.mxu0 0
  %2130 = vmatprep.subr.bf16.mxu0 0
  %2131 = vmatpush1.bf16.msra.mxu0 0
  %2132 = vmatprep.subr.bf16.mxu0 0
  %2133 = vmatpush1.bf16.msra.mxu0 0
  %2134 = vmatprep.subr.bf16.mxu0 0
  %2135 = vmatpush1.bf16.msra.mxu0 0
  %2136 = vmatprep.subr.bf16.mxu0 0
  %2137 = vmatpush1.bf16.msra.mxu0 0
  %2138 = vmatprep.subr.bf16.mxu0 0
  %2139 = vmatpush1.bf16.msra.mxu0 0
  %2140 = vmatprep.subr.bf16.mxu0 0
  %2141 = vmatpush1.bf16.msra.mxu0 0
  %2142 = vmatprep.subr.bf16.mxu0 0
  %2143 = vmatpush1.bf16.msra.mxu0 0
  %2144 = vmatprep.subr.bf16.mxu0 0
  %2145 = vmatpush1.bf16.msra.mxu0 0
  %2146 = vmatprep.mubr.bf16.mxu0 0
  %2147 = vmatmul.mubr.bf16.gmra.mrb[0].mxu0 %v2109
  %v2148 = vpop.f32.mrb[0].mxu0
  %v2149 = vadd.f32 0.0, %v2148
  %v2150 = vpop.f32.mrb[0].mxu0
  %v2151 = vpop.f32.mrb[0].mxu0
  %v2152 = vpop.f32.mrb[0].mxu0
  %2153 = vdwg.mxu0
  %2154 = vrot.lane.b32.xlu0 %v1423, 64
  %v2155 = vpop.permute.xlu0 %2154
  %v2157 = vsel %vm176, %v1911, 0
  %v2160 = vsel %vm667, %v2155, 0
  %2162 = vmatprep.subr.bf16.mxu0 0
  %2163 = vmatpush1.bf16.msra.mxu0 %v2160
  %2164 = vmatprep.subr.bf16.mxu0 0
  %2165 = vmatpush1.bf16.msra.mxu0 0
  %2166 = vmatprep.subr.bf16.mxu0 0
  %2167 = vmatpush1.bf16.msra.mxu0 0
  %2168 = vmatprep.subr.bf16.mxu0 0
  %2169 = vmatpush1.bf16.msra.mxu0 0
  %2170 = vmatprep.subr.bf16.mxu0 0
  %2171 = vmatpush1.bf16.msra.mxu0 0
  %2172 = vmatprep.subr.bf16.mxu0 0
  %2173 = vmatpush1.bf16.msra.mxu0 0
  %2174 = vmatprep.subr.bf16.mxu0 0
  %2175 = vmatpush1.bf16.msra.mxu0 0
  %2176 = vmatprep.subr.bf16.mxu0 0
  %2177 = vmatpush1.bf16.msra.mxu0 0
  %2178 = vmatprep.subr.bf16.mxu0 0
  %2179 = vmatpush1.bf16.msra.mxu0 0
  %2180 = vmatprep.subr.bf16.mxu0 0
  %2181 = vmatpush1.bf16.msra.mxu0 0
  %2182 = vmatprep.subr.bf16.mxu0 0
  %2183 = vmatpush1.bf16.msra.mxu0 0
  %2184 = vmatprep.subr.bf16.mxu0 0
  %2185 = vmatpush1.bf16.msra.mxu0 0
  %2186 = vmatprep.subr.bf16.mxu0 0
  %2187 = vmatpush1.bf16.msra.mxu0 0
  %2188 = vmatprep.subr.bf16.mxu0 0
  %2189 = vmatpush1.bf16.msra.mxu0 0
  %2190 = vmatprep.subr.bf16.mxu0 0
  %2191 = vmatpush1.bf16.msra.mxu0 0
  %2192 = vmatprep.subr.bf16.mxu0 0
  %2193 = vmatpush1.bf16.msra.mxu0 0
  %2194 = vmatprep.mubr.bf16.mxu0 0
  %2195 = vmatmul.mubr.bf16.gmra.mrb[0].mxu0 %v2157
  %v2196 = vpop.f32.mrb[0].mxu0
  %v2197 = vadd.f32 0.0, %v2196
  %v2198 = vpop.f32.mrb[0].mxu0
  %v2199 = vpop.f32.mrb[0].mxu0
  %v2200 = vpop.f32.mrb[0].mxu0
  %2201 = vdwg.mxu0
  %2202 = vrot.lane.b32.xlu0 %v1424, 64
  %v2203 = vpop.permute.xlu0 %2202
  %v2205 = vsel %vm176, %v1912, 0
  %v2208 = vsel %vm667, %v2203, 0
  %2210 = vmatprep.subr.bf16.mxu0 0
  %2211 = vmatpush1.bf16.msra.mxu0 %v2208
  %2212 = vmatprep.subr.bf16.mxu0 0
  %2213 = vmatpush1.bf16.msra.mxu0 0
  %2214 = vmatprep.subr.bf16.mxu0 0
  %2215 = vmatpush1.bf16.msra.mxu0 0
  %2216 = vmatprep.subr.bf16.mxu0 0
  %2217 = vmatpush1.bf16.msra.mxu0 0
  %2218 = vmatprep.subr.bf16.mxu0 0
  %2219 = vmatpush1.bf16.msra.mxu0 0
  %2220 = vmatprep.subr.bf16.mxu0 0
  %2221 = vmatpush1.bf16.msra.mxu0 0
  %2222 = vmatprep.subr.bf16.mxu0 0
  %2223 = vmatpush1.bf16.msra.mxu0 0
  %2224 = vmatprep.subr.bf16.mxu0 0
  %2225 = vmatpush1.bf16.msra.mxu0 0
  %2226 = vmatprep.subr.bf16.mxu0 0
  %2227 = vmatpush1.bf16.msra.mxu0 0
  %2228 = vmatprep.subr.bf16.mxu0 0
  %2229 = vmatpush1.bf16.msra.mxu0 0
  %2230 = vmatprep.subr.bf16.mxu0 0
  %2231 = vmatpush1.bf16.msra.mxu0 0
  %2232 = vmatprep.subr.bf16.mxu0 0
  %2233 = vmatpush1.bf16.msra.mxu0 0
  %2234 = vmatprep.subr.bf16.mxu0 0
  %2235 = vmatpush1.bf16.msra.mxu0 0
  %2236 = vmatprep.subr.bf16.mxu0 0
  %2237 = vmatpush1.bf16.msra.mxu0 0
  %2238 = vmatprep.subr.bf16.mxu0 0
  %2239 = vmatpush1.bf16.msra.mxu0 0
  %2240 = vmatprep.subr.bf16.mxu0 0
  %2241 = vmatpush1.bf16.msra.mxu0 0
  %2242 = vmatprep.mubr.bf16.mxu0 0
  %2243 = vmatmul.mubr.bf16.gmra.mrb[0].mxu0 %v2205
  %v2244 = vpop.f32.mrb[0].mxu0
  %v2245 = vadd.f32 0.0, %v2244
  %v2246 = vpop.f32.mrb[0].mxu0
  %v2247 = vpop.f32.mrb[0].mxu0
  %v2248 = vpop.f32.mrb[0].mxu0
  %2249 = vdwg.mxu0
  %2250 = vrot.lane.b32.xlu0 %v1425, 64
  %v2251 = vpop.permute.xlu0 %2250
  %v2253 = vsel %vm176, %v1913, 0
  %v2256 = vsel %vm667, %v2251, 0
  %2258 = vmatprep.subr.bf16.mxu0 0
  %2259 = vmatpush1.bf16.msra.mxu0 %v2256
  %2260 = vmatprep.subr.bf16.mxu0 0
  %2261 = vmatpush1.bf16.msra.mxu0 0
  %2262 = vmatprep.subr.bf16.mxu0 0
  %2263 = vmatpush1.bf16.msra.mxu0 0
  %2264 = vmatprep.subr.bf16.mxu0 0
  %2265 = vmatpush1.bf16.msra.mxu0 0
  %2266 = vmatprep.subr.bf16.mxu0 0
  %2267 = vmatpush1.bf16.msra.mxu0 0
  %2268 = vmatprep.subr.bf16.mxu0 0
  %2269 = vmatpush1.bf16.msra.mxu0 0
  %2270 = vmatprep.subr.bf16.mxu0 0
  %2271 = vmatpush1.bf16.msra.mxu0 0
  %2272 = vmatprep.subr.bf16.mxu0 0
  %2273 = vmatpush1.bf16.msra.mxu0 0
  %2274 = vmatprep.subr.bf16.mxu0 0
  %2275 = vmatpush1.bf16.msra.mxu0 0
  %2276 = vmatprep.subr.bf16.mxu0 0
  %2277 = vmatpush1.bf16.msra.mxu0 0
  %2278 = vmatprep.subr.bf16.mxu0 0
  %2279 = vmatpush1.bf16.msra.mxu0 0
  %2280 = vmatprep.subr.bf16.mxu0 0
  %2281 = vmatpush1.bf16.msra.mxu0 0
  %2282 = vmatprep.subr.bf16.mxu0 0
  %2283 = vmatpush1.bf16.msra.mxu0 0
  %2284 = vmatprep.subr.bf16.mxu0 0
  %2285 = vmatpush1.bf16.msra.mxu0 0
  %2286 = vmatprep.subr.bf16.mxu0 0
  %2287 = vmatpush1.bf16.msra.mxu0 0
  %2288 = vmatprep.subr.bf16.mxu0 0
  %2289 = vmatpush1.bf16.msra.mxu0 0
  %2290 = vmatprep.mubr.bf16.mxu0 0
  %2291 = vmatmul.mubr.bf16.gmra.mrb[0].mxu0 %v2253
  %v2292 = vpop.f32.mrb[0].mxu0
  %v2293 = vadd.f32 0.0, %v2292
  %v2294 = vpop.f32.mrb[0].mxu0
  %v2295 = vpop.f32.mrb[0].mxu0
  %v2296 = vpop.f32.mrb[0].mxu0
  %2297 = vdwg.mxu0
  %2300 = vrot.lane.b32.xlu0 %v2005, 8
  %v2301 = vpop.permute.xlu0 %2300
  %2302 = vrot.lane.b32.xlu0 %v2197, 8
  %v2303 = vpop.permute.xlu0 %2302
  %2308 = vrot.lane.b32.xlu0 %v2053, 16
  %v2309 = vpop.permute.xlu0 %2308
  %2310 = vrot.lane.b32.xlu0 %v2245, 16
  %v2311 = vpop.permute.xlu0 %2310
  %2316 = vrot.lane.b32.xlu0 %v2101, 24
  %v2317 = vpop.permute.xlu0 %2316
  %2318 = vrot.lane.b32.xlu0 %v2293, 24
  %v2319 = vpop.permute.xlu0 %2318
  %v2322 = vsel %vm176, %v1957, %v2301
  %v2323 = vsel %vm176, %v2149, %v2303
  %v2324 = vsel %vm1073, %v2322, %v2309
  %v2325 = vsel %vm1073, %v2323, %v2311
  %v2326 = vsel %vm1076, %v2324, %v2317
  %v2327 = vsel %vm1076, %v2325, %v2319
  %v2328 = vpack.c.bf16 %v2327, %v2326
  %s2329 = scalar_lea.vmem %s4, 16
  %v2330 = vld [vmem:[%s2329] sm:$0xf]
  %v2331 = vld [vmem:[%s2329 + $0x4] sm:$0xf]
  %v2332 = vld [vmem:[%s2329 + $0x8] sm:$0xf]
  %v2333 = vld [vmem:[%s2329 + $0xc] sm:$0xf]
  %v2338 = vunpack.c.l.b16 %v2330
  %v2339 = vunpack.c.l.b16 %v2331
  %v2340 = vunpack.c.l.b16 %v2332
  %v2341 = vunpack.c.l.b16 %v2333
  %v2342 = vpack.c.b16 %v2339, %v2338
  %v2343 = vpack.c.b16 %v2341, %v2340
  %v2347 = vsel %vm60, %v2328, 0
  %2349 = vmatprep.subr.bf16.mxu0 0
  %2350 = vmatpush1.bf16.msra.mxu0 %v2342
  %2351 = vmatprep.subr.bf16.mxu0 0
  %2352 = vmatpush1.bf16.msra.mxu0 %v2343
  %2353 = vmatprep.subr.bf16.mxu0 0
  %2354 = vmatpush1.bf16.msra.mxu0 0
  %2355 = vmatprep.subr.bf16.mxu0 0
  %2356 = vmatpush1.bf16.msra.mxu0 0
  %2357 = vmatprep.subr.bf16.mxu0 0
  %2358 = vmatpush1.bf16.msra.mxu0 0
  %2359 = vmatprep.subr.bf16.mxu0 0
  %2360 = vmatpush1.bf16.msra.mxu0 0
  %2361 = vmatprep.subr.bf16.mxu0 0
  %2362 = vmatpush1.bf16.msra.mxu0 0
  %2363 = vmatprep.subr.bf16.mxu0 0
  %2364 = vmatpush1.bf16.msra.mxu0 0
  %2365 = vmatprep.subr.bf16.mxu0 0
  %2366 = vmatpush1.bf16.msra.mxu0 0
  %2367 = vmatprep.subr.bf16.mxu0 0
  %2368 = vmatpush1.bf16.msra.mxu0 0
  %2369 = vmatprep.subr.bf16.mxu0 0
  %2370 = vmatpush1.bf16.msra.mxu0 0
  %2371 = vmatprep.subr.bf16.mxu0 0
  %2372 = vmatpush1.bf16.msra.mxu0 0
  %2373 = vmatprep.subr.bf16.mxu0 0
  %2374 = vmatpush1.bf16.msra.mxu0 0
  %2375 = vmatprep.subr.bf16.mxu0 0
  %2376 = vmatpush1.bf16.msra.mxu0 0
  %2377 = vmatprep.subr.bf16.mxu0 0
  %2378 = vmatpush1.bf16.msra.mxu0 0
  %2379 = vmatprep.subr.bf16.mxu0 0
  %2380 = vmatpush1.bf16.msra.mxu0 0
  %2381 = vmatprep.mubr.bf16.mxu0 0
  %2382 = vmatmul.mubr.bf16.gmra.mrb[0].mxu0 %v2347
  %v2383 = vpop.f32.mrb[0].mxu0
  %v2384 = vadd.f32 0.0, %v2383
  %v2385 = vpop.f32.mrb[0].mxu0
  %v2386 = vpop.f32.mrb[0].mxu0
  %v2387 = vadd.f32 0.0, %v2386
  %v2388 = vpop.f32.mrb[0].mxu0
  %2389 = vdwg.mxu0
  %v2390 = vadd.f32 %v1308, %v2384
  %v2391 = vadd.f32 %v1309, %v2387
  %s2392 = scalar_lea.vmem %s5, 1
  %v2393 = vld [vmem:[%s2392] sm:$0x1]
  %v2394 = vmul.f32 %v2390, %v2390
  %v2395 = vmul.f32 %v2391, %v2391
  %v2396 = vsel %vm60, %v2394, 0.0
  %2397 = vadd.xlane.f32.xlu0 %v2396
  %v2398 = vpop.xlane.xlu0 %2397
  %v2399 = vsel %vm60, %v2395, 0.0
  %2400 = vadd.xlane.f32.xlu0 %v2399
  %v2401 = vpop.xlane.xlu0 %2400
  %v2402 = vmul.f32 %v2398, %v67
  %v2403 = vmul.f32 %v2401, %v67
  %v2404 = vadd.f32 %v2402, 1e-06
  %v2405 = vadd.f32 %v2403, 1e-06
  %v2406 = vrsqrt.pop %v2404
  %v2407 = vrsqrt.pop %v2405
  %v2408 = vmul.f32 %v2390, %v2406
  %v2409 = vmul.f32 %v2391, %v2407
  %v2411 = vlaneseq
  %v2412 = vshrl.u32 %v2411, 7
  %v2413 = vsub.s32 0, %v2412
  %v2414 = vrot.slane %v2393, %v2413
  %v2416 = vmul.f32 %v2408, %v2414
  %v2417 = vmul.f32 %v2409, %v2414
  %v2418 = vpack.c.bf16 %v2417, %v2416
  %s2419 = scalar_lea.vmem %s6, 16
  %v2420 = vld [vmem:[%s2419] sm:$0xf]
  %v2421 = vld [vmem:[%s2419 + $0x4] sm:$0xf]
  %v2422 = vld [vmem:[%s2419 + $0x8] sm:$0xf]
  %v2423 = vld [vmem:[%s2419 + $0xc] sm:$0xf]
  %v2428 = vunpack.c.l.b16 %v2420
  %v2429 = vunpack.c.l.b16 %v2421
  %v2430 = vunpack.c.l.b16 %v2422
  %v2431 = vunpack.c.l.b16 %v2423
  %v2432 = vpack.c.b16 %v2429, %v2428
  %v2433 = vpack.c.b16 %v2431, %v2430
  %v2437 = vsel %vm60, %v2418, 0
  %2439 = vmatprep.subr.bf16.mxu0 0
  %2440 = vmatpush1.bf16.msra.mxu0 %v2432
  %2441 = vmatprep.subr.bf16.mxu0 0
  %2442 = vmatpush1.bf16.msra.mxu0 %v2433
  %2443 = vmatprep.subr.bf16.mxu0 0
  %2444 = vmatpush1.bf16.msra.mxu0 0
  %2445 = vmatprep.subr.bf16.mxu0 0
  %2446 = vmatpush1.bf16.msra.mxu0 0
  %2447 = vmatprep.subr.bf16.mxu0 0
  %2448 = vmatpush1.bf16.msra.mxu0 0
  %2449 = vmatprep.subr.bf16.mxu0 0
  %2450 = vmatpush1.bf16.msra.mxu0 0
  %2451 = vmatprep.subr.bf16.mxu0 0
  %2452 = vmatpush1.bf16.msra.mxu0 0
  %2453 = vmatprep.subr.bf16.mxu0 0
  %2454 = vmatpush1.bf16.msra.mxu0 0
  %2455 = vmatprep.subr.bf16.mxu0 0
  %2456 = vmatpush1.bf16.msra.mxu0 0
  %2457 = vmatprep.subr.bf16.mxu0 0
  %2458 = vmatpush1.bf16.msra.mxu0 0
  %2459 = vmatprep.subr.bf16.mxu0 0
  %2460 = vmatpush1.bf16.msra.mxu0 0
  %2461 = vmatprep.subr.bf16.mxu0 0
  %2462 = vmatpush1.bf16.msra.mxu0 0
  %2463 = vmatprep.subr.bf16.mxu0 0
  %2464 = vmatpush1.bf16.msra.mxu0 0
  %2465 = vmatprep.subr.bf16.mxu0 0
  %2466 = vmatpush1.bf16.msra.mxu0 0
  %2467 = vmatprep.subr.bf16.mxu0 0
  %2468 = vmatpush1.bf16.msra.mxu0 0
  %2469 = vmatprep.subr.bf16.mxu0 0
  %2470 = vmatpush1.bf16.msra.mxu0 0
  %2471 = vmatprep.mubr.bf16.mxu0 0
  %2472 = vmatmul.mubr.bf16.gmra.mrb[0].mxu0 %v2437
  %v2473 = vpop.f32.mrb[0].mxu0
  %v2474 = vadd.f32 0.0, %v2473
  %v2475 = vpop.f32.mrb[0].mxu0
  %v2476 = vpop.f32.mrb[0].mxu0
  %v2477 = vadd.f32 0.0, %v2476
  %v2478 = vpop.f32.mrb[0].mxu0
  %2479 = vdwg.mxu0
  %v2480 = vmax.f32 %v2474, 0.0
  %v2481 = vmax.f32 %v2477, 0.0
  %v2482 = vpack.c.bf16 %v2481, %v2480
  %s2483 = scalar_lea.vmem %s7, 32
  %v2484 = vld [vmem:[%s2483] sm:$0xf]
  %v2485 = vld [vmem:[%s2483 + $0x4] sm:$0xf]
  %v2486 = vld [vmem:[%s2483 + $0x8] sm:$0xf]
  %v2487 = vld [vmem:[%s2483 + $0xc] sm:$0xf]
  %v2488 = vld [vmem:[%s2483 + $0x10] sm:$0xf]
  %v2489 = vld [vmem:[%s2483 + $0x14] sm:$0xf]
  %v2490 = vld [vmem:[%s2483 + $0x18] sm:$0xf]
  %v2491 = vld [vmem:[%s2483 + $0x1c] sm:$0xf]
  %v2500 = vunpack.c.l.b16 %v2484
  %v2501 = vunpack.c.l.b16 %v2485
  %v2502 = vunpack.c.l.b16 %v2486
  %v2503 = vunpack.c.l.b16 %v2487
  %v2504 = vunpack.c.l.b16 %v2488
  %v2505 = vunpack.c.l.b16 %v2489
  %v2506 = vunpack.c.l.b16 %v2490
  %v2507 = vunpack.c.l.b16 %v2491
  %v2508 = vpack.c.b16 %v2501, %v2500
  %v2509 = vpack.c.b16 %v2503, %v2502
  %v2510 = vpack.c.b16 %v2505, %v2504
  %v2511 = vpack.c.b16 %v2507, %v2506
  %v2517 = vsel %vm1263, %v2482, 0
  %2519 = vmatprep.subr.bf16.mxu0 0
  %2520 = vmatpush1.bf16.msra.mxu0 %v2508
  %2521 = vmatprep.subr.bf16.mxu0 0
  %2522 = vmatpush1.bf16.msra.mxu0 %v2509
  %2523 = vmatprep.subr.bf16.mxu0 0
  %2524 = vmatpush1.bf16.msra.mxu0 %v2510
  %2525 = vmatprep.subr.bf16.mxu0 0
  %2526 = vmatpush1.bf16.msra.mxu0 %v2511
  %2527 = vmatprep.subr.bf16.mxu0 0
  %2528 = vmatpush1.bf16.msra.mxu0 0
  %2529 = vmatprep.subr.bf16.mxu0 0
  %2530 = vmatpush1.bf16.msra.mxu0 0
  %2531 = vmatprep.subr.bf16.mxu0 0
  %2532 = vmatpush1.bf16.msra.mxu0 0
  %2533 = vmatprep.subr.bf16.mxu0 0
  %2534 = vmatpush1.bf16.msra.mxu0 0
  %2535 = vmatprep.subr.bf16.mxu0 0
  %2536 = vmatpush1.bf16.msra.mxu0 0
  %2537 = vmatprep.subr.bf16.mxu0 0
  %2538 = vmatpush1.bf16.msra.mxu0 0
  %2539 = vmatprep.subr.bf16.mxu0 0
  %2540 = vmatpush1.bf16.msra.mxu0 0
  %2541 = vmatprep.subr.bf16.mxu0 0
  %2542 = vmatpush1.bf16.msra.mxu0 0
  %2543 = vmatprep.subr.bf16.mxu0 0
  %2544 = vmatpush1.bf16.msra.mxu0 0
  %2545 = vmatprep.subr.bf16.mxu0 0
  %2546 = vmatpush1.bf16.msra.mxu0 0
  %2547 = vmatprep.subr.bf16.mxu0 0
  %2548 = vmatpush1.bf16.msra.mxu0 0
  %2549 = vmatprep.subr.bf16.mxu0 0
  %2550 = vmatpush1.bf16.msra.mxu0 0
  %2551 = vmatprep.mubr.bf16.mxu0 0
  %2552 = vmatmul.mubr.bf16.gmra.mrb[0].mxu0 %v2517
  %v2553 = vpop.f32.mrb[0].mxu0
  %v2554 = vadd.f32 0.0, %v2553
  %v2555 = vpop.f32.mrb[0].mxu0
  %v2556 = vpop.f32.mrb[0].mxu0
  %v2557 = vadd.f32 0.0, %v2556
  %v2558 = vpop.f32.mrb[0].mxu0
  %2559 = vdwg.mxu0
  %v2560 = vadd.f32 %v2390, %v2554
  %v2561 = vadd.f32 %v2391, %v2557
  %v2563 = vrot.slane %v2561, 7
  %vm2565 = vcmask 1040384
  %v2566 = vsel %vm2565, %v2560, %v2563
  %v2567 = vld [vmem:[%s8] sm:$0x1]
  %v2568 = vmul.f32 %v2566, %v2566
  %vm2569 = vcmask 254976
  %v2570 = vsel %vm2569, %v2568, 0.0
  %2571 = vadd.xlane.f32.xlu0 %v2570
  %v2572 = vpop.xlane.xlu0 %2571
  %v2573 = vmul.f32 %v2572, %v67
  %v2574 = vadd.f32 %v2573, 1e-06
  %v2575 = vrsqrt.pop %v2574
  %v2576 = vmul.f32 %v2566, %v2575
  %v2578 = vlaneseq
  %v2579 = vshrl.u32 %v2578, 7
  %v2580 = vsub.s32 0, %v2579
  %v2581 = vrot.slane %v2567, %v2580
  %v2583 = vmul.f32 %v2576, %v2581
  %v2584 = vsel %vm2569, %v2583, 0.0
  %2585 = vadd.xlane.f32.xlu0 %v2584
  %v2586 = vpop.xlane.xlu0 %2585
  %v2587 = vmul.f32 %v2586, %v67
  %v2588 = vsub.f32 %v2583, %v2587
  %v2589 = vmul.f32 %v2588, %v2588
  %v2590 = vsel %vm2569, %v2589, 0.0
  %2591 = vadd.xlane.f32.xlu0 %v2590
  %v2592 = vpop.xlane.xlu0 %2591
  %v2593 = vmul.f32 %v2592, %v67
  %v2594 = vadd.f32 %v2593, 1e-05
  %v2595 = vrsqrt.pop %v2594
  %v2596 = vmul.f32 %v2588, %v2595
  %v2597 = vld [vmem:[%s9] sm:$0x1]
  %v2599 = vlaneseq
  %v2600 = vshrl.u32 %v2599, 7
  %v2601 = vsub.s32 0, %v2600
  %v2602 = vrot.slane %v2597, %v2601
  %v2604 = vmul.f32 %v2596, %v2602
  %v2605 = vld [vmem:[%s10] sm:$0x1]
  %v2607 = vlaneseq
  %v2608 = vshrl.u32 %v2607, 7
  %v2609 = vsub.s32 0, %v2608
  %v2610 = vrot.slane %v2605, %v2609
  %v2612 = vadd.f32 %v2604, %v2610
  %v2613 = vld [vmem:[%s11] sm:$0x1]
  %v2615 = vlaneseq
  %v2616 = vshrl.u32 %v2615, 7
  %v2617 = vsub.s32 0, %v2616
  %v2618 = vrot.slane %v2613, %v2617
  %v2620 = vmul.f32 %v2612, %v2618
  %v2621 = vsel %vm2569, %v2620, 0.0
  %2622 = vadd.xlane.f32.xlu0 %v2621
  %v2623 = vpop.xlane.xlu0 %2622
  %v2624 = vld [vmem:[#allocation2] sm:$0x1]
  %v2626 = vlaneseq
  %v2627 = vshrl.u32 %v2626, 7
  %v2628 = vsub.s32 0, %v2627
  %v2629 = vrot.slane %v2624, %v2628
  %v2631 = vadd.f32 %v2623, %v2629
  %vm2632 = vcmask 1024
  %2633 = vst.msk [vmem:[%s13] sm:$0x3] %vm2632, %v2631
  // Predicated region
  $region54: #{t5_cross_encoder_forward.1} parent=0 // pred_check
    _
  $region55: #{t5_cross_encoder_forward.1} parent=0 // pred_check_branch
    %2635 = sbr.rel (0) target = $region57
  $region56: #{t5_cross_encoder_forward.1} parent=0 // pred_region
    _
  $region57: #{t5_cross_encoder_forward.1} parent=0 // pred_fallthru
    _
  // Predicated region
  $region58: #{t5_cross_encoder_forward.1} parent=0 // pred_check
    _
  $region59: #{t5_cross_encoder_forward.1} parent=0 // pred_check_branch
    %2637 = sbr.rel (0) target = $region61
  $region60: #{t5_cross_encoder_forward.1} parent=0 // pred_region
    _
  $region61: #{t5_cross_encoder_forward.1} parent=0 // pred_fallthru
    _

</llo_original>
